<compile_context>
chip_gen: v6e
topology: v6e:2x2x1
jax: 0.10.0
libtpu: 0.0.40
codegen_flags: <defaults>
</compile_context>

<pallas_src>
import math
import functools

import jax
import jax.numpy as jnp
import numpy as np
from jax import lax
from jax.experimental import pallas as pl
from jax.experimental.pallas import tpu as pltpu


def _attention_head_kernel(x_ref, w_ref, wo_ref, cos_ref, sin_ref, o_ref, *,
                           head_dim, num_heads, batches_per_step, seq_len):
    hd = head_dim
    H = num_heads
    S = seq_len
    nb = batches_per_step
    E = H * hd

    # One fused projection: columns = [q_even_first | q_swapped | k_even_first |
    # k_swapped | v].  bf16 MXU, f32 accumulation.  Shape (nb*S, 5E).
    fused = jnp.dot(x_ref[...], w_ref[...], preferred_element_type=jnp.float32)

    cos = cos_ref[...]          # (nb*S, E)  per head: [cos | cos]
    sin = sin_ref[...]          # (nb*S, E)  per head: [-sin | +sin]

    # Rotary at full E lane width: the rotate-half partner comes from the extra
    # permuted-weight matmul columns, so no 32-lane slicing / rolls / concats.
    q = (fused[:, 0 * E:1 * E] * cos + fused[:, 1 * E:2 * E] * sin).astype(jnp.bfloat16)
    k = (fused[:, 2 * E:3 * E] * cos + fused[:, 3 * E:4 * E] * sin).astype(jnp.bfloat16)
    v = fused[:, 4 * E:5 * E].astype(jnp.bfloat16)

    # Causal mask built once per step.  Finite fill is safe: every causal row
    # has at least one unmasked entry (diagonal).
    row = lax.broadcasted_iota(jnp.int32, (S, S), 0)
    col = lax.broadcasted_iota(jnp.int32, (S, S), 1)
    causal = col <= row

    y_batches = []
    for b in range(nb):                       # static loops: nb*H tiny attention tiles
        r0 = b * S
        y_heads = []
        for j in range(H):
            c0 = j * hd
            qj = q[r0:r0 + S, c0:c0 + hd]
            kj = k[r0:r0 + S, c0:c0 + hd]
            vj = v[r0:r0 + S, c0:c0 + hd]
            s = lax.dot_general(qj, kj, (((1,), (1,)), ((), ())),
                                preferred_element_type=jnp.float32)   # (S, S) f32
            s = jnp.where(causal, s, jnp.float32(-1e30))
            m = jnp.max(s, axis=-1, keepdims=True)
            p = jnp.exp(s - m)                                        # unnormalized
            l = jnp.sum(p, axis=-1, keepdims=True)
            yj = jnp.dot(p.astype(jnp.bfloat16), vj,
                         preferred_element_type=jnp.float32)          # (S, hd) f32
            y_heads.append(yj * pl.reciprocal(l, approx=True))        # EUP divide
        y_batches.append(jnp.concatenate(y_heads, axis=-1))           # (S, E)
    y = y_batches[0] if nb == 1 else jnp.concatenate(y_batches, axis=0)

    # Output projection for the whole block in one full-width bf16 matmul.
    o_ref[...] = jnp.dot(y.astype(jnp.bfloat16), wo_ref[...],
                         preferred_element_type=jnp.float32)


def attention_head_forward(x, w_atten, w_proj, cos, sin, num_heads):
    """x: (B, S, E) f32.  w_atten: (3E, E).  w_proj: (E, E).  cos/sin: (S, hd/2)."""
    B, S, E = x.shape
    H = num_heads
    hd = E // H
    scale = 1.0 / math.sqrt(hd)

    # ---- host-side parameter plumbing (plain JAX glue) ----
    # Even-first / odd-first per-head output-row permutations: the rotary
    # rotate-half partner is produced directly by extra weight columns.
    perm_ef = jnp.concatenate([jnp.arange(0, hd, 2), jnp.arange(1, hd, 2)])
    perm_sw = jnp.concatenate([jnp.arange(1, hd, 2), jnp.arange(0, hd, 2)])

    def head_perm(w, perm):      # reorder output rows within each head
        return w.reshape(H, hd, E)[:, perm, :].reshape(E, E)

    wq = w_atten[:E] * scale     # fold 1/sqrt(hd) into the q weights
    wk = w_atten[E:2 * E]
    wv = w_atten[2 * E:]
    w_fused = jnp.concatenate(
        [head_perm(wq, perm_ef).T, head_perm(wq, perm_sw).T,
         head_perm(wk, perm_ef).T, head_perm(wk, perm_sw).T,
         wv.T], axis=-1).astype(jnp.bfloat16)                       # (E, 5E)
    wo = jnp.transpose(w_proj).astype(jnp.bfloat16)                 # (E, E)

    # cos/sin expanded to (B*S, E); per head the columns are [cos|cos], [-sin|+sin]
    # in the even-first basis used by the permuted weights.
    cos_h = jnp.concatenate([cos, cos], axis=-1)                    # (S, hd)
    sin_h = jnp.concatenate([-sin, sin], axis=-1)                   # (S, hd)
    cos_full = jnp.tile(jnp.tile(cos_h, (1, H)), (B, 1))            # (B*S, E)
    sin_full = jnp.tile(jnp.tile(sin_h, (1, H)), (B, 1))            # (B*S, E)

    x2d = x.reshape(B * S, E).astype(jnp.bfloat16)                  # cast once

    # Chip-aware grid: dual-TC chips (v7x) shard the batch across cores; single-TC
    # chips run one step with the batch flattened into the matmul M dimension.
    try:
        dual_core = "v7" in jax.devices()[0].device_kind.lower()
    except Exception:  # pragma: no cover
        dual_core = False
    nb = 1 if (dual_core and B > 1) else B        # batches per grid step
    rows = nb * S
    grid = (B // nb,)

    f32b, bf16b = 4, 2
    blk_bytes = 2 * (rows * E * bf16b             # x            (double-buffered)
                     + E * 5 * E * bf16b          # fused weights
                     + E * E * bf16b              # wo
                     + 2 * rows * E * f32b        # cos + sin
                     + rows * E * f32b)           # out
    vmem_limit = int(min(64 << 20, blk_bytes + (16 << 20)))   # + in-kernel temporaries

    kernel = functools.partial(_attention_head_kernel, head_dim=hd, num_heads=H,
                               batches_per_step=nb, seq_len=S)
    out = pl.pallas_call(
        kernel,
        out_shape=jax.ShapeDtypeStruct((B * S, E), jnp.float32),
        grid_spec=pltpu.PrefetchScalarGridSpec(
            num_scalar_prefetch=0,
            grid=grid,
            in_specs=[
                pl.BlockSpec((rows, E), lambda i: (i, 0)),        # x (bf16)
                pl.BlockSpec((E, 5 * E), lambda i: (0, 0)),       # fused qkv(+rot) weights
                pl.BlockSpec((E, E), lambda i: (0, 0)),           # wo
                pl.BlockSpec((rows, E), lambda i: (i, 0)),        # cos
                pl.BlockSpec((rows, E), lambda i: (i, 0)),        # sin
            ],
            out_specs=pl.BlockSpec((rows, E), lambda i: (i, 0)),
        ),
        compiler_params=pltpu.CompilerParams(
            # On v7x "parallel" lets the runtime split the batch axis across the
            # two TensorCores (pltpu.CORE_PARALLEL is the explicit alternative).
            dimension_semantics=("parallel",),
            vmem_limit_bytes=vmem_limit),
    )(x2d, w_fused, wo, cos_full, sin_full)
    return out.reshape(B, S, E)


def precompute_cos_sin(seqlen, head_dim, theta=10000.0):
    freqs = 1.0 / (theta ** (jnp.arange(0, head_dim, 2, dtype=jnp.float32) / head_dim))
    t = jnp.arange(seqlen, dtype=jnp.float32)
    ang = jnp.outer(t, freqs)                              # (S, hd/2)
    return jnp.cos(ang), jnp.sin(ang)


def reference_forward(x, w_atten, w_proj, cos, sin, num_heads):
    """Pure-JAX f32 reference reproducing the PyTorch forward (interleaved rotary)."""
    B, S, E = x.shape
    hd = E // num_heads
    qkv = x @ w_atten.T
    xq, xk, xv = jnp.split(qkv, 3, axis=-1)
    xq = xq.reshape(B, S, num_heads, hd)
    xk = xk.reshape(B, S, num_heads, hd)
    xv = xv.reshape(B, S, num_heads, hd)

    def rope(t):
        tr = t.reshape(B, S, num_heads, hd // 2, 2)
        te, to = tr[..., 0], tr[..., 1]
        c = cos[None, :, None, :]
        s = sin[None, :, None, :]
        return jnp.stack([te * c - to * s, te * s + to * c],
                         axis=-1).reshape(B, S, num_heads, hd)

    xq, xk = rope(xq), rope(xk)
    q = jnp.transpose(xq, (0, 2, 1, 3))
    k = jnp.transpose(xk, (0, 2, 1, 3))
    v = jnp.transpose(xv, (0, 2, 1, 3))
    att = jnp.einsum('bhqd,bhkd->bhqk', q, k) * (1.0 / math.sqrt(hd))
    mask = jnp.tril(jnp.ones((S, S), dtype=bool))
    att = jnp.where(mask[None, None], att, -jnp.inf)
    att = jax.nn.softmax(att, axis=-1)
    y = jnp.einsum('bhqk,bhkd->bhqd', att, v)
    y = jnp.transpose(y, (0, 2, 1, 3)).reshape(B, S, E)
    return y @ w_proj.T


if __name__ == "__main__":
    # Small shapes consistent with the module config
    # (embedded_dim=256, num_heads=4, max_seq_length=64).
    B, S, E, H = 2, 64, 256, 4
    hd = E // H

    key = jax.random.PRNGKey(0)
    kx, kw1, kw2 = jax.random.split(key, 3)
    x = jax.random.normal(kx, (B, S, E), dtype=jnp.float32)
    # Deterministic parameter init (nn.Linear-style uniform, bias=False).
    bound = 1.0 / math.sqrt(E)
    w_atten = jax.random.uniform(kw1, (3 * E, E), jnp.float32, -bound, bound)
    w_proj = jax.random.uniform(kw2, (E, E), jnp.float32, -bound, bound)
    cos, sin = precompute_cos_sin(S, hd)

    out = attention_head_forward(x, w_atten, w_proj, cos, sin, H)
    out = jax.block_until_ready(out)

    ref = reference_forward(x, w_atten, w_proj, cos, sin, H)
    # bf16 matmul operands (f32 accumulation) -> relaxed tolerance vs f32 reference.
    np.testing.assert_allclose(np.asarray(out), np.asarray(ref),
                               rtol=2e-2, atol=2e-2)
    print("KERNEL_OK")
</pallas_src>

<mosaic_0001>
module attributes {stable_mosaic.version = 11 : i64} {
  func.func @_attention_head_kernel(%arg0: i32, %arg1: memref<128x256xbf16, #tpu.memory_space<vmem>>, %arg2: memref<256x1280xbf16, #tpu.memory_space<vmem>>, %arg3: memref<256x256xbf16, #tpu.memory_space<vmem>>, %arg4: memref<128x256xf32, #tpu.memory_space<vmem>>, %arg5: memref<128x256xf32, #tpu.memory_space<vmem>>, %arg6: memref<128x256xf32, #tpu.memory_space<vmem>>) attributes {dimension_semantics = [#tpu.dimension_semantics<parallel>], iteration_bounds = array<i64: 1>, scalar_prefetch = 0 : i64, scratch_operands = 0 : i64, tpu.core_type = #tpu.core_type<tc>, window_params = [{transform_indices = @transform_0, window_bounds = array<i64: 128, 256>}, {pipeline_mode = #tpu.pipeline_mode<synchronous>, transform_indices = @transform_1, window_bounds = array<i64: 256, 1280>}, {pipeline_mode = #tpu.pipeline_mode<synchronous>, transform_indices = @transform_2, window_bounds = array<i64: 256, 256>}, {transform_indices = @transform_3, window_bounds = array<i64: 128, 256>}, {transform_indices = @transform_4, window_bounds = array<i64: 128, 256>}, {transform_indices = @transform_5, window_bounds = array<i64: 128, 256>}]} {
    %c0 = arith.constant 0 : index
    %c0_0 = arith.constant 0 : index
    %0 = vector.load %arg1[%c0, %c0_0] : memref<128x256xbf16, #tpu.memory_space<vmem>>, vector<128x256xbf16>
    %c0_1 = arith.constant 0 : index
    %c0_2 = arith.constant 0 : index
    %1 = vector.load %arg2[%c0_1, %c0_2] : memref<256x1280xbf16, #tpu.memory_space<vmem>>, vector<256x1280xbf16>
    %cst = arith.constant dense<0.000000e+00> : vector<128x1280xf32>
    %2 = tpu.matmul %0, %1, %cst {dimension_numbers = #tpu.dot_dimension_numbers<[1], [0], [0], [1], [0, 0, 1, 1], [], []>} : vector<128x256xbf16>, vector<256x1280xbf16>, vector<128x1280xf32> -> vector<128x1280xf32>
    %c0_3 = arith.constant 0 : index
    %c0_4 = arith.constant 0 : index
    %3 = vector.load %arg4[%c0_3, %c0_4] : memref<128x256xf32, #tpu.memory_space<vmem>>, vector<128x256xf32>
    %c0_5 = arith.constant 0 : index
    %c0_6 = arith.constant 0 : index
    %4 = vector.load %arg5[%c0_5, %c0_6] : memref<128x256xf32, #tpu.memory_space<vmem>>, vector<128x256xf32>
    %5 = vector.extract_strided_slice %2 {offsets = [0, 0], sizes = [128, 256], strides = [1, 1]} : vector<128x1280xf32> to vector<128x256xf32>
    %6 = arith.mulf %5, %3 : vector<128x256xf32>
    %7 = vector.extract_strided_slice %2 {offsets = [0, 256], sizes = [128, 256], strides = [1, 1]} : vector<128x1280xf32> to vector<128x256xf32>
    %8 = arith.mulf %7, %4 : vector<128x256xf32>
    %9 = arith.addf %6, %8 : vector<128x256xf32>
    %10 = arith.truncf %9 : vector<128x256xf32> to vector<128x256xbf16>
    %11 = vector.extract_strided_slice %2 {offsets = [0, 512], sizes = [128, 256], strides = [1, 1]} : vector<128x1280xf32> to vector<128x256xf32>
    %12 = arith.mulf %11, %3 : vector<128x256xf32>
    %13 = vector.extract_strided_slice %2 {offsets = [0, 768], sizes = [128, 256], strides = [1, 1]} : vector<128x1280xf32> to vector<128x256xf32>
    %14 = arith.mulf %13, %4 : vector<128x256xf32>
    %15 = arith.addf %12, %14 : vector<128x256xf32>
    %16 = arith.truncf %15 : vector<128x256xf32> to vector<128x256xbf16>
    %17 = vector.extract_strided_slice %2 {offsets = [0, 1024], sizes = [128, 256], strides = [1, 1]} : vector<128x1280xf32> to vector<128x256xf32>
    %18 = arith.truncf %17 : vector<128x256xf32> to vector<128x256xbf16>
    %19 = tpu.iota {dimensions = array<i32: 0>} : vector<64x64xi32>
    %20 = tpu.iota {dimensions = array<i32: 1>} : vector<64x64xi32>
    %21 = arith.cmpi sle, %20, %19 : vector<64x64xi32>
    %22 = vector.extract_strided_slice %10 {offsets = [0, 0], sizes = [64, 64], strides = [1, 1]} : vector<128x256xbf16> to vector<64x64xbf16>
    %23 = vector.extract_strided_slice %16 {offsets = [0, 0], sizes = [64, 64], strides = [1, 1]} : vector<128x256xbf16> to vector<64x64xbf16>
    %24 = vector.extract_strided_slice %18 {offsets = [0, 0], sizes = [64, 64], strides = [1, 1]} : vector<128x256xbf16> to vector<64x64xbf16>
    %cst_7 = arith.constant dense<0.000000e+00> : vector<64x64xf32>
    %25 = tpu.matmul %22, %23, %cst_7 {dimension_numbers = #tpu.dot_dimension_numbers<[1], [1], [0], [0], [0, 0, 1, 0], [], []>} : vector<64x64xbf16>, vector<64x64xbf16>, vector<64x64xf32> -> vector<64x64xf32>
    %cst_8 = arith.constant -1.000000e+30 : f32
    %26 = vector.broadcast %cst_8 : f32 to vector<64x64xf32>
    %27 = arith.select %21, %25, %26 : vector<64x64xi1>, vector<64x64xf32>
    %cst_9 = arith.constant dense<0xFF800000> : vector<64xf32>
    %28 = vector.multi_reduction <maximumf>, %27, %cst_9 [1] : vector<64x64xf32> to vector<64xf32>
    %29 = vector.shape_cast %28 : vector<64xf32> to vector<64x1xf32>
    %30 = vector.broadcast %29 : vector<64x1xf32> to vector<64x64xf32>
    %31 = arith.subf %27, %30 : vector<64x64xf32>
    %32 = math.exp %31 : vector<64x64xf32>
    %cst_10 = arith.constant dense<0.000000e+00> : vector<64xf32>
    %33 = vector.multi_reduction <add>, %32, %cst_10 [1] : vector<64x64xf32> to vector<64xf32>
    %34 = vector.shape_cast %33 : vector<64xf32> to vector<64x1xf32>
    %35 = arith.truncf %32 : vector<64x64xf32> to vector<64x64xbf16>
    %cst_11 = arith.constant dense<0.000000e+00> : vector<64x64xf32>
    %36 = tpu.matmul %35, %24, %cst_11 {dimension_numbers = #tpu.dot_dimension_numbers<[1], [0], [0], [1], [0, 0, 1, 1], [], []>} : vector<64x64xbf16>, vector<64x64xbf16>, vector<64x64xf32> -> vector<64x64xf32>
    %37 = tpu.reciprocal %34 {approx = true} : vector<64x1xf32> -> vector<64x1xf32>
    %38 = vector.broadcast %37 : vector<64x1xf32> to vector<64x64xf32>
    %39 = arith.mulf %36, %38 : vector<64x64xf32>
    %40 = vector.extract_strided_slice %10 {offsets = [0, 64], sizes = [64, 64], strides = [1, 1]} : vector<128x256xbf16> to vector<64x64xbf16>
    %41 = vector.extract_strided_slice %16 {offsets = [0, 64], sizes = [64, 64], strides = [1, 1]} : vector<128x256xbf16> to vector<64x64xbf16>
    %42 = vector.extract_strided_slice %18 {offsets = [0, 64], sizes = [64, 64], strides = [1, 1]} : vector<128x256xbf16> to vector<64x64xbf16>
    %cst_12 = arith.constant dense<0.000000e+00> : vector<64x64xf32>
    %43 = tpu.matmul %40, %41, %cst_12 {dimension_numbers = #tpu.dot_dimension_numbers<[1], [1], [0], [0], [0, 0, 1, 0], [], []>} : vector<64x64xbf16>, vector<64x64xbf16>, vector<64x64xf32> -> vector<64x64xf32>
    %cst_13 = arith.constant -1.000000e+30 : f32
    %44 = vector.broadcast %cst_13 : f32 to vector<64x64xf32>
    %45 = arith.select %21, %43, %44 : vector<64x64xi1>, vector<64x64xf32>
    %cst_14 = arith.constant dense<0xFF800000> : vector<64xf32>
    %46 = vector.multi_reduction <maximumf>, %45, %cst_14 [1] : vector<64x64xf32> to vector<64xf32>
    %47 = vector.shape_cast %46 : vector<64xf32> to vector<64x1xf32>
    %48 = vector.broadcast %47 : vector<64x1xf32> to vector<64x64xf32>
    %49 = arith.subf %45, %48 : vector<64x64xf32>
    %50 = math.exp %49 : vector<64x64xf32>
    %cst_15 = arith.constant dense<0.000000e+00> : vector<64xf32>
    %51 = vector.multi_reduction <add>, %50, %cst_15 [1] : vector<64x64xf32> to vector<64xf32>
    %52 = vector.shape_cast %51 : vector<64xf32> to vector<64x1xf32>
    %53 = arith.truncf %50 : vector<64x64xf32> to vector<64x64xbf16>
    %cst_16 = arith.constant dense<0.000000e+00> : vector<64x64xf32>
    %54 = tpu.matmul %53, %42, %cst_16 {dimension_numbers = #tpu.dot_dimension_numbers<[1], [0], [0], [1], [0, 0, 1, 1], [], []>} : vector<64x64xbf16>, vector<64x64xbf16>, vector<64x64xf32> -> vector<64x64xf32>
    %55 = tpu.reciprocal %52 {approx = true} : vector<64x1xf32> -> vector<64x1xf32>
    %56 = vector.broadcast %55 : vector<64x1xf32> to vector<64x64xf32>
    %57 = arith.mulf %54, %56 : vector<64x64xf32>
    %58 = vector.extract_strided_slice %10 {offsets = [0, 128], sizes = [64, 64], strides = [1, 1]} : vector<128x256xbf16> to vector<64x64xbf16>
    %59 = vector.extract_strided_slice %16 {offsets = [0, 128], sizes = [64, 64], strides = [1, 1]} : vector<128x256xbf16> to vector<64x64xbf16>
    %60 = vector.extract_strided_slice %18 {offsets = [0, 128], sizes = [64, 64], strides = [1, 1]} : vector<128x256xbf16> to vector<64x64xbf16>
    %cst_17 = arith.constant dense<0.000000e+00> : vector<64x64xf32>
    %61 = tpu.matmul %58, %59, %cst_17 {dimension_numbers = #tpu.dot_dimension_numbers<[1], [1], [0], [0], [0, 0, 1, 0], [], []>} : vector<64x64xbf16>, vector<64x64xbf16>, vector<64x64xf32> -> vector<64x64xf32>
    %cst_18 = arith.constant -1.000000e+30 : f32
    %62 = vector.broadcast %cst_18 : f32 to vector<64x64xf32>
    %63 = arith.select %21, %61, %62 : vector<64x64xi1>, vector<64x64xf32>
    %cst_19 = arith.constant dense<0xFF800000> : vector<64xf32>
    %64 = vector.multi_reduction <maximumf>, %63, %cst_19 [1] : vector<64x64xf32> to vector<64xf32>
    %65 = vector.shape_cast %64 : vector<64xf32> to vector<64x1xf32>
    %66 = vector.broadcast %65 : vector<64x1xf32> to vector<64x64xf32>
    %67 = arith.subf %63, %66 : vector<64x64xf32>
    %68 = math.exp %67 : vector<64x64xf32>
    %cst_20 = arith.constant dense<0.000000e+00> : vector<64xf32>
    %69 = vector.multi_reduction <add>, %68, %cst_20 [1] : vector<64x64xf32> to vector<64xf32>
    %70 = vector.shape_cast %69 : vector<64xf32> to vector<64x1xf32>
    %71 = arith.truncf %68 : vector<64x64xf32> to vector<64x64xbf16>
    %cst_21 = arith.constant dense<0.000000e+00> : vector<64x64xf32>
    %72 = tpu.matmul %71, %60, %cst_21 {dimension_numbers = #tpu.dot_dimension_numbers<[1], [0], [0], [1], [0, 0, 1, 1], [], []>} : vector<64x64xbf16>, vector<64x64xbf16>, vector<64x64xf32> -> vector<64x64xf32>
    %73 = tpu.reciprocal %70 {approx = true} : vector<64x1xf32> -> vector<64x1xf32>
    %74 = vector.broadcast %73 : vector<64x1xf32> to vector<64x64xf32>
    %75 = arith.mulf %72, %74 : vector<64x64xf32>
    %76 = vector.extract_strided_slice %10 {offsets = [0, 192], sizes = [64, 64], strides = [1, 1]} : vector<128x256xbf16> to vector<64x64xbf16>
    %77 = vector.extract_strided_slice %16 {offsets = [0, 192], sizes = [64, 64], strides = [1, 1]} : vector<128x256xbf16> to vector<64x64xbf16>
    %78 = vector.extract_strided_slice %18 {offsets = [0, 192], sizes = [64, 64], strides = [1, 1]} : vector<128x256xbf16> to vector<64x64xbf16>
    %cst_22 = arith.constant dense<0.000000e+00> : vector<64x64xf32>
    %79 = tpu.matmul %76, %77, %cst_22 {dimension_numbers = #tpu.dot_dimension_numbers<[1], [1], [0], [0], [0, 0, 1, 0], [], []>} : vector<64x64xbf16>, vector<64x64xbf16>, vector<64x64xf32> -> vector<64x64xf32>
    %cst_23 = arith.constant -1.000000e+30 : f32
    %80 = vector.broadcast %cst_23 : f32 to vector<64x64xf32>
    %81 = arith.select %21, %79, %80 : vector<64x64xi1>, vector<64x64xf32>
    %cst_24 = arith.constant dense<0xFF800000> : vector<64xf32>
    %82 = vector.multi_reduction <maximumf>, %81, %cst_24 [1] : vector<64x64xf32> to vector<64xf32>
    %83 = vector.shape_cast %82 : vector<64xf32> to vector<64x1xf32>
    %84 = vector.broadcast %83 : vector<64x1xf32> to vector<64x64xf32>
    %85 = arith.subf %81, %84 : vector<64x64xf32>
    %86 = math.exp %85 : vector<64x64xf32>
    %cst_25 = arith.constant dense<0.000000e+00> : vector<64xf32>
    %87 = vector.multi_reduction <add>, %86, %cst_25 [1] : vector<64x64xf32> to vector<64xf32>
    %88 = vector.shape_cast %87 : vector<64xf32> to vector<64x1xf32>
    %89 = arith.truncf %86 : vector<64x64xf32> to vector<64x64xbf16>
    %cst_26 = arith.constant dense<0.000000e+00> : vector<64x64xf32>
    %90 = tpu.matmul %89, %78, %cst_26 {dimension_numbers = #tpu.dot_dimension_numbers<[1], [0], [0], [1], [0, 0, 1, 1], [], []>} : vector<64x64xbf16>, vector<64x64xbf16>, vector<64x64xf32> -> vector<64x64xf32>
    %91 = tpu.reciprocal %88 {approx = true} : vector<64x1xf32> -> vector<64x1xf32>
    %92 = vector.broadcast %91 : vector<64x1xf32> to vector<64x64xf32>
    %93 = arith.mulf %90, %92 : vector<64x64xf32>
    %94 = tpu.concatenate %39, %57, %75, %93 in 1 : vector<64x64xf32>, vector<64x64xf32>, vector<64x64xf32>, vector<64x64xf32> -> vector<64x256xf32>
    %95 = vector.extract_strided_slice %10 {offsets = [64, 0], sizes = [64, 64], strides = [1, 1]} : vector<128x256xbf16> to vector<64x64xbf16>
    %96 = vector.extract_strided_slice %16 {offsets = [64, 0], sizes = [64, 64], strides = [1, 1]} : vector<128x256xbf16> to vector<64x64xbf16>
    %97 = vector.extract_strided_slice %18 {offsets = [64, 0], sizes = [64, 64], strides = [1, 1]} : vector<128x256xbf16> to vector<64x64xbf16>
    %cst_27 = arith.constant dense<0.000000e+00> : vector<64x64xf32>
    %98 = tpu.matmul %95, %96, %cst_27 {dimension_numbers = #tpu.dot_dimension_numbers<[1], [1], [0], [0], [0, 0, 1, 0], [], []>} : vector<64x64xbf16>, vector<64x64xbf16>, vector<64x64xf32> -> vector<64x64xf32>
    %cst_28 = arith.constant -1.000000e+30 : f32
    %99 = vector.broadcast %cst_28 : f32 to vector<64x64xf32>
    %100 = arith.select %21, %98, %99 : vector<64x64xi1>, vector<64x64xf32>
    %cst_29 = arith.constant dense<0xFF800000> : vector<64xf32>
    %101 = vector.multi_reduction <maximumf>, %100, %cst_29 [1] : vector<64x64xf32> to vector<64xf32>
    %102 = vector.shape_cast %101 : vector<64xf32> to vector<64x1xf32>
    %103 = vector.broadcast %102 : vector<64x1xf32> to vector<64x64xf32>
    %104 = arith.subf %100, %103 : vector<64x64xf32>
    %105 = math.exp %104 : vector<64x64xf32>
    %cst_30 = arith.constant dense<0.000000e+00> : vector<64xf32>
    %106 = vector.multi_reduction <add>, %105, %cst_30 [1] : vector<64x64xf32> to vector<64xf32>
    %107 = vector.shape_cast %106 : vector<64xf32> to vector<64x1xf32>
    %108 = arith.truncf %105 : vector<64x64xf32> to vector<64x64xbf16>
    %cst_31 = arith.constant dense<0.000000e+00> : vector<64x64xf32>
    %109 = tpu.matmul %108, %97, %cst_31 {dimension_numbers = #tpu.dot_dimension_numbers<[1], [0], [0], [1], [0, 0, 1, 1], [], []>} : vector<64x64xbf16>, vector<64x64xbf16>, vector<64x64xf32> -> vector<64x64xf32>
    %110 = tpu.reciprocal %107 {approx = true} : vector<64x1xf32> -> vector<64x1xf32>
    %111 = vector.broadcast %110 : vector<64x1xf32> to vector<64x64xf32>
    %112 = arith.mulf %109, %111 : vector<64x64xf32>
    %113 = vector.extract_strided_slice %10 {offsets = [64, 64], sizes = [64, 64], strides = [1, 1]} : vector<128x256xbf16> to vector<64x64xbf16>
    %114 = vector.extract_strided_slice %16 {offsets = [64, 64], sizes = [64, 64], strides = [1, 1]} : vector<128x256xbf16> to vector<64x64xbf16>
    %115 = vector.extract_strided_slice %18 {offsets = [64, 64], sizes = [64, 64], strides = [1, 1]} : vector<128x256xbf16> to vector<64x64xbf16>
    %cst_32 = arith.constant dense<0.000000e+00> : vector<64x64xf32>
    %116 = tpu.matmul %113, %114, %cst_32 {dimension_numbers = #tpu.dot_dimension_numbers<[1], [1], [0], [0], [0, 0, 1, 0], [], []>} : vector<64x64xbf16>, vector<64x64xbf16>, vector<64x64xf32> -> vector<64x64xf32>
    %cst_33 = arith.constant -1.000000e+30 : f32
    %117 = vector.broadcast %cst_33 : f32 to vector<64x64xf32>
    %118 = arith.select %21, %116, %117 : vector<64x64xi1>, vector<64x64xf32>
    %cst_34 = arith.constant dense<0xFF800000> : vector<64xf32>
    %119 = vector.multi_reduction <maximumf>, %118, %cst_34 [1] : vector<64x64xf32> to vector<64xf32>
    %120 = vector.shape_cast %119 : vector<64xf32> to vector<64x1xf32>
    %121 = vector.broadcast %120 : vector<64x1xf32> to vector<64x64xf32>
    %122 = arith.subf %118, %121 : vector<64x64xf32>
    %123 = math.exp %122 : vector<64x64xf32>
    %cst_35 = arith.constant dense<0.000000e+00> : vector<64xf32>
    %124 = vector.multi_reduction <add>, %123, %cst_35 [1] : vector<64x64xf32> to vector<64xf32>
    %125 = vector.shape_cast %124 : vector<64xf32> to vector<64x1xf32>
    %126 = arith.truncf %123 : vector<64x64xf32> to vector<64x64xbf16>
    %cst_36 = arith.constant dense<0.000000e+00> : vector<64x64xf32>
    %127 = tpu.matmul %126, %115, %cst_36 {dimension_numbers = #tpu.dot_dimension_numbers<[1], [0], [0], [1], [0, 0, 1, 1], [], []>} : vector<64x64xbf16>, vector<64x64xbf16>, vector<64x64xf32> -> vector<64x64xf32>
    %128 = tpu.reciprocal %125 {approx = true} : vector<64x1xf32> -> vector<64x1xf32>
    %129 = vector.broadcast %128 : vector<64x1xf32> to vector<64x64xf32>
    %130 = arith.mulf %127, %129 : vector<64x64xf32>
    %131 = vector.extract_strided_slice %10 {offsets = [64, 128], sizes = [64, 64], strides = [1, 1]} : vector<128x256xbf16> to vector<64x64xbf16>
    %132 = vector.extract_strided_slice %16 {offsets = [64, 128], sizes = [64, 64], strides = [1, 1]} : vector<128x256xbf16> to vector<64x64xbf16>
    %133 = vector.extract_strided_slice %18 {offsets = [64, 128], sizes = [64, 64], strides = [1, 1]} : vector<128x256xbf16> to vector<64x64xbf16>
    %cst_37 = arith.constant dense<0.000000e+00> : vector<64x64xf32>
    %134 = tpu.matmul %131, %132, %cst_37 {dimension_numbers = #tpu.dot_dimension_numbers<[1], [1], [0], [0], [0, 0, 1, 0], [], []>} : vector<64x64xbf16>, vector<64x64xbf16>, vector<64x64xf32> -> vector<64x64xf32>
    %cst_38 = arith.constant -1.000000e+30 : f32
    %135 = vector.broadcast %cst_38 : f32 to vector<64x64xf32>
    %136 = arith.select %21, %134, %135 : vector<64x64xi1>, vector<64x64xf32>
    %cst_39 = arith.constant dense<0xFF800000> : vector<64xf32>
    %137 = vector.multi_reduction <maximumf>, %136, %cst_39 [1] : vector<64x64xf32> to vector<64xf32>
    %138 = vector.shape_cast %137 : vector<64xf32> to vector<64x1xf32>
    %139 = vector.broadcast %138 : vector<64x1xf32> to vector<64x64xf32>
    %140 = arith.subf %136, %139 : vector<64x64xf32>
    %141 = math.exp %140 : vector<64x64xf32>
    %cst_40 = arith.constant dense<0.000000e+00> : vector<64xf32>
    %142 = vector.multi_reduction <add>, %141, %cst_40 [1] : vector<64x64xf32> to vector<64xf32>
    %143 = vector.shape_cast %142 : vector<64xf32> to vector<64x1xf32>
    %144 = arith.truncf %141 : vector<64x64xf32> to vector<64x64xbf16>
    %cst_41 = arith.constant dense<0.000000e+00> : vector<64x64xf32>
    %145 = tpu.matmul %144, %133, %cst_41 {dimension_numbers = #tpu.dot_dimension_numbers<[1], [0], [0], [1], [0, 0, 1, 1], [], []>} : vector<64x64xbf16>, vector<64x64xbf16>, vector<64x64xf32> -> vector<64x64xf32>
    %146 = tpu.reciprocal %143 {approx = true} : vector<64x1xf32> -> vector<64x1xf32>
    %147 = vector.broadcast %146 : vector<64x1xf32> to vector<64x64xf32>
    %148 = arith.mulf %145, %147 : vector<64x64xf32>
    %149 = vector.extract_strided_slice %10 {offsets = [64, 192], sizes = [64, 64], strides = [1, 1]} : vector<128x256xbf16> to vector<64x64xbf16>
    %150 = vector.extract_strided_slice %16 {offsets = [64, 192], sizes = [64, 64], strides = [1, 1]} : vector<128x256xbf16> to vector<64x64xbf16>
    %151 = vector.extract_strided_slice %18 {offsets = [64, 192], sizes = [64, 64], strides = [1, 1]} : vector<128x256xbf16> to vector<64x64xbf16>
    %cst_42 = arith.constant dense<0.000000e+00> : vector<64x64xf32>
    %152 = tpu.matmul %149, %150, %cst_42 {dimension_numbers = #tpu.dot_dimension_numbers<[1], [1], [0], [0], [0, 0, 1, 0], [], []>} : vector<64x64xbf16>, vector<64x64xbf16>, vector<64x64xf32> -> vector<64x64xf32>
    %cst_43 = arith.constant -1.000000e+30 : f32
    %153 = vector.broadcast %cst_43 : f32 to vector<64x64xf32>
    %154 = arith.select %21, %152, %153 : vector<64x64xi1>, vector<64x64xf32>
    %cst_44 = arith.constant dense<0xFF800000> : vector<64xf32>
    %155 = vector.multi_reduction <maximumf>, %154, %cst_44 [1] : vector<64x64xf32> to vector<64xf32>
    %156 = vector.shape_cast %155 : vector<64xf32> to vector<64x1xf32>
    %157 = vector.broadcast %156 : vector<64x1xf32> to vector<64x64xf32>
    %158 = arith.subf %154, %157 : vector<64x64xf32>
    %159 = math.exp %158 : vector<64x64xf32>
    %cst_45 = arith.constant dense<0.000000e+00> : vector<64xf32>
    %160 = vector.multi_reduction <add>, %159, %cst_45 [1] : vector<64x64xf32> to vector<64xf32>
    %161 = vector.shape_cast %160 : vector<64xf32> to vector<64x1xf32>
    %162 = arith.truncf %159 : vector<64x64xf32> to vector<64x64xbf16>
    %cst_46 = arith.constant dense<0.000000e+00> : vector<64x64xf32>
    %163 = tpu.matmul %162, %151, %cst_46 {dimension_numbers = #tpu.dot_dimension_numbers<[1], [0], [0], [1], [0, 0, 1, 1], [], []>} : vector<64x64xbf16>, vector<64x64xbf16>, vector<64x64xf32> -> vector<64x64xf32>
    %164 = tpu.reciprocal %161 {approx = true} : vector<64x1xf32> -> vector<64x1xf32>
    %165 = vector.broadcast %164 : vector<64x1xf32> to vector<64x64xf32>
    %166 = arith.mulf %163, %165 : vector<64x64xf32>
    %167 = tpu.concatenate %112, %130, %148, %166 in 1 : vector<64x64xf32>, vector<64x64xf32>, vector<64x64xf32>, vector<64x64xf32> -> vector<64x256xf32>
    %168 = tpu.concatenate %94, %167 in 0 : vector<64x256xf32>, vector<64x256xf32> -> vector<128x256xf32>
    %169 = arith.truncf %168 : vector<128x256xf32> to vector<128x256xbf16>
    %c0_47 = arith.constant 0 : index
    %c0_48 = arith.constant 0 : index
    %170 = vector.load %arg3[%c0_47, %c0_48] : memref<256x256xbf16, #tpu.memory_space<vmem>>, vector<256x256xbf16>
    %cst_49 = arith.constant dense<0.000000e+00> : vector<128x256xf32>
    %171 = tpu.matmul %169, %170, %cst_49 {dimension_numbers = #tpu.dot_dimension_numbers<[1], [0], [0], [1], [0, 0, 1, 1], [], []>} : vector<128x256xbf16>, vector<256x256xbf16>, vector<128x256xf32> -> vector<128x256xf32>
    %c0_50 = arith.constant 0 : index
    %c0_51 = arith.constant 0 : index
    %172 = vector.load %arg6[%c0_50, %c0_51] : memref<128x256xf32, #tpu.memory_space<vmem>>, vector<128x256xf32>
    tpu.vector_store %arg6[%c0_50, %c0_51], %171 {strides = array<i32>} : memref<128x256xf32, #tpu.memory_space<vmem>>, vector<128x256xf32>,
    return
  }
  func.func @transform_0(%arg0: i32) -> (i32, i32) {
    %c0_i32 = arith.constant 0 : i32
    %c0_i32_0 = arith.constant 0 : i32
    return %arg0, %c0_i32 : i32, i32
  }
  func.func @transform_1(%arg0: i32) -> (i32, i32) {
    %c0_i32 = arith.constant 0 : i32
    %c0_i32_0 = arith.constant 0 : i32
    %c0_i32_1 = arith.constant 0 : i32
    return %c0_i32, %c0_i32_0 : i32, i32
  }
  func.func @transform_2(%arg0: i32) -> (i32, i32) {
    %c0_i32 = arith.constant 0 : i32
    %c0_i32_0 = arith.constant 0 : i32
    %c0_i32_1 = arith.constant 0 : i32
    return %c0_i32, %c0_i32_0 : i32, i32
  }
  func.func @transform_3(%arg0: i32) -> (i32, i32) {
    %c0_i32 = arith.constant 0 : i32
    %c0_i32_0 = arith.constant 0 : i32
    return %arg0, %c0_i32 : i32, i32
  }
  func.func @transform_4(%arg0: i32) -> (i32, i32) {
    %c0_i32 = arith.constant 0 : i32
    %c0_i32_0 = arith.constant 0 : i32
    return %arg0, %c0_i32 : i32, i32
  }
  func.func @transform_5(%arg0: i32) -> (i32, i32) {
    %c0_i32 = arith.constant 0 : i32
    %c0_i32_0 = arith.constant 0 : i32
    return %arg0, %c0_i32 : i32, i32
  }
}

</mosaic_0001>

<llo_original>
// kernel: tpu_custom_call.1
$region0: #{tpu_custom_call.1}
  #allocation0 [shape = 'u32[]', space=smem, size = 0x4, offset = 0x4, fixed_abs, tag = 'smem constant byte address 0x4 - core index']
  #allocation1 [shape = 'u32[144,128]{1,0:T(1,128)}', space=vmem, size = 0x12000, scoped, tag = 'internal scratch']
  %s0 = inlined_call_operand.hbm [shape: bf16[128,256], index: 0, kind: input, shape index: {}]
  %s1 = inlined_call_operand.hbm [shape: bf16[256,1280], index: 1, kind: input, shape index: {}]
  %s2 = inlined_call_operand.hbm [shape: bf16[256,256], index: 2, kind: input, shape index: {}]
  %s3 = inlined_call_operand.hbm [shape: f32[128,256], index: 3, kind: input, shape index: {}]
  %s4 = inlined_call_operand.hbm [shape: f32[128,256], index: 4, kind: input, shape index: {}]
  %s5 = inlined_call_operand.hbm [shape: f32[128,256], index: 5, kind: output, shape index: {}]
  %s6 = sld [smem:[#allocation0]]
  $region50: #{tpu_custom_call.1} parent=0
    _
  %s8 = ssub.s32 1, %s6
  %s9 = scalar_select 0, %s8, %s6
  $region1: #{tpu_custom_call.1} parent=0
    #allocation2 [shape = 'u8[65536]{0}', space=vmem, size = 0x10000, scoped, tag = 'input window, operand 0, single buffered']
    #allocation3 [shape = 's32[1]{0}', space=sflag, size = 0x4, scoped, tag = 'scoped memory for tpu_custom_call.1']
    #allocation4 [shape = 's32[1]{0}', space=sflag, size = 0x4, scoped, tag = 'scoped memory for tpu_custom_call.1']
    #allocation5 [shape = 'u8[655360]{0}', space=vmem, size = 0xa0000, scoped, tag = 'input window, operand 1, single buffered']
    #allocation6 [shape = 's32[1]{0}', space=sflag, size = 0x4, scoped, tag = 'scoped memory for tpu_custom_call.1']
    #allocation7 [shape = 'u8[131072]{0}', space=vmem, size = 0x20000, scoped, tag = 'input window, operand 2, single buffered']
    #allocation8 [shape = 'u8[131072]{0}', space=vmem, size = 0x20000, scoped, tag = 'input window, operand 3, single buffered']
    #allocation9 [shape = 's32[1]{0}', space=sflag, size = 0x4, scoped, tag = 'scoped memory for tpu_custom_call.1']
    #allocation10 [shape = 'u8[131072]{0}', space=vmem, size = 0x20000, scoped, tag = 'input window, operand 4, single buffered']
    #allocation11 [shape = 'u8[131072]{0}', space=vmem, size = 0x20000, scoped, tag = 'output window, operand 0, single buffered']
    %10 = vsyncpa [#allocation3], 0
    %11 = vsyncpa [#allocation6], 0
    %12 = vsyncpa [#allocation9], 0
    %13 = vsyncpa [#allocation4], 0
    // Predicated region
    $region2: #{tpu_custom_call.1} parent=1 // pred_check
      _
    $region3: #{tpu_custom_call.1} parent=1 // pred_check_branch
      %15 = sbr.rel (0) target = $region5
    $region4: #{tpu_custom_call.1} parent=1 // pred_region
      %s17 = ssub.s32 2048, 2048
      %18 = vsyncadd [#allocation3], %s17
      %s19 = sshll.u32 [#allocation2], 4
      %s20 = int_to_ptr.vmem [resolvable:$true] %s19
      %25 = dma.hbm_to_vmem [thread:$0]  %s0, 2048, %s20, [#allocation3], 128, 128, 8
    $region5: #{tpu_custom_call.1} parent=1 // pred_fallthru
      _
    // Predicated region
    $region6: #{tpu_custom_call.1} parent=1 // pred_check
      _
    $region7: #{tpu_custom_call.1} parent=1 // pred_check_branch
      %27 = sbr.rel (0) target = $region9
    $region8: #{tpu_custom_call.1} parent=1 // pred_region
      %s29 = ssub.s32 20480, 20480
      %30 = vsyncadd [#allocation6], %s29
      %s31 = sshll.u32 [#allocation5], 4
      %s32 = int_to_ptr.vmem [resolvable:$true] %s31
      %37 = dma.hbm_to_vmem [thread:$0]  %s1, 20480, %s32, [#allocation6], 640, 640, 40
    $region9: #{tpu_custom_call.1} parent=1 // pred_fallthru
      _
    // Predicated region
    $region10: #{tpu_custom_call.1} parent=1 // pred_check
      _
    $region11: #{tpu_custom_call.1} parent=1 // pred_check_branch
      %39 = sbr.rel (0) target = $region13
    $region12: #{tpu_custom_call.1} parent=1 // pred_region
      %s41 = ssub.s32 4096, 4096
      %42 = vsyncadd [#allocation6], %s41
      %s43 = sshll.u32 [#allocation7], 4
      %s44 = int_to_ptr.vmem [resolvable:$true] %s43
      %49 = dma.hbm_to_vmem [thread:$0]  %s2, 4096, %s44, [#allocation6], 128, 128, 8
    $region13: #{tpu_custom_call.1} parent=1 // pred_fallthru
      _
    // Predicated region
    $region14: #{tpu_custom_call.1} parent=1 // pred_check
      _
    $region15: #{tpu_custom_call.1} parent=1 // pred_check_branch
      %51 = sbr.rel (0) target = $region17
    $region16: #{tpu_custom_call.1} parent=1 // pred_region
      %s53 = ssub.s32 4096, 4096
      %54 = vsyncadd [#allocation9], %s53
      %s55 = sshll.u32 [#allocation8], 4
      %s56 = int_to_ptr.vmem [resolvable:$true] %s55
      %61 = dma.hbm_to_vmem [thread:$0]  %s3, 4096, %s56, [#allocation9], 256, 256, 16
    $region17: #{tpu_custom_call.1} parent=1 // pred_fallthru
      _
    // Predicated region
    $region18: #{tpu_custom_call.1} parent=1 // pred_check
      _
    $region19: #{tpu_custom_call.1} parent=1 // pred_check_branch
      %63 = sbr.rel (0) target = $region21
    $region20: #{tpu_custom_call.1} parent=1 // pred_region
      %s65 = ssub.s32 4096, 4096
      %66 = vsyncadd [#allocation9], %s65
      %s67 = sshll.u32 [#allocation10], 4
      %s68 = int_to_ptr.vmem [resolvable:$true] %s67
      %73 = dma.hbm_to_vmem [thread:$0]  %s4, 4096, %s68, [#allocation9], 256, 256, 16
    $region21: #{tpu_custom_call.1} parent=1 // pred_fallthru
      _
    // Predicated region
    $region22: #{tpu_custom_call.1} parent=1 // pred_check
      _
    $region23: #{tpu_custom_call.1} parent=1 // pred_check_branch
      %75 = sbr.rel (0) target = $region25
    $region24: #{tpu_custom_call.1} parent=1 // pred_region
      %76 = dma.done [#allocation3], 2048
    $region25: #{tpu_custom_call.1} parent=1 // pred_fallthru
      _
    // Predicated region
    $region26: #{tpu_custom_call.1} parent=1 // pred_check
      _
    $region27: #{tpu_custom_call.1} parent=1 // pred_check_branch
      %78 = sbr.rel (0) target = $region29
    $region28: #{tpu_custom_call.1} parent=1 // pred_region
      %79 = dma.done [#allocation6], 20480
    $region29: #{tpu_custom_call.1} parent=1 // pred_fallthru
      _
    // Predicated region
    $region30: #{tpu_custom_call.1} parent=1 // pred_check
      _
    $region31: #{tpu_custom_call.1} parent=1 // pred_check_branch
      %81 = sbr.rel (0) target = $region33
    $region32: #{tpu_custom_call.1} parent=1 // pred_region
      %82 = dma.done [#allocation6], 4096
    $region33: #{tpu_custom_call.1} parent=1 // pred_fallthru
      _
    // Predicated region
    $region34: #{tpu_custom_call.1} parent=1 // pred_check
      _
    $region35: #{tpu_custom_call.1} parent=1 // pred_check_branch
      %84 = sbr.rel (0) target = $region37
    $region36: #{tpu_custom_call.1} parent=1 // pred_region
      %85 = dma.done [#allocation9], 4096
    $region37: #{tpu_custom_call.1} parent=1 // pred_fallthru
      _
    // Predicated region
    $region38: #{tpu_custom_call.1} parent=1 // pred_check
      _
    $region39: #{tpu_custom_call.1} parent=1 // pred_check_branch
      %87 = sbr.rel (0) target = $region41
    $region40: #{tpu_custom_call.1} parent=1 // pred_region
      %88 = dma.done [#allocation9], 4096
    $region41: #{tpu_custom_call.1} parent=1 // pred_fallthru
      _
    %v90 = vld [vmem:[#allocation2] sm:$0xff]
    %v91 = vld [vmem:[#allocation2 + $0x8] sm:$0xff]
    %v92 = vld [vmem:[#allocation2 + $0x10] sm:$0xff]
    %v93 = vld [vmem:[#allocation2 + $0x18] sm:$0xff]
    %v94 = vld [vmem:[#allocation2 + $0x20] sm:$0xff]
    %v95 = vld [vmem:[#allocation2 + $0x28] sm:$0xff]
    %v96 = vld [vmem:[#allocation2 + $0x30] sm:$0xff]
    %v97 = vld [vmem:[#allocation2 + $0x38] sm:$0xff]
    %v98 = vld [vmem:[#allocation2 + $0x40] sm:$0xff]
    %v99 = vld [vmem:[#allocation2 + $0x48] sm:$0xff]
    %v100 = vld [vmem:[#allocation2 + $0x50] sm:$0xff]
    %v101 = vld [vmem:[#allocation2 + $0x58] sm:$0xff]
    %v102 = vld [vmem:[#allocation2 + $0x60] sm:$0xff]
    %v103 = vld [vmem:[#allocation2 + $0x68] sm:$0xff]
    %v104 = vld [vmem:[#allocation2 + $0x70] sm:$0xff]
    %v105 = vld [vmem:[#allocation2 + $0x78] sm:$0xff]
    %v106 = vld [vmem:[#allocation5] sm:$0xff]
    %v107 = vld [vmem:[#allocation5 + $0x8] sm:$0xff]
    %v108 = vld [vmem:[#allocation5 + $0x10] sm:$0xff]
    %v109 = vld [vmem:[#allocation5 + $0x18] sm:$0xff]
    %v110 = vld [vmem:[#allocation5 + $0x20] sm:$0xff]
    %v111 = vld [vmem:[#allocation5 + $0x28] sm:$0xff]
    %v112 = vld [vmem:[#allocation5 + $0x30] sm:$0xff]
    %v113 = vld [vmem:[#allocation5 + $0x38] sm:$0xff]
    %v114 = vld [vmem:[#allocation5 + $0x40] sm:$0xff]
    %v115 = vld [vmem:[#allocation5 + $0x48] sm:$0xff]
    %v116 = vld [vmem:[#allocation5 + $0x50] sm:$0xff]
    %v117 = vld [vmem:[#allocation5 + $0x58] sm:$0xff]
    %v118 = vld [vmem:[#allocation5 + $0x60] sm:$0xff]
    %v119 = vld [vmem:[#allocation5 + $0x68] sm:$0xff]
    %v120 = vld [vmem:[#allocation5 + $0x70] sm:$0xff]
    %v121 = vld [vmem:[#allocation5 + $0x78] sm:$0xff]
    %v122 = vld [vmem:[#allocation5 + $0x80] sm:$0xff]
    %v123 = vld [vmem:[#allocation5 + $0x88] sm:$0xff]
    %v124 = vld [vmem:[#allocation5 + $0x90] sm:$0xff]
    %v125 = vld [vmem:[#allocation5 + $0x98] sm:$0xff]
    %v126 = vld [vmem:[#allocation5 + $0xa0] sm:$0xff]
    %v127 = vld [vmem:[#allocation5 + $0xa8] sm:$0xff]
    %v128 = vld [vmem:[#allocation5 + $0xb0] sm:$0xff]
    %v129 = vld [vmem:[#allocation5 + $0xb8] sm:$0xff]
    %v130 = vld [vmem:[#allocation5 + $0xc0] sm:$0xff]
    %v131 = vld [vmem:[#allocation5 + $0xc8] sm:$0xff]
    %v132 = vld [vmem:[#allocation5 + $0xd0] sm:$0xff]
    %v133 = vld [vmem:[#allocation5 + $0xd8] sm:$0xff]
    %v134 = vld [vmem:[#allocation5 + $0xe0] sm:$0xff]
    %v135 = vld [vmem:[#allocation5 + $0xe8] sm:$0xff]
    %v136 = vld [vmem:[#allocation5 + $0xf0] sm:$0xff]
    %v137 = vld [vmem:[#allocation5 + $0xf8] sm:$0xff]
    %v138 = vld [vmem:[#allocation5 + $0x100] sm:$0xff]
    %v139 = vld [vmem:[#allocation5 + $0x108] sm:$0xff]
    %v140 = vld [vmem:[#allocation5 + $0x110] sm:$0xff]
    %v141 = vld [vmem:[#allocation5 + $0x118] sm:$0xff]
    %v142 = vld [vmem:[#allocation5 + $0x120] sm:$0xff]
    %v143 = vld [vmem:[#allocation5 + $0x128] sm:$0xff]
    %v144 = vld [vmem:[#allocation5 + $0x130] sm:$0xff]
    %v145 = vld [vmem:[#allocation5 + $0x138] sm:$0xff]
    %v146 = vld [vmem:[#allocation5 + $0x140] sm:$0xff]
    %v147 = vld [vmem:[#allocation5 + $0x148] sm:$0xff]
    %v148 = vld [vmem:[#allocation5 + $0x150] sm:$0xff]
    %v149 = vld [vmem:[#allocation5 + $0x158] sm:$0xff]
    %v150 = vld [vmem:[#allocation5 + $0x160] sm:$0xff]
    %v151 = vld [vmem:[#allocation5 + $0x168] sm:$0xff]
    %v152 = vld [vmem:[#allocation5 + $0x170] sm:$0xff]
    %v153 = vld [vmem:[#allocation5 + $0x178] sm:$0xff]
    %v154 = vld [vmem:[#allocation5 + $0x180] sm:$0xff]
    %v155 = vld [vmem:[#allocation5 + $0x188] sm:$0xff]
    %v156 = vld [vmem:[#allocation5 + $0x190] sm:$0xff]
    %v157 = vld [vmem:[#allocation5 + $0x198] sm:$0xff]
    %v158 = vld [vmem:[#allocation5 + $0x1a0] sm:$0xff]
    %v159 = vld [vmem:[#allocation5 + $0x1a8] sm:$0xff]
    %v160 = vld [vmem:[#allocation5 + $0x1b0] sm:$0xff]
    %v161 = vld [vmem:[#allocation5 + $0x1b8] sm:$0xff]
    %v162 = vld [vmem:[#allocation5 + $0x1c0] sm:$0xff]
    %v163 = vld [vmem:[#allocation5 + $0x1c8] sm:$0xff]
    %v164 = vld [vmem:[#allocation5 + $0x1d0] sm:$0xff]
    %v165 = vld [vmem:[#allocation5 + $0x1d8] sm:$0xff]
    %v166 = vld [vmem:[#allocation5 + $0x1e0] sm:$0xff]
    %v167 = vld [vmem:[#allocation5 + $0x1e8] sm:$0xff]
    %v168 = vld [vmem:[#allocation5 + $0x1f0] sm:$0xff]
    %v169 = vld [vmem:[#allocation5 + $0x1f8] sm:$0xff]
    %v170 = vld [vmem:[#allocation5 + $0x200] sm:$0xff]
    %v171 = vld [vmem:[#allocation5 + $0x208] sm:$0xff]
    %v172 = vld [vmem:[#allocation5 + $0x210] sm:$0xff]
    %v173 = vld [vmem:[#allocation5 + $0x218] sm:$0xff]
    %v174 = vld [vmem:[#allocation5 + $0x220] sm:$0xff]
    %v175 = vld [vmem:[#allocation5 + $0x228] sm:$0xff]
    %v176 = vld [vmem:[#allocation5 + $0x230] sm:$0xff]
    %v177 = vld [vmem:[#allocation5 + $0x238] sm:$0xff]
    %v178 = vld [vmem:[#allocation5 + $0x240] sm:$0xff]
    %v179 = vld [vmem:[#allocation5 + $0x248] sm:$0xff]
    %v180 = vld [vmem:[#allocation5 + $0x250] sm:$0xff]
    %v181 = vld [vmem:[#allocation5 + $0x258] sm:$0xff]
    %v182 = vld [vmem:[#allocation5 + $0x260] sm:$0xff]
    %v183 = vld [vmem:[#allocation5 + $0x268] sm:$0xff]
    %v184 = vld [vmem:[#allocation5 + $0x270] sm:$0xff]
    %v185 = vld [vmem:[#allocation5 + $0x278] sm:$0xff]
    %v186 = vld [vmem:[#allocation5 + $0x280] sm:$0xff]
    %v187 = vld [vmem:[#allocation5 + $0x288] sm:$0xff]
    %v188 = vld [vmem:[#allocation5 + $0x290] sm:$0xff]
    %v189 = vld [vmem:[#allocation5 + $0x298] sm:$0xff]
    %v190 = vld [vmem:[#allocation5 + $0x2a0] sm:$0xff]
    %v191 = vld [vmem:[#allocation5 + $0x2a8] sm:$0xff]
    %v192 = vld [vmem:[#allocation5 + $0x2b0] sm:$0xff]
    %v193 = vld [vmem:[#allocation5 + $0x2b8] sm:$0xff]
    %v194 = vld [vmem:[#allocation5 + $0x2c0] sm:$0xff]
    %v195 = vld [vmem:[#allocation5 + $0x2c8] sm:$0xff]
    %v196 = vld [vmem:[#allocation5 + $0x2d0] sm:$0xff]
    %v197 = vld [vmem:[#allocation5 + $0x2d8] sm:$0xff]
    %v198 = vld [vmem:[#allocation5 + $0x2e0] sm:$0xff]
    %v199 = vld [vmem:[#allocation5 + $0x2e8] sm:$0xff]
    %v200 = vld [vmem:[#allocation5 + $0x2f0] sm:$0xff]
    %v201 = vld [vmem:[#allocation5 + $0x2f8] sm:$0xff]
    %v202 = vld [vmem:[#allocation5 + $0x300] sm:$0xff]
    %v203 = vld [vmem:[#allocation5 + $0x308] sm:$0xff]
    %v204 = vld [vmem:[#allocation5 + $0x310] sm:$0xff]
    %v205 = vld [vmem:[#allocation5 + $0x318] sm:$0xff]
    %v206 = vld [vmem:[#allocation5 + $0x320] sm:$0xff]
    %v207 = vld [vmem:[#allocation5 + $0x328] sm:$0xff]
    %v208 = vld [vmem:[#allocation5 + $0x330] sm:$0xff]
    %v209 = vld [vmem:[#allocation5 + $0x338] sm:$0xff]
    %v210 = vld [vmem:[#allocation5 + $0x340] sm:$0xff]
    %v211 = vld [vmem:[#allocation5 + $0x348] sm:$0xff]
    %v212 = vld [vmem:[#allocation5 + $0x350] sm:$0xff]
    %v213 = vld [vmem:[#allocation5 + $0x358] sm:$0xff]
    %v214 = vld [vmem:[#allocation5 + $0x360] sm:$0xff]
    %v215 = vld [vmem:[#allocation5 + $0x368] sm:$0xff]
    %v216 = vld [vmem:[#allocation5 + $0x370] sm:$0xff]
    %v217 = vld [vmem:[#allocation5 + $0x378] sm:$0xff]
    %v218 = vld [vmem:[#allocation5 + $0x380] sm:$0xff]
    %v219 = vld [vmem:[#allocation5 + $0x388] sm:$0xff]
    %v220 = vld [vmem:[#allocation5 + $0x390] sm:$0xff]
    %v221 = vld [vmem:[#allocation5 + $0x398] sm:$0xff]
    %v222 = vld [vmem:[#allocation5 + $0x3a0] sm:$0xff]
    %v223 = vld [vmem:[#allocation5 + $0x3a8] sm:$0xff]
    %v224 = vld [vmem:[#allocation5 + $0x3b0] sm:$0xff]
    %v225 = vld [vmem:[#allocation5 + $0x3b8] sm:$0xff]
    %v226 = vld [vmem:[#allocation5 + $0x3c0] sm:$0xff]
    %v227 = vld [vmem:[#allocation5 + $0x3c8] sm:$0xff]
    %v228 = vld [vmem:[#allocation5 + $0x3d0] sm:$0xff]
    %v229 = vld [vmem:[#allocation5 + $0x3d8] sm:$0xff]
    %v230 = vld [vmem:[#allocation5 + $0x3e0] sm:$0xff]
    %v231 = vld [vmem:[#allocation5 + $0x3e8] sm:$0xff]
    %v232 = vld [vmem:[#allocation5 + $0x3f0] sm:$0xff]
    %v233 = vld [vmem:[#allocation5 + $0x3f8] sm:$0xff]
    %v234 = vld [vmem:[#allocation5 + $0x400] sm:$0xff]
    %v235 = vld [vmem:[#allocation5 + $0x408] sm:$0xff]
    %v236 = vld [vmem:[#allocation5 + $0x410] sm:$0xff]
    %v237 = vld [vmem:[#allocation5 + $0x418] sm:$0xff]
    %v238 = vld [vmem:[#allocation5 + $0x420] sm:$0xff]
    %v239 = vld [vmem:[#allocation5 + $0x428] sm:$0xff]
    %v240 = vld [vmem:[#allocation5 + $0x430] sm:$0xff]
    %v241 = vld [vmem:[#allocation5 + $0x438] sm:$0xff]
    %v242 = vld [vmem:[#allocation5 + $0x440] sm:$0xff]
    %v243 = vld [vmem:[#allocation5 + $0x448] sm:$0xff]
    %v244 = vld [vmem:[#allocation5 + $0x450] sm:$0xff]
    %v245 = vld [vmem:[#allocation5 + $0x458] sm:$0xff]
    %v246 = vld [vmem:[#allocation5 + $0x460] sm:$0xff]
    %v247 = vld [vmem:[#allocation5 + $0x468] sm:$0xff]
    %v248 = vld [vmem:[#allocation5 + $0x470] sm:$0xff]
    %v249 = vld [vmem:[#allocation5 + $0x478] sm:$0xff]
    %v250 = vld [vmem:[#allocation5 + $0x480] sm:$0xff]
    %v251 = vld [vmem:[#allocation5 + $0x488] sm:$0xff]
    %v252 = vld [vmem:[#allocation5 + $0x490] sm:$0xff]
    %v253 = vld [vmem:[#allocation5 + $0x498] sm:$0xff]
    %v254 = vld [vmem:[#allocation5 + $0x4a0] sm:$0xff]
    %v255 = vld [vmem:[#allocation5 + $0x4a8] sm:$0xff]
    %v256 = vld [vmem:[#allocation5 + $0x4b0] sm:$0xff]
    %v257 = vld [vmem:[#allocation5 + $0x4b8] sm:$0xff]
    %v258 = vld [vmem:[#allocation5 + $0x4c0] sm:$0xff]
    %v259 = vld [vmem:[#allocation5 + $0x4c8] sm:$0xff]
    %v260 = vld [vmem:[#allocation5 + $0x4d0] sm:$0xff]
    %v261 = vld [vmem:[#allocation5 + $0x4d8] sm:$0xff]
    %v262 = vld [vmem:[#allocation5 + $0x4e0] sm:$0xff]
    %v263 = vld [vmem:[#allocation5 + $0x4e8] sm:$0xff]
    %v264 = vld [vmem:[#allocation5 + $0x4f0] sm:$0xff]
    %v265 = vld [vmem:[#allocation5 + $0x4f8] sm:$0xff]
    %v282 = vunpack.c.l.b16 %v90
    %v283 = vunpack.c.h.b16 %v90
    %v284 = vunpack.c.l.b16 %v91
    %v285 = vunpack.c.h.b16 %v91
    %v286 = vunpack.c.l.b16 %v92
    %v287 = vunpack.c.h.b16 %v92
    %v288 = vunpack.c.l.b16 %v93
    %v289 = vunpack.c.h.b16 %v93
    %v290 = vunpack.c.l.b16 %v94
    %v291 = vunpack.c.h.b16 %v94
    %v292 = vunpack.c.l.b16 %v95
    %v293 = vunpack.c.h.b16 %v95
    %v294 = vunpack.c.l.b16 %v96
    %v295 = vunpack.c.h.b16 %v96
    %v296 = vunpack.c.l.b16 %v97
    %v297 = vunpack.c.h.b16 %v97
    %v298 = vunpack.c.l.b16 %v98
    %v299 = vunpack.c.h.b16 %v98
    %v300 = vunpack.c.l.b16 %v99
    %v301 = vunpack.c.h.b16 %v99
    %v302 = vunpack.c.l.b16 %v100
    %v303 = vunpack.c.h.b16 %v100
    %v304 = vunpack.c.l.b16 %v101
    %v305 = vunpack.c.h.b16 %v101
    %v306 = vunpack.c.l.b16 %v102
    %v307 = vunpack.c.h.b16 %v102
    %v308 = vunpack.c.l.b16 %v103
    %v309 = vunpack.c.h.b16 %v103
    %v310 = vunpack.c.l.b16 %v104
    %v311 = vunpack.c.h.b16 %v104
    %v312 = vunpack.c.l.b16 %v105
    %v313 = vunpack.c.h.b16 %v105
    %v314 = vpack.c.b16 %v284, %v282
    %v315 = vpack.c.b16 %v285, %v283
    %v316 = vpack.c.b16 %v288, %v286
    %v317 = vpack.c.b16 %v289, %v287
    %v318 = vpack.c.b16 %v292, %v290
    %v319 = vpack.c.b16 %v293, %v291
    %v320 = vpack.c.b16 %v296, %v294
    %v321 = vpack.c.b16 %v297, %v295
    %v322 = vpack.c.b16 %v300, %v298
    %v323 = vpack.c.b16 %v301, %v299
    %v324 = vpack.c.b16 %v304, %v302
    %v325 = vpack.c.b16 %v305, %v303
    %v326 = vpack.c.b16 %v308, %v306
    %v327 = vpack.c.b16 %v309, %v307
    %v328 = vpack.c.b16 %v312, %v310
    %v329 = vpack.c.b16 %v313, %v311
    %v506 = vunpack.c.l.b16 %v106
    %v507 = vunpack.c.h.b16 %v106
    %v508 = vunpack.c.l.b16 %v107
    %v509 = vunpack.c.h.b16 %v107
    %v510 = vunpack.c.l.b16 %v108
    %v511 = vunpack.c.h.b16 %v108
    %v512 = vunpack.c.l.b16 %v109
    %v513 = vunpack.c.h.b16 %v109
    %v514 = vunpack.c.l.b16 %v110
    %v515 = vunpack.c.h.b16 %v110
    %v516 = vunpack.c.l.b16 %v111
    %v517 = vunpack.c.h.b16 %v111
    %v518 = vunpack.c.l.b16 %v112
    %v519 = vunpack.c.h.b16 %v112
    %v520 = vunpack.c.l.b16 %v113
    %v521 = vunpack.c.h.b16 %v113
    %v522 = vunpack.c.l.b16 %v114
    %v523 = vunpack.c.h.b16 %v114
    %v524 = vunpack.c.l.b16 %v115
    %v525 = vunpack.c.h.b16 %v115
    %v526 = vunpack.c.l.b16 %v116
    %v527 = vunpack.c.h.b16 %v116
    %v528 = vunpack.c.l.b16 %v117
    %v529 = vunpack.c.h.b16 %v117
    %v530 = vunpack.c.l.b16 %v118
    %v531 = vunpack.c.h.b16 %v118
    %v532 = vunpack.c.l.b16 %v119
    %v533 = vunpack.c.h.b16 %v119
    %v534 = vunpack.c.l.b16 %v120
    %v535 = vunpack.c.h.b16 %v120
    %v536 = vunpack.c.l.b16 %v121
    %v537 = vunpack.c.h.b16 %v121
    %v538 = vunpack.c.l.b16 %v122
    %v539 = vunpack.c.h.b16 %v122
    %v540 = vunpack.c.l.b16 %v123
    %v541 = vunpack.c.h.b16 %v123
    %v542 = vunpack.c.l.b16 %v124
    %v543 = vunpack.c.h.b16 %v124
    %v544 = vunpack.c.l.b16 %v125
    %v545 = vunpack.c.h.b16 %v125
    %v546 = vunpack.c.l.b16 %v126
    %v547 = vunpack.c.h.b16 %v126
    %v548 = vunpack.c.l.b16 %v127
    %v549 = vunpack.c.h.b16 %v127
    %v550 = vunpack.c.l.b16 %v128
    %v551 = vunpack.c.h.b16 %v128
    %v552 = vunpack.c.l.b16 %v129
    %v553 = vunpack.c.h.b16 %v129
    %v554 = vunpack.c.l.b16 %v130
    %v555 = vunpack.c.h.b16 %v130
    %v556 = vunpack.c.l.b16 %v131
    %v557 = vunpack.c.h.b16 %v131
    %v558 = vunpack.c.l.b16 %v132
    %v559 = vunpack.c.h.b16 %v132
    %v560 = vunpack.c.l.b16 %v133
    %v561 = vunpack.c.h.b16 %v133
    %v562 = vunpack.c.l.b16 %v134
    %v563 = vunpack.c.h.b16 %v134
    %v564 = vunpack.c.l.b16 %v135
    %v565 = vunpack.c.h.b16 %v135
    %v566 = vunpack.c.l.b16 %v136
    %v567 = vunpack.c.h.b16 %v136
    %v568 = vunpack.c.l.b16 %v137
    %v569 = vunpack.c.h.b16 %v137
    %v570 = vunpack.c.l.b16 %v138
    %v571 = vunpack.c.h.b16 %v138
    %v572 = vunpack.c.l.b16 %v139
    %v573 = vunpack.c.h.b16 %v139
    %v574 = vunpack.c.l.b16 %v140
    %v575 = vunpack.c.h.b16 %v140
    %v576 = vunpack.c.l.b16 %v141
    %v577 = vunpack.c.h.b16 %v141
    %v578 = vunpack.c.l.b16 %v142
    %v579 = vunpack.c.h.b16 %v142
    %v580 = vunpack.c.l.b16 %v143
    %v581 = vunpack.c.h.b16 %v143
    %v582 = vunpack.c.l.b16 %v144
    %v583 = vunpack.c.h.b16 %v144
    %v584 = vunpack.c.l.b16 %v145
    %v585 = vunpack.c.h.b16 %v145
    %v586 = vunpack.c.l.b16 %v146
    %v587 = vunpack.c.h.b16 %v146
    %v588 = vunpack.c.l.b16 %v147
    %v589 = vunpack.c.h.b16 %v147
    %v590 = vunpack.c.l.b16 %v148
    %v591 = vunpack.c.h.b16 %v148
    %v592 = vunpack.c.l.b16 %v149
    %v593 = vunpack.c.h.b16 %v149
    %v594 = vunpack.c.l.b16 %v150
    %v595 = vunpack.c.h.b16 %v150
    %v596 = vunpack.c.l.b16 %v151
    %v597 = vunpack.c.h.b16 %v151
    %v598 = vunpack.c.l.b16 %v152
    %v599 = vunpack.c.h.b16 %v152
    %v600 = vunpack.c.l.b16 %v153
    %v601 = vunpack.c.h.b16 %v153
    %v602 = vunpack.c.l.b16 %v154
    %v603 = vunpack.c.h.b16 %v154
    %v604 = vunpack.c.l.b16 %v155
    %v605 = vunpack.c.h.b16 %v155
    %v606 = vunpack.c.l.b16 %v156
    %v607 = vunpack.c.h.b16 %v156
    %v608 = vunpack.c.l.b16 %v157
    %v609 = vunpack.c.h.b16 %v157
    %v610 = vunpack.c.l.b16 %v158
    %v611 = vunpack.c.h.b16 %v158
    %v612 = vunpack.c.l.b16 %v159
    %v613 = vunpack.c.h.b16 %v159
    %v614 = vunpack.c.l.b16 %v160
    %v615 = vunpack.c.h.b16 %v160
    %v616 = vunpack.c.l.b16 %v161
    %v617 = vunpack.c.h.b16 %v161
    %v618 = vunpack.c.l.b16 %v162
    %v619 = vunpack.c.h.b16 %v162
    %v620 = vunpack.c.l.b16 %v163
    %v621 = vunpack.c.h.b16 %v163
    %v622 = vunpack.c.l.b16 %v164
    %v623 = vunpack.c.h.b16 %v164
    %v624 = vunpack.c.l.b16 %v165
    %v625 = vunpack.c.h.b16 %v165
    %v626 = vunpack.c.l.b16 %v166
    %v627 = vunpack.c.h.b16 %v166
    %v628 = vunpack.c.l.b16 %v167
    %v629 = vunpack.c.h.b16 %v167
    %v630 = vunpack.c.l.b16 %v168
    %v631 = vunpack.c.h.b16 %v168
    %v632 = vunpack.c.l.b16 %v169
    %v633 = vunpack.c.h.b16 %v169
    %v634 = vunpack.c.l.b16 %v170
    %v635 = vunpack.c.h.b16 %v170
    %v636 = vunpack.c.l.b16 %v171
    %v637 = vunpack.c.h.b16 %v171
    %v638 = vunpack.c.l.b16 %v172
    %v639 = vunpack.c.h.b16 %v172
    %v640 = vunpack.c.l.b16 %v173
    %v641 = vunpack.c.h.b16 %v173
    %v642 = vunpack.c.l.b16 %v174
    %v643 = vunpack.c.h.b16 %v174
    %v644 = vunpack.c.l.b16 %v175
    %v645 = vunpack.c.h.b16 %v175
    %v646 = vunpack.c.l.b16 %v176
    %v647 = vunpack.c.h.b16 %v176
    %v648 = vunpack.c.l.b16 %v177
    %v649 = vunpack.c.h.b16 %v177
    %v650 = vunpack.c.l.b16 %v178
    %v651 = vunpack.c.h.b16 %v178
    %v652 = vunpack.c.l.b16 %v179
    %v653 = vunpack.c.h.b16 %v179
    %v654 = vunpack.c.l.b16 %v180
    %v655 = vunpack.c.h.b16 %v180
    %v656 = vunpack.c.l.b16 %v181
    %v657 = vunpack.c.h.b16 %v181
    %v658 = vunpack.c.l.b16 %v182
    %v659 = vunpack.c.h.b16 %v182
    %v660 = vunpack.c.l.b16 %v183
    %v661 = vunpack.c.h.b16 %v183
    %v662 = vunpack.c.l.b16 %v184
    %v663 = vunpack.c.h.b16 %v184
    %v664 = vunpack.c.l.b16 %v185
    %v665 = vunpack.c.h.b16 %v185
    %v666 = vunpack.c.l.b16 %v186
    %v667 = vunpack.c.h.b16 %v186
    %v668 = vunpack.c.l.b16 %v187
    %v669 = vunpack.c.h.b16 %v187
    %v670 = vunpack.c.l.b16 %v188
    %v671 = vunpack.c.h.b16 %v188
    %v672 = vunpack.c.l.b16 %v189
    %v673 = vunpack.c.h.b16 %v189
    %v674 = vunpack.c.l.b16 %v190
    %v675 = vunpack.c.h.b16 %v190
    %v676 = vunpack.c.l.b16 %v191
    %v677 = vunpack.c.h.b16 %v191
    %v678 = vunpack.c.l.b16 %v192
    %v679 = vunpack.c.h.b16 %v192
    %v680 = vunpack.c.l.b16 %v193
    %v681 = vunpack.c.h.b16 %v193
    %v682 = vunpack.c.l.b16 %v194
    %v683 = vunpack.c.h.b16 %v194
    %v684 = vunpack.c.l.b16 %v195
    %v685 = vunpack.c.h.b16 %v195
    %v686 = vunpack.c.l.b16 %v196
    %v687 = vunpack.c.h.b16 %v196
    %v688 = vunpack.c.l.b16 %v197
    %v689 = vunpack.c.h.b16 %v197
    %v690 = vunpack.c.l.b16 %v198
    %v691 = vunpack.c.h.b16 %v198
    %v692 = vunpack.c.l.b16 %v199
    %v693 = vunpack.c.h.b16 %v199
    %v694 = vunpack.c.l.b16 %v200
    %v695 = vunpack.c.h.b16 %v200
    %v696 = vunpack.c.l.b16 %v201
    %v697 = vunpack.c.h.b16 %v201
    %v698 = vunpack.c.l.b16 %v202
    %v699 = vunpack.c.h.b16 %v202
    %v700 = vunpack.c.l.b16 %v203
    %v701 = vunpack.c.h.b16 %v203
    %v702 = vunpack.c.l.b16 %v204
    %v703 = vunpack.c.h.b16 %v204
    %v704 = vunpack.c.l.b16 %v205
    %v705 = vunpack.c.h.b16 %v205
    %v706 = vunpack.c.l.b16 %v206
    %v707 = vunpack.c.h.b16 %v206
    %v708 = vunpack.c.l.b16 %v207
    %v709 = vunpack.c.h.b16 %v207
    %v710 = vunpack.c.l.b16 %v208
    %v711 = vunpack.c.h.b16 %v208
    %v712 = vunpack.c.l.b16 %v209
    %v713 = vunpack.c.h.b16 %v209
    %v714 = vunpack.c.l.b16 %v210
    %v715 = vunpack.c.h.b16 %v210
    %v716 = vunpack.c.l.b16 %v211
    %v717 = vunpack.c.h.b16 %v211
    %v718 = vunpack.c.l.b16 %v212
    %v719 = vunpack.c.h.b16 %v212
    %v720 = vunpack.c.l.b16 %v213
    %v721 = vunpack.c.h.b16 %v213
    %v722 = vunpack.c.l.b16 %v214
    %v723 = vunpack.c.h.b16 %v214
    %v724 = vunpack.c.l.b16 %v215
    %v725 = vunpack.c.h.b16 %v215
    %v726 = vunpack.c.l.b16 %v216
    %v727 = vunpack.c.h.b16 %v216
    %v728 = vunpack.c.l.b16 %v217
    %v729 = vunpack.c.h.b16 %v217
    %v730 = vunpack.c.l.b16 %v218
    %v731 = vunpack.c.h.b16 %v218
    %v732 = vunpack.c.l.b16 %v219
    %v733 = vunpack.c.h.b16 %v219
    %v734 = vunpack.c.l.b16 %v220
    %v735 = vunpack.c.h.b16 %v220
    %v736 = vunpack.c.l.b16 %v221
    %v737 = vunpack.c.h.b16 %v221
    %v738 = vunpack.c.l.b16 %v222
    %v739 = vunpack.c.h.b16 %v222
    %v740 = vunpack.c.l.b16 %v223
    %v741 = vunpack.c.h.b16 %v223
    %v742 = vunpack.c.l.b16 %v224
    %v743 = vunpack.c.h.b16 %v224
    %v744 = vunpack.c.l.b16 %v225
    %v745 = vunpack.c.h.b16 %v225
    %v746 = vunpack.c.l.b16 %v226
    %v747 = vunpack.c.h.b16 %v226
    %v748 = vunpack.c.l.b16 %v227
    %v749 = vunpack.c.h.b16 %v227
    %v750 = vunpack.c.l.b16 %v228
    %v751 = vunpack.c.h.b16 %v228
    %v752 = vunpack.c.l.b16 %v229
    %v753 = vunpack.c.h.b16 %v229
    %v754 = vunpack.c.l.b16 %v230
    %v755 = vunpack.c.h.b16 %v230
    %v756 = vunpack.c.l.b16 %v231
    %v757 = vunpack.c.h.b16 %v231
    %v758 = vunpack.c.l.b16 %v232
    %v759 = vunpack.c.h.b16 %v232
    %v760 = vunpack.c.l.b16 %v233
    %v761 = vunpack.c.h.b16 %v233
    %v762 = vunpack.c.l.b16 %v234
    %v763 = vunpack.c.h.b16 %v234
    %v764 = vunpack.c.l.b16 %v235
    %v765 = vunpack.c.h.b16 %v235
    %v766 = vunpack.c.l.b16 %v236
    %v767 = vunpack.c.h.b16 %v236
    %v768 = vunpack.c.l.b16 %v237
    %v769 = vunpack.c.h.b16 %v237
    %v770 = vunpack.c.l.b16 %v238
    %v771 = vunpack.c.h.b16 %v238
    %v772 = vunpack.c.l.b16 %v239
    %v773 = vunpack.c.h.b16 %v239
    %v774 = vunpack.c.l.b16 %v240
    %v775 = vunpack.c.h.b16 %v240
    %v776 = vunpack.c.l.b16 %v241
    %v777 = vunpack.c.h.b16 %v241
    %v778 = vunpack.c.l.b16 %v242
    %v779 = vunpack.c.h.b16 %v242
    %v780 = vunpack.c.l.b16 %v243
    %v781 = vunpack.c.h.b16 %v243
    %v782 = vunpack.c.l.b16 %v244
    %v783 = vunpack.c.h.b16 %v244
    %v784 = vunpack.c.l.b16 %v245
    %v785 = vunpack.c.h.b16 %v245
    %v786 = vunpack.c.l.b16 %v246
    %v787 = vunpack.c.h.b16 %v246
    %v788 = vunpack.c.l.b16 %v247
    %v789 = vunpack.c.h.b16 %v247
    %v790 = vunpack.c.l.b16 %v248
    %v791 = vunpack.c.h.b16 %v248
    %v792 = vunpack.c.l.b16 %v249
    %v793 = vunpack.c.h.b16 %v249
    %v794 = vunpack.c.l.b16 %v250
    %v795 = vunpack.c.h.b16 %v250
    %v796 = vunpack.c.l.b16 %v251
    %v797 = vunpack.c.h.b16 %v251
    %v798 = vunpack.c.l.b16 %v252
    %v799 = vunpack.c.h.b16 %v252
    %v800 = vunpack.c.l.b16 %v253
    %v801 = vunpack.c.h.b16 %v253
    %v802 = vunpack.c.l.b16 %v254
    %v803 = vunpack.c.h.b16 %v254
    %v804 = vunpack.c.l.b16 %v255
    %v805 = vunpack.c.h.b16 %v255
    %v806 = vunpack.c.l.b16 %v256
    %v807 = vunpack.c.h.b16 %v256
    %v808 = vunpack.c.l.b16 %v257
    %v809 = vunpack.c.h.b16 %v257
    %v810 = vunpack.c.l.b16 %v258
    %v811 = vunpack.c.h.b16 %v258
    %v812 = vunpack.c.l.b16 %v259
    %v813 = vunpack.c.h.b16 %v259
    %v814 = vunpack.c.l.b16 %v260
    %v815 = vunpack.c.h.b16 %v260
    %v816 = vunpack.c.l.b16 %v261
    %v817 = vunpack.c.h.b16 %v261
    %v818 = vunpack.c.l.b16 %v262
    %v819 = vunpack.c.h.b16 %v262
    %v820 = vunpack.c.l.b16 %v263
    %v821 = vunpack.c.h.b16 %v263
    %v822 = vunpack.c.l.b16 %v264
    %v823 = vunpack.c.h.b16 %v264
    %v824 = vunpack.c.l.b16 %v265
    %v825 = vunpack.c.h.b16 %v265
    %v826 = vpack.c.b16 %v516, %v506
    %v827 = vpack.c.b16 %v517, %v507
    %v828 = vpack.c.b16 %v518, %v508
    %v829 = vpack.c.b16 %v519, %v509
    %v830 = vpack.c.b16 %v520, %v510
    %v831 = vpack.c.b16 %v521, %v511
    %v832 = vpack.c.b16 %v522, %v512
    %v833 = vpack.c.b16 %v523, %v513
    %v834 = vpack.c.b16 %v524, %v514
    %v835 = vpack.c.b16 %v525, %v515
    %v836 = vpack.c.b16 %v536, %v526
    %v837 = vpack.c.b16 %v537, %v527
    %v838 = vpack.c.b16 %v538, %v528
    %v839 = vpack.c.b16 %v539, %v529
    %v840 = vpack.c.b16 %v540, %v530
    %v841 = vpack.c.b16 %v541, %v531
    %v842 = vpack.c.b16 %v542, %v532
    %v843 = vpack.c.b16 %v543, %v533
    %v844 = vpack.c.b16 %v544, %v534
    %v845 = vpack.c.b16 %v545, %v535
    %v846 = vpack.c.b16 %v556, %v546
    %v847 = vpack.c.b16 %v557, %v547
    %v848 = vpack.c.b16 %v558, %v548
    %v849 = vpack.c.b16 %v559, %v549
    %v850 = vpack.c.b16 %v560, %v550
    %v851 = vpack.c.b16 %v561, %v551
    %v852 = vpack.c.b16 %v562, %v552
    %v853 = vpack.c.b16 %v563, %v553
    %v854 = vpack.c.b16 %v564, %v554
    %v855 = vpack.c.b16 %v565, %v555
    %v856 = vpack.c.b16 %v576, %v566
    %v857 = vpack.c.b16 %v577, %v567
    %v858 = vpack.c.b16 %v578, %v568
    %v859 = vpack.c.b16 %v579, %v569
    %v860 = vpack.c.b16 %v580, %v570
    %v861 = vpack.c.b16 %v581, %v571
    %v862 = vpack.c.b16 %v582, %v572
    %v863 = vpack.c.b16 %v583, %v573
    %v864 = vpack.c.b16 %v584, %v574
    %v865 = vpack.c.b16 %v585, %v575
    %v866 = vpack.c.b16 %v596, %v586
    %v867 = vpack.c.b16 %v597, %v587
    %v868 = vpack.c.b16 %v598, %v588
    %v869 = vpack.c.b16 %v599, %v589
    %v870 = vpack.c.b16 %v600, %v590
    %v871 = vpack.c.b16 %v601, %v591
    %v872 = vpack.c.b16 %v602, %v592
    %v873 = vpack.c.b16 %v603, %v593
    %v874 = vpack.c.b16 %v604, %v594
    %v875 = vpack.c.b16 %v605, %v595
    %v876 = vpack.c.b16 %v616, %v606
    %v877 = vpack.c.b16 %v617, %v607
    %v878 = vpack.c.b16 %v618, %v608
    %v879 = vpack.c.b16 %v619, %v609
    %v880 = vpack.c.b16 %v620, %v610
    %v881 = vpack.c.b16 %v621, %v611
    %v882 = vpack.c.b16 %v622, %v612
    %v883 = vpack.c.b16 %v623, %v613
    %v884 = vpack.c.b16 %v624, %v614
    %v885 = vpack.c.b16 %v625, %v615
    %v886 = vpack.c.b16 %v636, %v626
    %v887 = vpack.c.b16 %v637, %v627
    %v888 = vpack.c.b16 %v638, %v628
    %v889 = vpack.c.b16 %v639, %v629
    %v890 = vpack.c.b16 %v640, %v630
    %v891 = vpack.c.b16 %v641, %v631
    %v892 = vpack.c.b16 %v642, %v632
    %v893 = vpack.c.b16 %v643, %v633
    %v894 = vpack.c.b16 %v644, %v634
    %v895 = vpack.c.b16 %v645, %v635
    %v896 = vpack.c.b16 %v656, %v646
    %v897 = vpack.c.b16 %v657, %v647
    %v898 = vpack.c.b16 %v658, %v648
    %v899 = vpack.c.b16 %v659, %v649
    %v900 = vpack.c.b16 %v660, %v650
    %v901 = vpack.c.b16 %v661, %v651
    %v902 = vpack.c.b16 %v662, %v652
    %v903 = vpack.c.b16 %v663, %v653
    %v904 = vpack.c.b16 %v664, %v654
    %v905 = vpack.c.b16 %v665, %v655
    %v906 = vpack.c.b16 %v676, %v666
    %v907 = vpack.c.b16 %v677, %v667
    %v908 = vpack.c.b16 %v678, %v668
    %v909 = vpack.c.b16 %v679, %v669
    %v910 = vpack.c.b16 %v680, %v670
    %v911 = vpack.c.b16 %v681, %v671
    %v912 = vpack.c.b16 %v682, %v672
    %v913 = vpack.c.b16 %v683, %v673
    %v914 = vpack.c.b16 %v684, %v674
    %v915 = vpack.c.b16 %v685, %v675
    %v916 = vpack.c.b16 %v696, %v686
    %v917 = vpack.c.b16 %v697, %v687
    %v918 = vpack.c.b16 %v698, %v688
    %v919 = vpack.c.b16 %v699, %v689
    %v920 = vpack.c.b16 %v700, %v690
    %v921 = vpack.c.b16 %v701, %v691
    %v922 = vpack.c.b16 %v702, %v692
    %v923 = vpack.c.b16 %v703, %v693
    %v924 = vpack.c.b16 %v704, %v694
    %v925 = vpack.c.b16 %v705, %v695
    %v926 = vpack.c.b16 %v716, %v706
    %v927 = vpack.c.b16 %v717, %v707
    %v928 = vpack.c.b16 %v718, %v708
    %v929 = vpack.c.b16 %v719, %v709
    %v930 = vpack.c.b16 %v720, %v710
    %v931 = vpack.c.b16 %v721, %v711
    %v932 = vpack.c.b16 %v722, %v712
    %v933 = vpack.c.b16 %v723, %v713
    %v934 = vpack.c.b16 %v724, %v714
    %v935 = vpack.c.b16 %v725, %v715
    %v936 = vpack.c.b16 %v736, %v726
    %v937 = vpack.c.b16 %v737, %v727
    %v938 = vpack.c.b16 %v738, %v728
    %v939 = vpack.c.b16 %v739, %v729
    %v940 = vpack.c.b16 %v740, %v730
    %v941 = vpack.c.b16 %v741, %v731
    %v942 = vpack.c.b16 %v742, %v732
    %v943 = vpack.c.b16 %v743, %v733
    %v944 = vpack.c.b16 %v744, %v734
    %v945 = vpack.c.b16 %v745, %v735
    %v946 = vpack.c.b16 %v756, %v746
    %v947 = vpack.c.b16 %v757, %v747
    %v948 = vpack.c.b16 %v758, %v748
    %v949 = vpack.c.b16 %v759, %v749
    %v950 = vpack.c.b16 %v760, %v750
    %v951 = vpack.c.b16 %v761, %v751
    %v952 = vpack.c.b16 %v762, %v752
    %v953 = vpack.c.b16 %v763, %v753
    %v954 = vpack.c.b16 %v764, %v754
    %v955 = vpack.c.b16 %v765, %v755
    %v956 = vpack.c.b16 %v776, %v766
    %v957 = vpack.c.b16 %v777, %v767
    %v958 = vpack.c.b16 %v778, %v768
    %v959 = vpack.c.b16 %v779, %v769
    %v960 = vpack.c.b16 %v780, %v770
    %v961 = vpack.c.b16 %v781, %v771
    %v962 = vpack.c.b16 %v782, %v772
    %v963 = vpack.c.b16 %v783, %v773
    %v964 = vpack.c.b16 %v784, %v774
    %v965 = vpack.c.b16 %v785, %v775
    %v966 = vpack.c.b16 %v796, %v786
    %v967 = vpack.c.b16 %v797, %v787
    %v968 = vpack.c.b16 %v798, %v788
    %v969 = vpack.c.b16 %v799, %v789
    %v970 = vpack.c.b16 %v800, %v790
    %v971 = vpack.c.b16 %v801, %v791
    %v972 = vpack.c.b16 %v802, %v792
    %v973 = vpack.c.b16 %v803, %v793
    %v974 = vpack.c.b16 %v804, %v794
    %v975 = vpack.c.b16 %v805, %v795
    %v976 = vpack.c.b16 %v816, %v806
    %v977 = vpack.c.b16 %v817, %v807
    %v978 = vpack.c.b16 %v818, %v808
    %v979 = vpack.c.b16 %v819, %v809
    %v980 = vpack.c.b16 %v820, %v810
    %v981 = vpack.c.b16 %v821, %v811
    %v982 = vpack.c.b16 %v822, %v812
    %v983 = vpack.c.b16 %v823, %v813
    %v984 = vpack.c.b16 %v824, %v814
    %v985 = vpack.c.b16 %v825, %v815
    %1146 = vmatprep.subr.bf16.mxu0 %v897
    %1147 = vmatpush1.bf16.msra.mxu0 %v896
    %1148 = vmatprep.subr.bf16.mxu0 %v887
    %1149 = vmatpush1.bf16.msra.mxu0 %v886
    %1150 = vmatprep.subr.bf16.mxu0 %v877
    %1151 = vmatpush1.bf16.msra.mxu0 %v876
    %1152 = vmatprep.subr.bf16.mxu0 %v867
    %1153 = vmatpush1.bf16.msra.mxu0 %v866
    %1154 = vmatprep.subr.bf16.mxu0 %v857
    %1155 = vmatpush1.bf16.msra.mxu0 %v856
    %1156 = vmatprep.subr.bf16.mxu0 %v847
    %1157 = vmatpush1.bf16.msra.mxu0 %v846
    %1158 = vmatprep.subr.bf16.mxu0 %v837
    %1159 = vmatpush1.bf16.msra.mxu0 %v836
    %1160 = vmatprep.subr.bf16.mxu0 %v827
    %1161 = vmatpush1.bf16.msra.mxu0 %v826
    %1162 = vmatprep.subr.bf16.mxu0 %v977
    %1163 = vmatpush2.bf16.msra.mxu0 %v976
    %1164 = vmatprep.subr.bf16.mxu0 %v967
    %1165 = vmatpush2.bf16.msra.mxu0 %v966
    %1166 = vmatprep.subr.bf16.mxu0 %v957
    %1167 = vmatpush2.bf16.msra.mxu0 %v956
    %1168 = vmatprep.subr.bf16.mxu0 %v947
    %1169 = vmatpush2.bf16.msra.mxu0 %v946
    %1170 = vmatprep.subr.bf16.mxu0 %v937
    %1171 = vmatpush2.bf16.msra.mxu0 %v936
    %1172 = vmatprep.subr.bf16.mxu0 %v927
    %1173 = vmatpush2.bf16.msra.mxu0 %v926
    %1174 = vmatprep.subr.bf16.mxu0 %v917
    %1175 = vmatpush2.bf16.msra.mxu0 %v916
    %1176 = vmatprep.subr.bf16.mxu0 %v907
    %1177 = vmatpush2.bf16.msra.mxu0 %v906
    %1178 = vmatprep.mubr.bf16.mxu0 %v315
    %1179 = vmatmul.mubr.bf16.gmra.mxu0 %v314
    %v1180 = vpop.f32.mrf.mxu0
    %v1181 = vadd.f32 0.0, %v1180
    %v1182 = vpop.f32.mrf.mxu0
    %v1183 = vadd.f32 0.0, %v1182
    %v1184 = vpop.f32.mrf.mxu0
    %v1185 = vadd.f32 0.0, %v1184
    %v1186 = vpop.f32.mrf.mxu0
    %v1187 = vadd.f32 0.0, %v1186
    %1188 = vmatprep.mubr.bf16.mxu0 %v317
    %1189 = vmatmul.mubr.bf16.gmra.mxu0 %v316
    %v1190 = vpop.f32.mrf.mxu0
    %v1191 = vadd.f32 0.0, %v1190
    %v1192 = vpop.f32.mrf.mxu0
    %v1193 = vadd.f32 0.0, %v1192
    %v1194 = vpop.f32.mrf.mxu0
    %v1195 = vadd.f32 0.0, %v1194
    %v1196 = vpop.f32.mrf.mxu0
    %v1197 = vadd.f32 0.0, %v1196
    %1198 = vmatprep.mubr.bf16.mxu0 %v319
    %1199 = vmatmul.mubr.bf16.gmra.mxu0 %v318
    %v1200 = vpop.f32.mrf.mxu0
    %v1201 = vadd.f32 0.0, %v1200
    %v1202 = vpop.f32.mrf.mxu0
    %v1203 = vadd.f32 0.0, %v1202
    %v1204 = vpop.f32.mrf.mxu0
    %v1205 = vadd.f32 0.0, %v1204
    %v1206 = vpop.f32.mrf.mxu0
    %v1207 = vadd.f32 0.0, %v1206
    %1208 = vmatprep.mubr.bf16.mxu0 %v321
    %1209 = vmatmul.mubr.bf16.gmra.mxu0 %v320
    %v1210 = vpop.f32.mrf.mxu0
    %v1211 = vadd.f32 0.0, %v1210
    %v1212 = vpop.f32.mrf.mxu0
    %v1213 = vadd.f32 0.0, %v1212
    %v1214 = vpop.f32.mrf.mxu0
    %v1215 = vadd.f32 0.0, %v1214
    %v1216 = vpop.f32.mrf.mxu0
    %v1217 = vadd.f32 0.0, %v1216
    %1218 = vmatprep.mubr.bf16.mxu0 %v323
    %1219 = vmatmul.mubr.bf16.gmra.mxu0 %v322
    %v1220 = vpop.f32.mrf.mxu0
    %v1221 = vadd.f32 0.0, %v1220
    %v1222 = vpop.f32.mrf.mxu0
    %v1223 = vadd.f32 0.0, %v1222
    %v1224 = vpop.f32.mrf.mxu0
    %v1225 = vadd.f32 0.0, %v1224
    %v1226 = vpop.f32.mrf.mxu0
    %v1227 = vadd.f32 0.0, %v1226
    %1228 = vmatprep.mubr.bf16.mxu0 %v325
    %1229 = vmatmul.mubr.bf16.gmra.mxu0 %v324
    %v1230 = vpop.f32.mrf.mxu0
    %v1231 = vadd.f32 0.0, %v1230
    %v1232 = vpop.f32.mrf.mxu0
    %v1233 = vadd.f32 0.0, %v1232
    %v1234 = vpop.f32.mrf.mxu0
    %v1235 = vadd.f32 0.0, %v1234
    %v1236 = vpop.f32.mrf.mxu0
    %v1237 = vadd.f32 0.0, %v1236
    %1238 = vmatprep.mubr.bf16.mxu0 %v327
    %1239 = vmatmul.mubr.bf16.gmra.mxu0 %v326
    %v1240 = vpop.f32.mrf.mxu0
    %v1241 = vadd.f32 0.0, %v1240
    %v1242 = vpop.f32.mrf.mxu0
    %v1243 = vadd.f32 0.0, %v1242
    %v1244 = vpop.f32.mrf.mxu0
    %v1245 = vadd.f32 0.0, %v1244
    %v1246 = vpop.f32.mrf.mxu0
    %v1247 = vadd.f32 0.0, %v1246
    %1248 = vmatprep.mubr.bf16.mxu0 %v329
    %1249 = vmatmul.mubr.bf16.gmra.mxu0 %v328
    %v1250 = vpop.f32.mrf.mxu0
    %v1251 = vadd.f32 0.0, %v1250
    %v1252 = vpop.f32.mrf.mxu0
    %v1253 = vadd.f32 0.0, %v1252
    %v1254 = vpop.f32.mrf.mxu0
    %v1255 = vadd.f32 0.0, %v1254
    %v1256 = vpop.f32.mrf.mxu0
    %v1257 = vadd.f32 0.0, %v1256
    %1258 = vdwg.mxu0
    %1259 = vmatprep.subr.bf16.mxu0 %v899
    %1260 = vmatpush1.bf16.msra.mxu0 %v898
    %1261 = vmatprep.subr.bf16.mxu0 %v889
    %1262 = vmatpush1.bf16.msra.mxu0 %v888
    %1263 = vmatprep.subr.bf16.mxu0 %v879
    %1264 = vmatpush1.bf16.msra.mxu0 %v878
    %1265 = vmatprep.subr.bf16.mxu0 %v869
    %1266 = vmatpush1.bf16.msra.mxu0 %v868
    %1267 = vmatprep.subr.bf16.mxu0 %v859
    %1268 = vmatpush1.bf16.msra.mxu0 %v858
    %1269 = vmatprep.subr.bf16.mxu0 %v849
    %1270 = vmatpush1.bf16.msra.mxu0 %v848
    %1271 = vmatprep.subr.bf16.mxu0 %v839
    %1272 = vmatpush1.bf16.msra.mxu0 %v838
    %1273 = vmatprep.subr.bf16.mxu0 %v829
    %1274 = vmatpush1.bf16.msra.mxu0 %v828
    %1275 = vmatprep.subr.bf16.mxu0 %v979
    %1276 = vmatpush2.bf16.msra.mxu0 %v978
    %1277 = vmatprep.subr.bf16.mxu0 %v969
    %1278 = vmatpush2.bf16.msra.mxu0 %v968
    %1279 = vmatprep.subr.bf16.mxu0 %v959
    %1280 = vmatpush2.bf16.msra.mxu0 %v958
    %1281 = vmatprep.subr.bf16.mxu0 %v949
    %1282 = vmatpush2.bf16.msra.mxu0 %v948
    %1283 = vmatprep.subr.bf16.mxu0 %v939
    %1284 = vmatpush2.bf16.msra.mxu0 %v938
    %1285 = vmatprep.subr.bf16.mxu0 %v929
    %1286 = vmatpush2.bf16.msra.mxu0 %v928
    %1287 = vmatprep.subr.bf16.mxu0 %v919
    %1288 = vmatpush2.bf16.msra.mxu0 %v918
    %1289 = vmatprep.subr.bf16.mxu0 %v909
    %1290 = vmatpush2.bf16.msra.mxu0 %v908
    %1291 = vmatprep.mubr.bf16.mxu0 %v315
    %1292 = vmatmul.mubr.bf16.gmra.mxu0 %v314
    %v1293 = vpop.f32.mrf.mxu0
    %v1294 = vadd.f32 0.0, %v1293
    %v1295 = vpop.f32.mrf.mxu0
    %v1296 = vadd.f32 0.0, %v1295
    %v1297 = vpop.f32.mrf.mxu0
    %v1298 = vadd.f32 0.0, %v1297
    %v1299 = vpop.f32.mrf.mxu0
    %v1300 = vadd.f32 0.0, %v1299
    %1301 = vmatprep.mubr.bf16.mxu0 %v317
    %1302 = vmatmul.mubr.bf16.gmra.mxu0 %v316
    %v1303 = vpop.f32.mrf.mxu0
    %v1304 = vadd.f32 0.0, %v1303
    %v1305 = vpop.f32.mrf.mxu0
    %v1306 = vadd.f32 0.0, %v1305
    %v1307 = vpop.f32.mrf.mxu0
    %v1308 = vadd.f32 0.0, %v1307
    %v1309 = vpop.f32.mrf.mxu0
    %v1310 = vadd.f32 0.0, %v1309
    %1311 = vmatprep.mubr.bf16.mxu0 %v319
    %1312 = vmatmul.mubr.bf16.gmra.mxu0 %v318
    %v1313 = vpop.f32.mrf.mxu0
    %v1314 = vadd.f32 0.0, %v1313
    %v1315 = vpop.f32.mrf.mxu0
    %v1316 = vadd.f32 0.0, %v1315
    %v1317 = vpop.f32.mrf.mxu0
    %v1318 = vadd.f32 0.0, %v1317
    %v1319 = vpop.f32.mrf.mxu0
    %v1320 = vadd.f32 0.0, %v1319
    %1321 = vmatprep.mubr.bf16.mxu0 %v321
    %1322 = vmatmul.mubr.bf16.gmra.mxu0 %v320
    %v1323 = vpop.f32.mrf.mxu0
    %v1324 = vadd.f32 0.0, %v1323
    %v1325 = vpop.f32.mrf.mxu0
    %v1326 = vadd.f32 0.0, %v1325
    %v1327 = vpop.f32.mrf.mxu0
    %v1328 = vadd.f32 0.0, %v1327
    %v1329 = vpop.f32.mrf.mxu0
    %v1330 = vadd.f32 0.0, %v1329
    %1331 = vmatprep.mubr.bf16.mxu0 %v323
    %1332 = vmatmul.mubr.bf16.gmra.mxu0 %v322
    %v1333 = vpop.f32.mrf.mxu0
    %v1334 = vadd.f32 0.0, %v1333
    %v1335 = vpop.f32.mrf.mxu0
    %v1336 = vadd.f32 0.0, %v1335
    %v1337 = vpop.f32.mrf.mxu0
    %v1338 = vadd.f32 0.0, %v1337
    %v1339 = vpop.f32.mrf.mxu0
    %v1340 = vadd.f32 0.0, %v1339
    %1341 = vmatprep.mubr.bf16.mxu0 %v325
    %1342 = vmatmul.mubr.bf16.gmra.mxu0 %v324
    %v1343 = vpop.f32.mrf.mxu0
    %v1344 = vadd.f32 0.0, %v1343
    %v1345 = vpop.f32.mrf.mxu0
    %v1346 = vadd.f32 0.0, %v1345
    %v1347 = vpop.f32.mrf.mxu0
    %v1348 = vadd.f32 0.0, %v1347
    %v1349 = vpop.f32.mrf.mxu0
    %v1350 = vadd.f32 0.0, %v1349
    %1351 = vmatprep.mubr.bf16.mxu0 %v327
    %1352 = vmatmul.mubr.bf16.gmra.mxu0 %v326
    %v1353 = vpop.f32.mrf.mxu0
    %v1354 = vadd.f32 0.0, %v1353
    %v1355 = vpop.f32.mrf.mxu0
    %v1356 = vadd.f32 0.0, %v1355
    %v1357 = vpop.f32.mrf.mxu0
    %v1358 = vadd.f32 0.0, %v1357
    %v1359 = vpop.f32.mrf.mxu0
    %v1360 = vadd.f32 0.0, %v1359
    %1361 = vmatprep.mubr.bf16.mxu0 %v329
    %1362 = vmatmul.mubr.bf16.gmra.mxu0 %v328
    %v1363 = vpop.f32.mrf.mxu0
    %v1364 = vadd.f32 0.0, %v1363
    %v1365 = vpop.f32.mrf.mxu0
    %v1366 = vadd.f32 0.0, %v1365
    %v1367 = vpop.f32.mrf.mxu0
    %v1368 = vadd.f32 0.0, %v1367
    %v1369 = vpop.f32.mrf.mxu0
    %v1370 = vadd.f32 0.0, %v1369
    %1371 = vdwg.mxu0
    %1372 = vmatprep.subr.bf16.mxu0 %v901
    %1373 = vmatpush1.bf16.msra.mxu0 %v900
    %1374 = vmatprep.subr.bf16.mxu0 %v891
    %1375 = vmatpush1.bf16.msra.mxu0 %v890
    %1376 = vmatprep.subr.bf16.mxu0 %v881
    %1377 = vmatpush1.bf16.msra.mxu0 %v880
    %1378 = vmatprep.subr.bf16.mxu0 %v871
    %1379 = vmatpush1.bf16.msra.mxu0 %v870
    %1380 = vmatprep.subr.bf16.mxu0 %v861
    %1381 = vmatpush1.bf16.msra.mxu0 %v860
    %1382 = vmatprep.subr.bf16.mxu0 %v851
    %1383 = vmatpush1.bf16.msra.mxu0 %v850
    %1384 = vmatprep.subr.bf16.mxu0 %v841
    %1385 = vmatpush1.bf16.msra.mxu0 %v840
    %1386 = vmatprep.subr.bf16.mxu0 %v831
    %1387 = vmatpush1.bf16.msra.mxu0 %v830
    %1388 = vmatprep.subr.bf16.mxu0 %v981
    %1389 = vmatpush2.bf16.msra.mxu0 %v980
    %1390 = vmatprep.subr.bf16.mxu0 %v971
    %1391 = vmatpush2.bf16.msra.mxu0 %v970
    %1392 = vmatprep.subr.bf16.mxu0 %v961
    %1393 = vmatpush2.bf16.msra.mxu0 %v960
    %1394 = vmatprep.subr.bf16.mxu0 %v951
    %1395 = vmatpush2.bf16.msra.mxu0 %v950
    %1396 = vmatprep.subr.bf16.mxu0 %v941
    %1397 = vmatpush2.bf16.msra.mxu0 %v940
    %1398 = vmatprep.subr.bf16.mxu0 %v931
    %1399 = vmatpush2.bf16.msra.mxu0 %v930
    %1400 = vmatprep.subr.bf16.mxu0 %v921
    %1401 = vmatpush2.bf16.msra.mxu0 %v920
    %1402 = vmatprep.subr.bf16.mxu0 %v911
    %1403 = vmatpush2.bf16.msra.mxu0 %v910
    %1404 = vmatprep.mubr.bf16.mxu0 %v315
    %1405 = vmatmul.mubr.bf16.gmra.mxu0 %v314
    %v1406 = vpop.f32.mrf.mxu0
    %v1407 = vadd.f32 0.0, %v1406
    %v1408 = vpop.f32.mrf.mxu0
    %v1409 = vadd.f32 0.0, %v1408
    %v1410 = vpop.f32.mrf.mxu0
    %v1411 = vadd.f32 0.0, %v1410
    %v1412 = vpop.f32.mrf.mxu0
    %v1413 = vadd.f32 0.0, %v1412
    %1414 = vmatprep.mubr.bf16.mxu0 %v317
    %1415 = vmatmul.mubr.bf16.gmra.mxu0 %v316
    %v1416 = vpop.f32.mrf.mxu0
    %v1417 = vadd.f32 0.0, %v1416
    %v1418 = vpop.f32.mrf.mxu0
    %v1419 = vadd.f32 0.0, %v1418
    %v1420 = vpop.f32.mrf.mxu0
    %v1421 = vadd.f32 0.0, %v1420
    %v1422 = vpop.f32.mrf.mxu0
    %v1423 = vadd.f32 0.0, %v1422
    %1424 = vmatprep.mubr.bf16.mxu0 %v319
    %1425 = vmatmul.mubr.bf16.gmra.mxu0 %v318
    %v1426 = vpop.f32.mrf.mxu0
    %v1427 = vadd.f32 0.0, %v1426
    %v1428 = vpop.f32.mrf.mxu0
    %v1429 = vadd.f32 0.0, %v1428
    %v1430 = vpop.f32.mrf.mxu0
    %v1431 = vadd.f32 0.0, %v1430
    %v1432 = vpop.f32.mrf.mxu0
    %v1433 = vadd.f32 0.0, %v1432
    %1434 = vmatprep.mubr.bf16.mxu0 %v321
    %1435 = vmatmul.mubr.bf16.gmra.mxu0 %v320
    %v1436 = vpop.f32.mrf.mxu0
    %v1437 = vadd.f32 0.0, %v1436
    %v1438 = vpop.f32.mrf.mxu0
    %v1439 = vadd.f32 0.0, %v1438
    %v1440 = vpop.f32.mrf.mxu0
    %v1441 = vadd.f32 0.0, %v1440
    %v1442 = vpop.f32.mrf.mxu0
    %v1443 = vadd.f32 0.0, %v1442
    %1444 = vmatprep.mubr.bf16.mxu0 %v323
    %1445 = vmatmul.mubr.bf16.gmra.mxu0 %v322
    %v1446 = vpop.f32.mrf.mxu0
    %v1447 = vadd.f32 0.0, %v1446
    %v1448 = vpop.f32.mrf.mxu0
    %v1449 = vadd.f32 0.0, %v1448
    %v1450 = vpop.f32.mrf.mxu0
    %v1451 = vadd.f32 0.0, %v1450
    %v1452 = vpop.f32.mrf.mxu0
    %v1453 = vadd.f32 0.0, %v1452
    %1454 = vmatprep.mubr.bf16.mxu0 %v325
    %1455 = vmatmul.mubr.bf16.gmra.mxu0 %v324
    %v1456 = vpop.f32.mrf.mxu0
    %v1457 = vadd.f32 0.0, %v1456
    %v1458 = vpop.f32.mrf.mxu0
    %v1459 = vadd.f32 0.0, %v1458
    %v1460 = vpop.f32.mrf.mxu0
    %v1461 = vadd.f32 0.0, %v1460
    %v1462 = vpop.f32.mrf.mxu0
    %v1463 = vadd.f32 0.0, %v1462
    %1464 = vmatprep.mubr.bf16.mxu0 %v327
    %1465 = vmatmul.mubr.bf16.gmra.mxu0 %v326
    %v1466 = vpop.f32.mrf.mxu0
    %v1467 = vadd.f32 0.0, %v1466
    %v1468 = vpop.f32.mrf.mxu0
    %v1469 = vadd.f32 0.0, %v1468
    %v1470 = vpop.f32.mrf.mxu0
    %v1471 = vadd.f32 0.0, %v1470
    %v1472 = vpop.f32.mrf.mxu0
    %v1473 = vadd.f32 0.0, %v1472
    %1474 = vmatprep.mubr.bf16.mxu0 %v329
    %1475 = vmatmul.mubr.bf16.gmra.mxu0 %v328
    %v1476 = vpop.f32.mrf.mxu0
    %v1477 = vadd.f32 0.0, %v1476
    %v1478 = vpop.f32.mrf.mxu0
    %v1479 = vadd.f32 0.0, %v1478
    %v1480 = vpop.f32.mrf.mxu0
    %v1481 = vadd.f32 0.0, %v1480
    %v1482 = vpop.f32.mrf.mxu0
    %v1483 = vadd.f32 0.0, %v1482
    %1484 = vdwg.mxu0
    %1485 = vmatprep.subr.bf16.mxu0 %v903
    %1486 = vmatpush1.bf16.msra.mxu0 %v902
    %1487 = vmatprep.subr.bf16.mxu0 %v893
    %1488 = vmatpush1.bf16.msra.mxu0 %v892
    %1489 = vmatprep.subr.bf16.mxu0 %v883
    %1490 = vmatpush1.bf16.msra.mxu0 %v882
    %1491 = vmatprep.subr.bf16.mxu0 %v873
    %1492 = vmatpush1.bf16.msra.mxu0 %v872
    %1493 = vmatprep.subr.bf16.mxu0 %v863
    %1494 = vmatpush1.bf16.msra.mxu0 %v862
    %1495 = vmatprep.subr.bf16.mxu0 %v853
    %1496 = vmatpush1.bf16.msra.mxu0 %v852
    %1497 = vmatprep.subr.bf16.mxu0 %v843
    %1498 = vmatpush1.bf16.msra.mxu0 %v842
    %1499 = vmatprep.subr.bf16.mxu0 %v833
    %1500 = vmatpush1.bf16.msra.mxu0 %v832
    %1501 = vmatprep.subr.bf16.mxu0 %v983
    %1502 = vmatpush2.bf16.msra.mxu0 %v982
    %1503 = vmatprep.subr.bf16.mxu0 %v973
    %1504 = vmatpush2.bf16.msra.mxu0 %v972
    %1505 = vmatprep.subr.bf16.mxu0 %v963
    %1506 = vmatpush2.bf16.msra.mxu0 %v962
    %1507 = vmatprep.subr.bf16.mxu0 %v953
    %1508 = vmatpush2.bf16.msra.mxu0 %v952
    %1509 = vmatprep.subr.bf16.mxu0 %v943
    %1510 = vmatpush2.bf16.msra.mxu0 %v942
    %1511 = vmatprep.subr.bf16.mxu0 %v933
    %1512 = vmatpush2.bf16.msra.mxu0 %v932
    %1513 = vmatprep.subr.bf16.mxu0 %v923
    %1514 = vmatpush2.bf16.msra.mxu0 %v922
    %1515 = vmatprep.subr.bf16.mxu0 %v913
    %1516 = vmatpush2.bf16.msra.mxu0 %v912
    %1517 = vmatprep.mubr.bf16.mxu0 %v315
    %1518 = vmatmul.mubr.bf16.gmra.mxu0 %v314
    %v1519 = vpop.f32.mrf.mxu0
    %v1520 = vadd.f32 0.0, %v1519
    %v1521 = vpop.f32.mrf.mxu0
    %v1522 = vadd.f32 0.0, %v1521
    %v1523 = vpop.f32.mrf.mxu0
    %v1524 = vadd.f32 0.0, %v1523
    %v1525 = vpop.f32.mrf.mxu0
    %v1526 = vadd.f32 0.0, %v1525
    %1527 = vmatprep.mubr.bf16.mxu0 %v317
    %1528 = vmatmul.mubr.bf16.gmra.mxu0 %v316
    %v1529 = vpop.f32.mrf.mxu0
    %v1530 = vadd.f32 0.0, %v1529
    %v1531 = vpop.f32.mrf.mxu0
    %v1532 = vadd.f32 0.0, %v1531
    %v1533 = vpop.f32.mrf.mxu0
    %v1534 = vadd.f32 0.0, %v1533
    %v1535 = vpop.f32.mrf.mxu0
    %v1536 = vadd.f32 0.0, %v1535
    %1537 = vmatprep.mubr.bf16.mxu0 %v319
    %1538 = vmatmul.mubr.bf16.gmra.mxu0 %v318
    %v1539 = vpop.f32.mrf.mxu0
    %v1540 = vadd.f32 0.0, %v1539
    %v1541 = vpop.f32.mrf.mxu0
    %v1542 = vadd.f32 0.0, %v1541
    %v1543 = vpop.f32.mrf.mxu0
    %v1544 = vadd.f32 0.0, %v1543
    %v1545 = vpop.f32.mrf.mxu0
    %v1546 = vadd.f32 0.0, %v1545
    %1547 = vmatprep.mubr.bf16.mxu0 %v321
    %1548 = vmatmul.mubr.bf16.gmra.mxu0 %v320
    %v1549 = vpop.f32.mrf.mxu0
    %v1550 = vadd.f32 0.0, %v1549
    %v1551 = vpop.f32.mrf.mxu0
    %v1552 = vadd.f32 0.0, %v1551
    %v1553 = vpop.f32.mrf.mxu0
    %v1554 = vadd.f32 0.0, %v1553
    %v1555 = vpop.f32.mrf.mxu0
    %v1556 = vadd.f32 0.0, %v1555
    %1557 = vmatprep.mubr.bf16.mxu0 %v323
    %1558 = vmatmul.mubr.bf16.gmra.mxu0 %v322
    %v1559 = vpop.f32.mrf.mxu0
    %v1560 = vadd.f32 0.0, %v1559
    %v1561 = vpop.f32.mrf.mxu0
    %v1562 = vadd.f32 0.0, %v1561
    %v1563 = vpop.f32.mrf.mxu0
    %v1564 = vadd.f32 0.0, %v1563
    %v1565 = vpop.f32.mrf.mxu0
    %v1566 = vadd.f32 0.0, %v1565
    %1567 = vmatprep.mubr.bf16.mxu0 %v325
    %1568 = vmatmul.mubr.bf16.gmra.mxu0 %v324
    %v1569 = vpop.f32.mrf.mxu0
    %v1570 = vadd.f32 0.0, %v1569
    %v1571 = vpop.f32.mrf.mxu0
    %v1572 = vadd.f32 0.0, %v1571
    %v1573 = vpop.f32.mrf.mxu0
    %v1574 = vadd.f32 0.0, %v1573
    %v1575 = vpop.f32.mrf.mxu0
    %v1576 = vadd.f32 0.0, %v1575
    %1577 = vmatprep.mubr.bf16.mxu0 %v327
    %1578 = vmatmul.mubr.bf16.gmra.mxu0 %v326
    %v1579 = vpop.f32.mrf.mxu0
    %v1580 = vadd.f32 0.0, %v1579
    %v1581 = vpop.f32.mrf.mxu0
    %v1582 = vadd.f32 0.0, %v1581
    %v1583 = vpop.f32.mrf.mxu0
    %v1584 = vadd.f32 0.0, %v1583
    %v1585 = vpop.f32.mrf.mxu0
    %v1586 = vadd.f32 0.0, %v1585
    %1587 = vmatprep.mubr.bf16.mxu0 %v329
    %1588 = vmatmul.mubr.bf16.gmra.mxu0 %v328
    %v1589 = vpop.f32.mrf.mxu0
    %v1590 = vadd.f32 0.0, %v1589
    %v1591 = vpop.f32.mrf.mxu0
    %v1592 = vadd.f32 0.0, %v1591
    %v1593 = vpop.f32.mrf.mxu0
    %v1594 = vadd.f32 0.0, %v1593
    %v1595 = vpop.f32.mrf.mxu0
    %v1596 = vadd.f32 0.0, %v1595
    %1597 = vdwg.mxu0
    %1598 = vmatprep.subr.bf16.mxu0 %v905
    %1599 = vmatpush1.bf16.msra.mxu0 %v904
    %1600 = vmatprep.subr.bf16.mxu0 %v895
    %1601 = vmatpush1.bf16.msra.mxu0 %v894
    %1602 = vmatprep.subr.bf16.mxu0 %v885
    %1603 = vmatpush1.bf16.msra.mxu0 %v884
    %1604 = vmatprep.subr.bf16.mxu0 %v875
    %1605 = vmatpush1.bf16.msra.mxu0 %v874
    %1606 = vmatprep.subr.bf16.mxu0 %v865
    %1607 = vmatpush1.bf16.msra.mxu0 %v864
    %1608 = vmatprep.subr.bf16.mxu0 %v855
    %1609 = vmatpush1.bf16.msra.mxu0 %v854
    %1610 = vmatprep.subr.bf16.mxu0 %v845
    %1611 = vmatpush1.bf16.msra.mxu0 %v844
    %1612 = vmatprep.subr.bf16.mxu0 %v835
    %1613 = vmatpush1.bf16.msra.mxu0 %v834
    %1614 = vmatprep.subr.bf16.mxu0 %v985
    %1615 = vmatpush2.bf16.msra.mxu0 %v984
    %1616 = vmatprep.subr.bf16.mxu0 %v975
    %1617 = vmatpush2.bf16.msra.mxu0 %v974
    %1618 = vmatprep.subr.bf16.mxu0 %v965
    %1619 = vmatpush2.bf16.msra.mxu0 %v964
    %1620 = vmatprep.subr.bf16.mxu0 %v955
    %1621 = vmatpush2.bf16.msra.mxu0 %v954
    %1622 = vmatprep.subr.bf16.mxu0 %v945
    %1623 = vmatpush2.bf16.msra.mxu0 %v944
    %1624 = vmatprep.subr.bf16.mxu0 %v935
    %1625 = vmatpush2.bf16.msra.mxu0 %v934
    %1626 = vmatprep.subr.bf16.mxu0 %v925
    %1627 = vmatpush2.bf16.msra.mxu0 %v924
    %1628 = vmatprep.subr.bf16.mxu0 %v915
    %1629 = vmatpush2.bf16.msra.mxu0 %v914
    %1630 = vmatprep.mubr.bf16.mxu0 %v315
    %1631 = vmatmul.mubr.bf16.gmra.mxu0 %v314
    %v1632 = vpop.f32.mrf.mxu0
    %v1633 = vadd.f32 0.0, %v1632
    %v1634 = vpop.f32.mrf.mxu0
    %v1635 = vadd.f32 0.0, %v1634
    %v1636 = vpop.f32.mrf.mxu0
    %v1637 = vadd.f32 0.0, %v1636
    %v1638 = vpop.f32.mrf.mxu0
    %v1639 = vadd.f32 0.0, %v1638
    %1640 = vmatprep.mubr.bf16.mxu0 %v317
    %1641 = vmatmul.mubr.bf16.gmra.mxu0 %v316
    %v1642 = vpop.f32.mrf.mxu0
    %v1643 = vadd.f32 0.0, %v1642
    %v1644 = vpop.f32.mrf.mxu0
    %v1645 = vadd.f32 0.0, %v1644
    %v1646 = vpop.f32.mrf.mxu0
    %v1647 = vadd.f32 0.0, %v1646
    %v1648 = vpop.f32.mrf.mxu0
    %v1649 = vadd.f32 0.0, %v1648
    %1650 = vmatprep.mubr.bf16.mxu0 %v319
    %1651 = vmatmul.mubr.bf16.gmra.mxu0 %v318
    %v1652 = vpop.f32.mrf.mxu0
    %v1653 = vadd.f32 0.0, %v1652
    %v1654 = vpop.f32.mrf.mxu0
    %v1655 = vadd.f32 0.0, %v1654
    %v1656 = vpop.f32.mrf.mxu0
    %v1657 = vadd.f32 0.0, %v1656
    %v1658 = vpop.f32.mrf.mxu0
    %v1659 = vadd.f32 0.0, %v1658
    %1660 = vmatprep.mubr.bf16.mxu0 %v321
    %1661 = vmatmul.mubr.bf16.gmra.mxu0 %v320
    %v1662 = vpop.f32.mrf.mxu0
    %v1663 = vadd.f32 0.0, %v1662
    %v1664 = vpop.f32.mrf.mxu0
    %v1665 = vadd.f32 0.0, %v1664
    %v1666 = vpop.f32.mrf.mxu0
    %v1667 = vadd.f32 0.0, %v1666
    %v1668 = vpop.f32.mrf.mxu0
    %v1669 = vadd.f32 0.0, %v1668
    %1670 = vmatprep.mubr.bf16.mxu0 %v323
    %1671 = vmatmul.mubr.bf16.gmra.mxu0 %v322
    %v1672 = vpop.f32.mrf.mxu0
    %v1673 = vadd.f32 0.0, %v1672
    %v1674 = vpop.f32.mrf.mxu0
    %v1675 = vadd.f32 0.0, %v1674
    %v1676 = vpop.f32.mrf.mxu0
    %v1677 = vadd.f32 0.0, %v1676
    %v1678 = vpop.f32.mrf.mxu0
    %v1679 = vadd.f32 0.0, %v1678
    %1680 = vmatprep.mubr.bf16.mxu0 %v325
    %1681 = vmatmul.mubr.bf16.gmra.mxu0 %v324
    %v1682 = vpop.f32.mrf.mxu0
    %v1683 = vadd.f32 0.0, %v1682
    %v1684 = vpop.f32.mrf.mxu0
    %v1685 = vadd.f32 0.0, %v1684
    %v1686 = vpop.f32.mrf.mxu0
    %v1687 = vadd.f32 0.0, %v1686
    %v1688 = vpop.f32.mrf.mxu0
    %v1689 = vadd.f32 0.0, %v1688
    %1690 = vmatprep.mubr.bf16.mxu0 %v327
    %1691 = vmatmul.mubr.bf16.gmra.mxu0 %v326
    %v1692 = vpop.f32.mrf.mxu0
    %v1693 = vadd.f32 0.0, %v1692
    %v1694 = vpop.f32.mrf.mxu0
    %v1695 = vadd.f32 0.0, %v1694
    %v1696 = vpop.f32.mrf.mxu0
    %v1697 = vadd.f32 0.0, %v1696
    %v1698 = vpop.f32.mrf.mxu0
    %v1699 = vadd.f32 0.0, %v1698
    %1700 = vmatprep.mubr.bf16.mxu0 %v329
    %1701 = vmatmul.mubr.bf16.gmra.mxu0 %v328
    %v1702 = vpop.f32.mrf.mxu0
    %v1703 = vadd.f32 0.0, %v1702
    %v1704 = vpop.f32.mrf.mxu0
    %v1705 = vadd.f32 0.0, %v1704
    %v1706 = vpop.f32.mrf.mxu0
    %v1707 = vadd.f32 0.0, %v1706
    %v1708 = vpop.f32.mrf.mxu0
    %v1709 = vadd.f32 0.0, %v1708
    %1710 = vdwg.mxu0
    %v1711 = vld [vmem:[#allocation8] sm:$0xff]
    %v1712 = vld [vmem:[#allocation8 + $0x8] sm:$0xff]
    %v1713 = vld [vmem:[#allocation8 + $0x10] sm:$0xff]
    %v1714 = vld [vmem:[#allocation8 + $0x18] sm:$0xff]
    %v1715 = vld [vmem:[#allocation8 + $0x20] sm:$0xff]
    %v1716 = vld [vmem:[#allocation8 + $0x28] sm:$0xff]
    %v1717 = vld [vmem:[#allocation8 + $0x30] sm:$0xff]
    %v1718 = vld [vmem:[#allocation8 + $0x38] sm:$0xff]
    %v1719 = vld [vmem:[#allocation8 + $0x40] sm:$0xff]
    %v1720 = vld [vmem:[#allocation8 + $0x48] sm:$0xff]
    %v1721 = vld [vmem:[#allocation8 + $0x50] sm:$0xff]
    %v1722 = vld [vmem:[#allocation8 + $0x58] sm:$0xff]
    %v1723 = vld [vmem:[#allocation8 + $0x60] sm:$0xff]
    %v1724 = vld [vmem:[#allocation8 + $0x68] sm:$0xff]
    %v1725 = vld [vmem:[#allocation8 + $0x70] sm:$0xff]
    %v1726 = vld [vmem:[#allocation8 + $0x78] sm:$0xff]
    %v1727 = vld [vmem:[#allocation8 + $0x80] sm:$0xff]
    %v1728 = vld [vmem:[#allocation8 + $0x88] sm:$0xff]
    %v1729 = vld [vmem:[#allocation8 + $0x90] sm:$0xff]
    %v1730 = vld [vmem:[#allocation8 + $0x98] sm:$0xff]
    %v1731 = vld [vmem:[#allocation8 + $0xa0] sm:$0xff]
    %v1732 = vld [vmem:[#allocation8 + $0xa8] sm:$0xff]
    %v1733 = vld [vmem:[#allocation8 + $0xb0] sm:$0xff]
    %v1734 = vld [vmem:[#allocation8 + $0xb8] sm:$0xff]
    %v1735 = vld [vmem:[#allocation8 + $0xc0] sm:$0xff]
    %v1736 = vld [vmem:[#allocation8 + $0xc8] sm:$0xff]
    %v1737 = vld [vmem:[#allocation8 + $0xd0] sm:$0xff]
    %v1738 = vld [vmem:[#allocation8 + $0xd8] sm:$0xff]
    %v1739 = vld [vmem:[#allocation8 + $0xe0] sm:$0xff]
    %v1740 = vld [vmem:[#allocation8 + $0xe8] sm:$0xff]
    %v1741 = vld [vmem:[#allocation8 + $0xf0] sm:$0xff]
    %v1742 = vld [vmem:[#allocation8 + $0xf8] sm:$0xff]
    %v1743 = vld [vmem:[#allocation10] sm:$0xff]
    %v1744 = vld [vmem:[#allocation10 + $0x8] sm:$0xff]
    %v1745 = vld [vmem:[#allocation10 + $0x10] sm:$0xff]
    %v1746 = vld [vmem:[#allocation10 + $0x18] sm:$0xff]
    %v1747 = vld [vmem:[#allocation10 + $0x20] sm:$0xff]
    %v1748 = vld [vmem:[#allocation10 + $0x28] sm:$0xff]
    %v1749 = vld [vmem:[#allocation10 + $0x30] sm:$0xff]
    %v1750 = vld [vmem:[#allocation10 + $0x38] sm:$0xff]
    %v1751 = vld [vmem:[#allocation10 + $0x40] sm:$0xff]
    %v1752 = vld [vmem:[#allocation10 + $0x48] sm:$0xff]
    %v1753 = vld [vmem:[#allocation10 + $0x50] sm:$0xff]
    %v1754 = vld [vmem:[#allocation10 + $0x58] sm:$0xff]
    %v1755 = vld [vmem:[#allocation10 + $0x60] sm:$0xff]
    %v1756 = vld [vmem:[#allocation10 + $0x68] sm:$0xff]
    %v1757 = vld [vmem:[#allocation10 + $0x70] sm:$0xff]
    %v1758 = vld [vmem:[#allocation10 + $0x78] sm:$0xff]
    %v1759 = vld [vmem:[#allocation10 + $0x80] sm:$0xff]
    %v1760 = vld [vmem:[#allocation10 + $0x88] sm:$0xff]
    %v1761 = vld [vmem:[#allocation10 + $0x90] sm:$0xff]
    %v1762 = vld [vmem:[#allocation10 + $0x98] sm:$0xff]
    %v1763 = vld [vmem:[#allocation10 + $0xa0] sm:$0xff]
    %v1764 = vld [vmem:[#allocation10 + $0xa8] sm:$0xff]
    %v1765 = vld [vmem:[#allocation10 + $0xb0] sm:$0xff]
    %v1766 = vld [vmem:[#allocation10 + $0xb8] sm:$0xff]
    %v1767 = vld [vmem:[#allocation10 + $0xc0] sm:$0xff]
    %v1768 = vld [vmem:[#allocation10 + $0xc8] sm:$0xff]
    %v1769 = vld [vmem:[#allocation10 + $0xd0] sm:$0xff]
    %v1770 = vld [vmem:[#allocation10 + $0xd8] sm:$0xff]
    %v1771 = vld [vmem:[#allocation10 + $0xe0] sm:$0xff]
    %v1772 = vld [vmem:[#allocation10 + $0xe8] sm:$0xff]
    %v1773 = vld [vmem:[#allocation10 + $0xf0] sm:$0xff]
    %v1774 = vld [vmem:[#allocation10 + $0xf8] sm:$0xff]
    %v1775 = vmul.f32 %v1181, %v1711
    %v1776 = vmul.f32 %v1183, %v1712
    %v1777 = vmul.f32 %v1185, %v1713
    %v1778 = vmul.f32 %v1187, %v1714
    %v1779 = vmul.f32 %v1191, %v1715
    %v1780 = vmul.f32 %v1193, %v1716
    %v1781 = vmul.f32 %v1195, %v1717
    %v1782 = vmul.f32 %v1197, %v1718
    %v1783 = vmul.f32 %v1201, %v1719
    %v1784 = vmul.f32 %v1203, %v1720
    %v1785 = vmul.f32 %v1205, %v1721
    %v1786 = vmul.f32 %v1207, %v1722
    %v1787 = vmul.f32 %v1211, %v1723
    %v1788 = vmul.f32 %v1213, %v1724
    %v1789 = vmul.f32 %v1215, %v1725
    %v1790 = vmul.f32 %v1217, %v1726
    %v1791 = vmul.f32 %v1221, %v1727
    %v1792 = vmul.f32 %v1223, %v1728
    %v1793 = vmul.f32 %v1225, %v1729
    %v1794 = vmul.f32 %v1227, %v1730
    %v1795 = vmul.f32 %v1231, %v1731
    %v1796 = vmul.f32 %v1233, %v1732
    %v1797 = vmul.f32 %v1235, %v1733
    %v1798 = vmul.f32 %v1237, %v1734
    %v1799 = vmul.f32 %v1241, %v1735
    %v1800 = vmul.f32 %v1243, %v1736
    %v1801 = vmul.f32 %v1245, %v1737
    %v1802 = vmul.f32 %v1247, %v1738
    %v1803 = vmul.f32 %v1251, %v1739
    %v1804 = vmul.f32 %v1253, %v1740
    %v1805 = vmul.f32 %v1255, %v1741
    %v1806 = vmul.f32 %v1257, %v1742
    %v1807 = vmul.f32 %v1294, %v1743
    %v1808 = vmul.f32 %v1296, %v1744
    %v1809 = vmul.f32 %v1298, %v1745
    %v1810 = vmul.f32 %v1300, %v1746
    %v1811 = vmul.f32 %v1304, %v1747
    %v1812 = vmul.f32 %v1306, %v1748
    %v1813 = vmul.f32 %v1308, %v1749
    %v1814 = vmul.f32 %v1310, %v1750
    %v1815 = vmul.f32 %v1314, %v1751
    %v1816 = vmul.f32 %v1316, %v1752
    %v1817 = vmul.f32 %v1318, %v1753
    %v1818 = vmul.f32 %v1320, %v1754
    %v1819 = vmul.f32 %v1324, %v1755
    %v1820 = vmul.f32 %v1326, %v1756
    %v1821 = vmul.f32 %v1328, %v1757
    %v1822 = vmul.f32 %v1330, %v1758
    %v1823 = vmul.f32 %v1334, %v1759
    %v1824 = vmul.f32 %v1336, %v1760
    %v1825 = vmul.f32 %v1338, %v1761
    %v1826 = vmul.f32 %v1340, %v1762
    %v1827 = vmul.f32 %v1344, %v1763
    %v1828 = vmul.f32 %v1346, %v1764
    %v1829 = vmul.f32 %v1348, %v1765
    %v1830 = vmul.f32 %v1350, %v1766
    %v1831 = vmul.f32 %v1354, %v1767
    %v1832 = vmul.f32 %v1356, %v1768
    %v1833 = vmul.f32 %v1358, %v1769
    %v1834 = vmul.f32 %v1360, %v1770
    %v1835 = vmul.f32 %v1364, %v1771
    %v1836 = vmul.f32 %v1366, %v1772
    %v1837 = vmul.f32 %v1368, %v1773
    %v1838 = vmul.f32 %v1370, %v1774
    %v1839 = vadd.f32 %v1775, %v1807
    %v1840 = vadd.f32 %v1776, %v1808
    %v1841 = vadd.f32 %v1777, %v1809
    %v1842 = vadd.f32 %v1778, %v1810
    %v1843 = vadd.f32 %v1779, %v1811
    %v1844 = vadd.f32 %v1780, %v1812
    %v1845 = vadd.f32 %v1781, %v1813
    %v1846 = vadd.f32 %v1782, %v1814
    %v1847 = vadd.f32 %v1783, %v1815
    %v1848 = vadd.f32 %v1784, %v1816
    %v1849 = vadd.f32 %v1785, %v1817
    %v1850 = vadd.f32 %v1786, %v1818
    %v1851 = vadd.f32 %v1787, %v1819
    %v1852 = vadd.f32 %v1788, %v1820
    %v1853 = vadd.f32 %v1789, %v1821
    %v1854 = vadd.f32 %v1790, %v1822
    %v1855 = vadd.f32 %v1791, %v1823
    %v1856 = vadd.f32 %v1792, %v1824
    %v1857 = vadd.f32 %v1793, %v1825
    %v1858 = vadd.f32 %v1794, %v1826
    %v1859 = vadd.f32 %v1795, %v1827
    %v1860 = vadd.f32 %v1796, %v1828
    %v1861 = vadd.f32 %v1797, %v1829
    %v1862 = vadd.f32 %v1798, %v1830
    %v1863 = vadd.f32 %v1799, %v1831
    %v1864 = vadd.f32 %v1800, %v1832
    %v1865 = vadd.f32 %v1801, %v1833
    %v1866 = vadd.f32 %v1802, %v1834
    %v1867 = vadd.f32 %v1803, %v1835
    %v1868 = vadd.f32 %v1804, %v1836
    %v1869 = vadd.f32 %v1805, %v1837
    %v1870 = vadd.f32 %v1806, %v1838
    %v1871 = vpack.c.bf16 %v1841, %v1839
    %v1872 = vpack.c.bf16 %v1842, %v1840
    %v1873 = vpack.c.bf16 %v1845, %v1843
    %v1874 = vpack.c.bf16 %v1846, %v1844
    %v1875 = vpack.c.bf16 %v1849, %v1847
    %v1876 = vpack.c.bf16 %v1850, %v1848
    %v1877 = vpack.c.bf16 %v1853, %v1851
    %v1878 = vpack.c.bf16 %v1854, %v1852
    %v1879 = vpack.c.bf16 %v1857, %v1855
    %v1880 = vpack.c.bf16 %v1858, %v1856
    %v1881 = vpack.c.bf16 %v1861, %v1859
    %v1882 = vpack.c.bf16 %v1862, %v1860
    %v1883 = vpack.c.bf16 %v1865, %v1863
    %v1884 = vpack.c.bf16 %v1866, %v1864
    %v1885 = vpack.c.bf16 %v1869, %v1867
    %v1886 = vpack.c.bf16 %v1870, %v1868
    %v1887 = vmul.f32 %v1407, %v1711
    %v1888 = vmul.f32 %v1409, %v1712
    %v1889 = vmul.f32 %v1411, %v1713
    %v1890 = vmul.f32 %v1413, %v1714
    %v1891 = vmul.f32 %v1417, %v1715
    %v1892 = vmul.f32 %v1419, %v1716
    %v1893 = vmul.f32 %v1421, %v1717
    %v1894 = vmul.f32 %v1423, %v1718
    %v1895 = vmul.f32 %v1427, %v1719
    %v1896 = vmul.f32 %v1429, %v1720
    %v1897 = vmul.f32 %v1431, %v1721
    %v1898 = vmul.f32 %v1433, %v1722
    %v1899 = vmul.f32 %v1437, %v1723
    %v1900 = vmul.f32 %v1439, %v1724
    %v1901 = vmul.f32 %v1441, %v1725
    %v1902 = vmul.f32 %v1443, %v1726
    %v1903 = vmul.f32 %v1447, %v1727
    %v1904 = vmul.f32 %v1449, %v1728
    %v1905 = vmul.f32 %v1451, %v1729
    %v1906 = vmul.f32 %v1453, %v1730
    %v1907 = vmul.f32 %v1457, %v1731
    %v1908 = vmul.f32 %v1459, %v1732
    %v1909 = vmul.f32 %v1461, %v1733
    %v1910 = vmul.f32 %v1463, %v1734
    %v1911 = vmul.f32 %v1467, %v1735
    %v1912 = vmul.f32 %v1469, %v1736
    %v1913 = vmul.f32 %v1471, %v1737
    %v1914 = vmul.f32 %v1473, %v1738
    %v1915 = vmul.f32 %v1477, %v1739
    %v1916 = vmul.f32 %v1479, %v1740
    %v1917 = vmul.f32 %v1481, %v1741
    %v1918 = vmul.f32 %v1483, %v1742
    %v1919 = vmul.f32 %v1520, %v1743
    %v1920 = vmul.f32 %v1522, %v1744
    %v1921 = vmul.f32 %v1524, %v1745
    %v1922 = vmul.f32 %v1526, %v1746
    %v1923 = vmul.f32 %v1530, %v1747
    %v1924 = vmul.f32 %v1532, %v1748
    %v1925 = vmul.f32 %v1534, %v1749
    %v1926 = vmul.f32 %v1536, %v1750
    %v1927 = vmul.f32 %v1540, %v1751
    %v1928 = vmul.f32 %v1542, %v1752
    %v1929 = vmul.f32 %v1544, %v1753
    %v1930 = vmul.f32 %v1546, %v1754
    %v1931 = vmul.f32 %v1550, %v1755
    %v1932 = vmul.f32 %v1552, %v1756
    %v1933 = vmul.f32 %v1554, %v1757
    %v1934 = vmul.f32 %v1556, %v1758
    %v1935 = vmul.f32 %v1560, %v1759
    %v1936 = vmul.f32 %v1562, %v1760
    %v1937 = vmul.f32 %v1564, %v1761
    %v1938 = vmul.f32 %v1566, %v1762
    %v1939 = vmul.f32 %v1570, %v1763
    %v1940 = vmul.f32 %v1572, %v1764
    %v1941 = vmul.f32 %v1574, %v1765
    %v1942 = vmul.f32 %v1576, %v1766
    %v1943 = vmul.f32 %v1580, %v1767
    %v1944 = vmul.f32 %v1582, %v1768
    %v1945 = vmul.f32 %v1584, %v1769
    %v1946 = vmul.f32 %v1586, %v1770
    %v1947 = vmul.f32 %v1590, %v1771
    %v1948 = vmul.f32 %v1592, %v1772
    %v1949 = vmul.f32 %v1594, %v1773
    %v1950 = vmul.f32 %v1596, %v1774
    %v1951 = vadd.f32 %v1887, %v1919
    %v1952 = vadd.f32 %v1888, %v1920
    %v1953 = vadd.f32 %v1889, %v1921
    %v1954 = vadd.f32 %v1890, %v1922
    %v1955 = vadd.f32 %v1891, %v1923
    %v1956 = vadd.f32 %v1892, %v1924
    %v1957 = vadd.f32 %v1893, %v1925
    %v1958 = vadd.f32 %v1894, %v1926
    %v1959 = vadd.f32 %v1895, %v1927
    %v1960 = vadd.f32 %v1896, %v1928
    %v1961 = vadd.f32 %v1897, %v1929
    %v1962 = vadd.f32 %v1898, %v1930
    %v1963 = vadd.f32 %v1899, %v1931
    %v1964 = vadd.f32 %v1900, %v1932
    %v1965 = vadd.f32 %v1901, %v1933
    %v1966 = vadd.f32 %v1902, %v1934
    %v1967 = vadd.f32 %v1903, %v1935
    %v1968 = vadd.f32 %v1904, %v1936
    %v1969 = vadd.f32 %v1905, %v1937
    %v1970 = vadd.f32 %v1906, %v1938
    %v1971 = vadd.f32 %v1907, %v1939
    %v1972 = vadd.f32 %v1908, %v1940
    %v1973 = vadd.f32 %v1909, %v1941
    %v1974 = vadd.f32 %v1910, %v1942
    %v1975 = vadd.f32 %v1911, %v1943
    %v1976 = vadd.f32 %v1912, %v1944
    %v1977 = vadd.f32 %v1913, %v1945
    %v1978 = vadd.f32 %v1914, %v1946
    %v1979 = vadd.f32 %v1915, %v1947
    %v1980 = vadd.f32 %v1916, %v1948
    %v1981 = vadd.f32 %v1917, %v1949
    %v1982 = vadd.f32 %v1918, %v1950
    %v1983 = vpack.c.bf16 %v1953, %v1951
    %v1984 = vpack.c.bf16 %v1954, %v1952
    %v1985 = vpack.c.bf16 %v1957, %v1955
    %v1986 = vpack.c.bf16 %v1958, %v1956
    %v1987 = vpack.c.bf16 %v1961, %v1959
    %v1988 = vpack.c.bf16 %v1962, %v1960
    %v1989 = vpack.c.bf16 %v1965, %v1963
    %v1990 = vpack.c.bf16 %v1966, %v1964
    %v1991 = vpack.c.bf16 %v1969, %v1967
    %v1992 = vpack.c.bf16 %v1970, %v1968
    %v1993 = vpack.c.bf16 %v1973, %v1971
    %v1994 = vpack.c.bf16 %v1974, %v1972
    %v1995 = vpack.c.bf16 %v1977, %v1975
    %v1996 = vpack.c.bf16 %v1978, %v1976
    %v1997 = vpack.c.bf16 %v1981, %v1979
    %v1998 = vpack.c.bf16 %v1982, %v1980
    %v1999 = vpack.c.bf16 %v1637, %v1633
    %v2000 = vpack.c.bf16 %v1639, %v1635
    %v2001 = vpack.c.bf16 %v1647, %v1643
    %v2002 = vpack.c.bf16 %v1649, %v1645
    %v2003 = vpack.c.bf16 %v1657, %v1653
    %v2004 = vpack.c.bf16 %v1659, %v1655
    %v2005 = vpack.c.bf16 %v1667, %v1663
    %v2006 = vpack.c.bf16 %v1669, %v1665
    %v2007 = vpack.c.bf16 %v1677, %v1673
    %v2008 = vpack.c.bf16 %v1679, %v1675
    %v2009 = vpack.c.bf16 %v1687, %v1683
    %v2010 = vpack.c.bf16 %v1689, %v1685
    %v2011 = vpack.c.bf16 %v1697, %v1693
    %v2012 = vpack.c.bf16 %v1699, %v1695
    %v2013 = vpack.c.bf16 %v1707, %v1703
    %v2014 = vpack.c.bf16 %v1709, %v1705
    %v2015 = vlaneseq
    %v2016 = vshrl.u32 %v2015, 7
    %v2017 = vadd.s32 %v2016, 8
    %v2018 = vadd.s32 %v2016, 16
    %v2019 = vadd.s32 %v2016, 24
    %v2020 = vadd.s32 %v2016, 32
    %v2021 = vadd.s32 %v2016, 40
    %v2022 = vadd.s32 %v2016, 48
    %v2023 = vadd.s32 %v2016, 56
    %v2024 = vlaneseq
    %v2025 = vand.u32 %v2024, 127
    %vm2026 = vcmp.le.s32.totalorder %v2025, %v2016
    %vm2027 = vcmp.le.s32.totalorder %v2025, %v2017
    %vm2028 = vcmp.le.s32.totalorder %v2025, %v2018
    %vm2029 = vcmp.le.s32.totalorder %v2025, %v2019
    %vm2030 = vcmp.le.s32.totalorder %v2025, %v2020
    %vm2031 = vcmp.le.s32.totalorder %v2025, %v2021
    %vm2032 = vcmp.le.s32.totalorder %v2025, %v2022
    %vm2033 = vcmp.le.s32.totalorder %v2025, %v2023
    %vm2034 = vcmask 523264
    %v2036 = vsel %vm2034, %v1871, 0
    %v2039 = vsel %vm2034, %v1873, 0
    %v2042 = vsel %vm2034, %v1875, 0
    %v2045 = vsel %vm2034, %v1877, 0
    %v2048 = vsel %vm2034, %v1983, 0
    %v2051 = vsel %vm2034, %v1985, 0
    %v2054 = vsel %vm2034, %v1987, 0
    %v2057 = vsel %vm2034, %v1989, 0
    %2059 = vmatprep.subr.bf16.mxu0 0
    %2060 = vmatpush1.bf16.xpose.msra.mxu0 0
    %2061 = vmatprep.subr.bf16.mxu0 0
    %2062 = vmatpush1.bf16.xpose.msra.mxu0 0
    %2063 = vmatprep.subr.bf16.mxu0 0
    %2064 = vmatpush1.bf16.xpose.msra.mxu0 0
    %2065 = vmatprep.subr.bf16.mxu0 0
    %2066 = vmatpush1.bf16.xpose.msra.mxu0 0
    %2067 = vmatprep.subr.bf16.mxu0 0
    %2068 = vmatpush1.bf16.xpose.msra.mxu0 %v2057
    %2069 = vmatprep.subr.bf16.mxu0 0
    %2070 = vmatpush1.bf16.xpose.msra.mxu0 %v2054
    %2071 = vmatprep.subr.bf16.mxu0 0
    %2072 = vmatpush1.bf16.xpose.msra.mxu0 %v2051
    %2073 = vmatprep.subr.bf16.mxu0 0
    %2074 = vmatpush1.bf16.xpose.msra.mxu0 %v2048
    %2075 = vmatprep.subr.bf16.mxu0 0
    %2076 = vmatpush2.bf16.xpose.msra.mxu0 0
    %2077 = vmatprep.subr.bf16.mxu0 0
    %2078 = vmatpush2.bf16.xpose.msra.mxu0 0
    %2079 = vmatprep.subr.bf16.mxu0 0
    %2080 = vmatpush2.bf16.xpose.msra.mxu0 0
    %2081 = vmatprep.subr.bf16.mxu0 0
    %2082 = vmatpush2.bf16.xpose.msra.mxu0 0
    %2083 = vmatprep.subr.bf16.mxu0 0
    %2084 = vmatpush2.bf16.xpose.msra.mxu0 0
    %2085 = vmatprep.subr.bf16.mxu0 0
    %2086 = vmatpush2.bf16.xpose.msra.mxu0 0
    %2087 = vmatprep.subr.bf16.mxu0 0
    %2088 = vmatpush2.bf16.xpose.msra.mxu0 0
    %2089 = vmatprep.subr.bf16.mxu0 0
    %2090 = vmatpush2.bf16.xpose.msra.mxu0 0
    %2091 = vmatprep.mubr.bf16.mxu0 0
    %2092 = vmatmul.mubr.bf16.gmra.mxu0 %v2036
    %v2093 = vpop.f32.mrf.mxu0
    %v2094 = vadd.f32 0.0, %v2093
    %v2095 = vpop.f32.mrf.mxu0
    %v2096 = vpop.f32.mrf.mxu0
    %v2097 = vadd.f32 0.0, %v2096
    %v2098 = vpop.f32.mrf.mxu0
    %2099 = vmatprep.mubr.bf16.mxu0 0
    %2100 = vmatmul.mubr.bf16.gmra.mxu0 %v2039
    %v2101 = vpop.f32.mrf.mxu0
    %v2102 = vadd.f32 0.0, %v2101
    %v2103 = vpop.f32.mrf.mxu0
    %v2104 = vpop.f32.mrf.mxu0
    %v2105 = vadd.f32 0.0, %v2104
    %v2106 = vpop.f32.mrf.mxu0
    %2107 = vmatprep.mubr.bf16.mxu0 0
    %2108 = vmatmul.mubr.bf16.gmra.mxu0 %v2042
    %v2109 = vpop.f32.mrf.mxu0
    %v2110 = vadd.f32 0.0, %v2109
    %v2111 = vpop.f32.mrf.mxu0
    %v2112 = vpop.f32.mrf.mxu0
    %v2113 = vadd.f32 0.0, %v2112
    %v2114 = vpop.f32.mrf.mxu0
    %2115 = vmatprep.mubr.bf16.mxu0 0
    %2116 = vmatmul.mubr.bf16.gmra.mxu0 %v2045
    %v2117 = vpop.f32.mrf.mxu0
    %v2118 = vadd.f32 0.0, %v2117
    %v2119 = vpop.f32.mrf.mxu0
    %v2120 = vpop.f32.mrf.mxu0
    %v2121 = vadd.f32 0.0, %v2120
    %v2122 = vpop.f32.mrf.mxu0
    %2123 = vdwg.mxu0
    %v2124 = vsel %vm2026, %v2094, -1e+30
    %v2125 = vsel %vm2027, %v2097, -1e+30
    %v2126 = vsel %vm2028, %v2102, -1e+30
    %v2127 = vsel %vm2029, %v2105, -1e+30
    %v2128 = vsel %vm2030, %v2110, -1e+30
    %v2129 = vsel %vm2031, %v2113, -1e+30
    %v2130 = vsel %vm2032, %v2118, -1e+30
    %v2131 = vsel %vm2033, %v2121, -1e+30
    %v2132 = vsel %vm2034, %v2124, -inf
    %2133 = vmax.xlane.f32.xlu0 %v2132
    %v2134 = vpop.xlane.xlu0 %2133
    %v2135 = vsel %vm2034, %v2125, -inf
    %2136 = vmax.xlane.f32.xlu0 %v2135
    %v2137 = vpop.xlane.xlu0 %2136
    %v2138 = vsel %vm2034, %v2126, -inf
    %2139 = vmax.xlane.f32.xlu0 %v2138
    %v2140 = vpop.xlane.xlu0 %2139
    %v2141 = vsel %vm2034, %v2127, -inf
    %2142 = vmax.xlane.f32.xlu0 %v2141
    %v2143 = vpop.xlane.xlu0 %2142
    %v2144 = vsel %vm2034, %v2128, -inf
    %2145 = vmax.xlane.f32.xlu0 %v2144
    %v2146 = vpop.xlane.xlu0 %2145
    %v2147 = vsel %vm2034, %v2129, -inf
    %2148 = vmax.xlane.f32.xlu0 %v2147
    %v2149 = vpop.xlane.xlu0 %2148
    %v2150 = vsel %vm2034, %v2130, -inf
    %2151 = vmax.xlane.f32.xlu0 %v2150
    %v2152 = vpop.xlane.xlu0 %2151
    %v2153 = vsel %vm2034, %v2131, -inf
    %2154 = vmax.xlane.f32.xlu0 %v2153
    %v2155 = vpop.xlane.xlu0 %2154
    %v2156 = vsub.f32 %v2124, %v2134
    %v2157 = vsub.f32 %v2125, %v2137
    %v2158 = vsub.f32 %v2126, %v2140
    %v2159 = vsub.f32 %v2127, %v2143
    %v2160 = vsub.f32 %v2128, %v2146
    %v2161 = vsub.f32 %v2129, %v2149
    %v2162 = vsub.f32 %v2130, %v2152
    %v2163 = vsub.f32 %v2131, %v2155
    %v2164 = vmul.f32 %v2156, 1.442695
    %v2165 = vpow.pop %v2164
    %v2166 = vmul.f32 %v2157, 1.442695
    %v2167 = vpow.pop %v2166
    %v2168 = vmul.f32 %v2158, 1.442695
    %v2169 = vpow.pop %v2168
    %v2170 = vmul.f32 %v2159, 1.442695
    %v2171 = vpow.pop %v2170
    %v2172 = vmul.f32 %v2160, 1.442695
    %v2173 = vpow.pop %v2172
    %v2174 = vmul.f32 %v2161, 1.442695
    %v2175 = vpow.pop %v2174
    %v2176 = vmul.f32 %v2162, 1.442695
    %v2177 = vpow.pop %v2176
    %v2178 = vmul.f32 %v2163, 1.442695
    %v2179 = vpow.pop %v2178
    %v2180 = vsel %vm2034, %v2165, 0.0
    %2181 = vadd.xlane.f32.xlu0 %v2180
    %v2182 = vpop.xlane.xlu0 %2181
    %v2183 = vsel %vm2034, %v2167, 0.0
    %2184 = vadd.xlane.f32.xlu0 %v2183
    %v2185 = vpop.xlane.xlu0 %2184
    %v2186 = vsel %vm2034, %v2169, 0.0
    %2187 = vadd.xlane.f32.xlu0 %v2186
    %v2188 = vpop.xlane.xlu0 %2187
    %v2189 = vsel %vm2034, %v2171, 0.0
    %2190 = vadd.xlane.f32.xlu0 %v2189
    %v2191 = vpop.xlane.xlu0 %2190
    %v2192 = vsel %vm2034, %v2173, 0.0
    %2193 = vadd.xlane.f32.xlu0 %v2192
    %v2194 = vpop.xlane.xlu0 %2193
    %v2195 = vsel %vm2034, %v2175, 0.0
    %2196 = vadd.xlane.f32.xlu0 %v2195
    %v2197 = vpop.xlane.xlu0 %2196
    %v2198 = vsel %vm2034, %v2177, 0.0
    %2199 = vadd.xlane.f32.xlu0 %v2198
    %v2200 = vpop.xlane.xlu0 %2199
    %v2201 = vsel %vm2034, %v2179, 0.0
    %2202 = vadd.xlane.f32.xlu0 %v2201
    %v2203 = vpop.xlane.xlu0 %2202
    %v2204 = vpack.c.bf16 %v2167, %v2165
    %v2205 = vpack.c.bf16 %v2171, %v2169
    %v2206 = vpack.c.bf16 %v2175, %v2173
    %v2207 = vpack.c.bf16 %v2179, %v2177
    %v2209 = vsel %vm2034, %v2204, 0
    %v2212 = vsel %vm2034, %v2205, 0
    %v2215 = vsel %vm2034, %v2206, 0
    %v2218 = vsel %vm2034, %v2207, 0
    %2220 = vmatprep.subr.bf16.mxu0 0
    %2221 = vmatpush1.bf16.msra.mxu0 0
    %2222 = vmatprep.subr.bf16.mxu0 0
    %2223 = vmatpush1.bf16.msra.mxu0 0
    %2224 = vmatprep.subr.bf16.mxu0 0
    %2225 = vmatpush1.bf16.msra.mxu0 0
    %2226 = vmatprep.subr.bf16.mxu0 0
    %2227 = vmatpush1.bf16.msra.mxu0 0
    %2228 = vmatprep.subr.bf16.mxu0 0
    %2229 = vmatpush1.bf16.msra.mxu0 %v2005
    %2230 = vmatprep.subr.bf16.mxu0 0
    %2231 = vmatpush1.bf16.msra.mxu0 %v2003
    %2232 = vmatprep.subr.bf16.mxu0 0
    %2233 = vmatpush1.bf16.msra.mxu0 %v2001
    %2234 = vmatprep.subr.bf16.mxu0 0
    %2235 = vmatpush1.bf16.msra.mxu0 %v1999
    %2236 = vmatprep.subr.bf16.mxu0 0
    %2237 = vmatpush2.bf16.msra.mxu0 0
    %2238 = vmatprep.subr.bf16.mxu0 0
    %2239 = vmatpush2.bf16.msra.mxu0 0
    %2240 = vmatprep.subr.bf16.mxu0 0
    %2241 = vmatpush2.bf16.msra.mxu0 0
    %2242 = vmatprep.subr.bf16.mxu0 0
    %2243 = vmatpush2.bf16.msra.mxu0 0
    %2244 = vmatprep.subr.bf16.mxu0 0
    %2245 = vmatpush2.bf16.msra.mxu0 0
    %2246 = vmatprep.subr.bf16.mxu0 0
    %2247 = vmatpush2.bf16.msra.mxu0 0
    %2248 = vmatprep.subr.bf16.mxu0 0
    %2249 = vmatpush2.bf16.msra.mxu0 0
    %2250 = vmatprep.subr.bf16.mxu0 0
    %2251 = vmatpush2.bf16.msra.mxu0 0
    %2252 = vmatprep.mubr.bf16.mxu0 0
    %2253 = vmatmul.mubr.bf16.gmra.mxu0 %v2209
    %v2254 = vpop.f32.mrf.mxu0
    %v2255 = vadd.f32 0.0, %v2254
    %v2256 = vpop.f32.mrf.mxu0
    %v2257 = vpop.f32.mrf.mxu0
    %v2258 = vadd.f32 0.0, %v2257
    %v2259 = vpop.f32.mrf.mxu0
    %2260 = vmatprep.mubr.bf16.mxu0 0
    %2261 = vmatmul.mubr.bf16.gmra.mxu0 %v2212
    %v2262 = vpop.f32.mrf.mxu0
    %v2263 = vadd.f32 0.0, %v2262
    %v2264 = vpop.f32.mrf.mxu0
    %v2265 = vpop.f32.mrf.mxu0
    %v2266 = vadd.f32 0.0, %v2265
    %v2267 = vpop.f32.mrf.mxu0
    %2268 = vmatprep.mubr.bf16.mxu0 0
    %2269 = vmatmul.mubr.bf16.gmra.mxu0 %v2215
    %v2270 = vpop.f32.mrf.mxu0
    %v2271 = vadd.f32 0.0, %v2270
    %v2272 = vpop.f32.mrf.mxu0
    %v2273 = vpop.f32.mrf.mxu0
    %v2274 = vadd.f32 0.0, %v2273
    %v2275 = vpop.f32.mrf.mxu0
    %2276 = vmatprep.mubr.bf16.mxu0 0
    %2277 = vmatmul.mubr.bf16.gmra.mxu0 %v2218
    %v2278 = vpop.f32.mrf.mxu0
    %v2279 = vadd.f32 0.0, %v2278
    %v2280 = vpop.f32.mrf.mxu0
    %v2281 = vpop.f32.mrf.mxu0
    %v2282 = vadd.f32 0.0, %v2281
    %v2283 = vpop.f32.mrf.mxu0
    %2284 = vdwg.mxu0
    %v2285 = vrcp.pop %v2182
    %v2286 = vrcp.pop %v2185
    %v2287 = vrcp.pop %v2188
    %v2288 = vrcp.pop %v2191
    %v2289 = vrcp.pop %v2194
    %v2290 = vrcp.pop %v2197
    %v2291 = vrcp.pop %v2200
    %v2292 = vrcp.pop %v2203
    %v2293 = vmul.f32 %v2255, %v2285
    %v2294 = vmul.f32 %v2258, %v2286
    %v2295 = vmul.f32 %v2263, %v2287
    %v2296 = vmul.f32 %v2266, %v2288
    %v2297 = vmul.f32 %v2271, %v2289
    %v2298 = vmul.f32 %v2274, %v2290
    %v2299 = vmul.f32 %v2279, %v2291
    %v2300 = vmul.f32 %v2282, %v2292
    %2305 = vrot.lane.b32.xlu0 %v1871, 64
    %v2306 = vpop.permute.xlu0 %2305
    %2307 = vrot.lane.b32.xlu0 %v1873, 64
    %v2308 = vpop.permute.xlu0 %2307
    %2309 = vrot.lane.b32.xlu0 %v1875, 64
    %v2310 = vpop.permute.xlu0 %2309
    %2311 = vrot.lane.b32.xlu0 %v1877, 64
    %v2312 = vpop.permute.xlu0 %2311
    %2317 = vrot.lane.b32.xlu0 %v1983, 64
    %v2318 = vpop.permute.xlu0 %2317
    %2319 = vrot.lane.b32.xlu0 %v1985, 64
    %v2320 = vpop.permute.xlu0 %2319
    %2321 = vrot.lane.b32.xlu0 %v1987, 64
    %v2322 = vpop.permute.xlu0 %2321
    %2323 = vrot.lane.b32.xlu0 %v1989, 64
    %v2324 = vpop.permute.xlu0 %2323
    %v2326 = vsel %vm2034, %v2306, 0
    %v2329 = vsel %vm2034, %v2308, 0
    %v2332 = vsel %vm2034, %v2310, 0
    %v2335 = vsel %vm2034, %v2312, 0
    %v2338 = vsel %vm2034, %v2318, 0
    %v2341 = vsel %vm2034, %v2320, 0
    %v2344 = vsel %vm2034, %v2322, 0
    %v2347 = vsel %vm2034, %v2324, 0
    %2349 = vmatprep.subr.bf16.mxu0 0
    %2350 = vmatpush1.bf16.xpose.msra.mxu0 0
    %2351 = vmatprep.subr.bf16.mxu0 0
    %2352 = vmatpush1.bf16.xpose.msra.mxu0 0
    %2353 = vmatprep.subr.bf16.mxu0 0
    %2354 = vmatpush1.bf16.xpose.msra.mxu0 0
    %2355 = vmatprep.subr.bf16.mxu0 0
    %2356 = vmatpush1.bf16.xpose.msra.mxu0 0
    %2357 = vmatprep.subr.bf16.mxu0 0
    %2358 = vmatpush1.bf16.xpose.msra.mxu0 %v2347
    %2359 = vmatprep.subr.bf16.mxu0 0
    %2360 = vmatpush1.bf16.xpose.msra.mxu0 %v2344
    %2361 = vmatprep.subr.bf16.mxu0 0
    %2362 = vmatpush1.bf16.xpose.msra.mxu0 %v2341
    %2363 = vmatprep.subr.bf16.mxu0 0
    %2364 = vmatpush1.bf16.xpose.msra.mxu0 %v2338
    %2365 = vmatprep.subr.bf16.mxu0 0
    %2366 = vmatpush2.bf16.xpose.msra.mxu0 0
    %2367 = vmatprep.subr.bf16.mxu0 0
    %2368 = vmatpush2.bf16.xpose.msra.mxu0 0
    %2369 = vmatprep.subr.bf16.mxu0 0
    %2370 = vmatpush2.bf16.xpose.msra.mxu0 0
    %2371 = vmatprep.subr.bf16.mxu0 0
    %2372 = vmatpush2.bf16.xpose.msra.mxu0 0
    %2373 = vmatprep.subr.bf16.mxu0 0
    %2374 = vmatpush2.bf16.xpose.msra.mxu0 0
    %2375 = vmatprep.subr.bf16.mxu0 0
    %2376 = vmatpush2.bf16.xpose.msra.mxu0 0
    %2377 = vmatprep.subr.bf16.mxu0 0
    %2378 = vmatpush2.bf16.xpose.msra.mxu0 0
    %2379 = vmatprep.subr.bf16.mxu0 0
    %2380 = vmatpush2.bf16.xpose.msra.mxu0 0
    %2381 = vmatprep.mubr.bf16.mxu0 0
    %2382 = vmatmul.mubr.bf16.gmra.mxu0 %v2326
    %v2383 = vpop.f32.mrf.mxu0
    %v2384 = vadd.f32 0.0, %v2383
    %v2385 = vpop.f32.mrf.mxu0
    %v2386 = vpop.f32.mrf.mxu0
    %v2387 = vadd.f32 0.0, %v2386
    %v2388 = vpop.f32.mrf.mxu0
    %2389 = vmatprep.mubr.bf16.mxu0 0
    %2390 = vmatmul.mubr.bf16.gmra.mxu0 %v2329
    %v2391 = vpop.f32.mrf.mxu0
    %v2392 = vadd.f32 0.0, %v2391
    %v2393 = vpop.f32.mrf.mxu0
    %v2394 = vpop.f32.mrf.mxu0
    %v2395 = vadd.f32 0.0, %v2394
    %v2396 = vpop.f32.mrf.mxu0
    %2397 = vmatprep.mubr.bf16.mxu0 0
    %2398 = vmatmul.mubr.bf16.gmra.mxu0 %v2332
    %v2399 = vpop.f32.mrf.mxu0
    %v2400 = vadd.f32 0.0, %v2399
    %v2401 = vpop.f32.mrf.mxu0
    %v2402 = vpop.f32.mrf.mxu0
    %v2403 = vadd.f32 0.0, %v2402
    %v2404 = vpop.f32.mrf.mxu0
    %2405 = vmatprep.mubr.bf16.mxu0 0
    %2406 = vmatmul.mubr.bf16.gmra.mxu0 %v2335
    %v2407 = vpop.f32.mrf.mxu0
    %v2408 = vadd.f32 0.0, %v2407
    %v2409 = vpop.f32.mrf.mxu0
    %v2410 = vpop.f32.mrf.mxu0
    %v2411 = vadd.f32 0.0, %v2410
    %v2412 = vpop.f32.mrf.mxu0
    %2413 = vdwg.mxu0
    %v2414 = vsel %vm2026, %v2384, -1e+30
    %v2415 = vsel %vm2027, %v2387, -1e+30
    %v2416 = vsel %vm2028, %v2392, -1e+30
    %v2417 = vsel %vm2029, %v2395, -1e+30
    %v2418 = vsel %vm2030, %v2400, -1e+30
    %v2419 = vsel %vm2031, %v2403, -1e+30
    %v2420 = vsel %vm2032, %v2408, -1e+30
    %v2421 = vsel %vm2033, %v2411, -1e+30
    %v2422 = vsel %vm2034, %v2414, -inf
    %2423 = vmax.xlane.f32.xlu0 %v2422
    %v2424 = vpop.xlane.xlu0 %2423
    %v2425 = vsel %vm2034, %v2415, -inf
    %2426 = vmax.xlane.f32.xlu0 %v2425
    %v2427 = vpop.xlane.xlu0 %2426
    %v2428 = vsel %vm2034, %v2416, -inf
    %2429 = vmax.xlane.f32.xlu0 %v2428
    %v2430 = vpop.xlane.xlu0 %2429
    %v2431 = vsel %vm2034, %v2417, -inf
    %2432 = vmax.xlane.f32.xlu0 %v2431
    %v2433 = vpop.xlane.xlu0 %2432
    %v2434 = vsel %vm2034, %v2418, -inf
    %2435 = vmax.xlane.f32.xlu0 %v2434
    %v2436 = vpop.xlane.xlu0 %2435
    %v2437 = vsel %vm2034, %v2419, -inf
    %2438 = vmax.xlane.f32.xlu0 %v2437
    %v2439 = vpop.xlane.xlu0 %2438
    %v2440 = vsel %vm2034, %v2420, -inf
    %2441 = vmax.xlane.f32.xlu0 %v2440
    %v2442 = vpop.xlane.xlu0 %2441
    %v2443 = vsel %vm2034, %v2421, -inf
    %2444 = vmax.xlane.f32.xlu0 %v2443
    %v2445 = vpop.xlane.xlu0 %2444
    %v2446 = vsub.f32 %v2414, %v2424
    %v2447 = vsub.f32 %v2415, %v2427
    %v2448 = vsub.f32 %v2416, %v2430
    %v2449 = vsub.f32 %v2417, %v2433
    %v2450 = vsub.f32 %v2418, %v2436
    %v2451 = vsub.f32 %v2419, %v2439
    %v2452 = vsub.f32 %v2420, %v2442
    %v2453 = vsub.f32 %v2421, %v2445
    %v2454 = vmul.f32 %v2446, 1.442695
    %v2455 = vpow.pop %v2454
    %v2456 = vmul.f32 %v2447, 1.442695
    %v2457 = vpow.pop %v2456
    %v2458 = vmul.f32 %v2448, 1.442695
    %v2459 = vpow.pop %v2458
    %v2460 = vmul.f32 %v2449, 1.442695
    %v2461 = vpow.pop %v2460
    %v2462 = vmul.f32 %v2450, 1.442695
    %v2463 = vpow.pop %v2462
    %v2464 = vmul.f32 %v2451, 1.442695
    %v2465 = vpow.pop %v2464
    %v2466 = vmul.f32 %v2452, 1.442695
    %v2467 = vpow.pop %v2466
    %v2468 = vmul.f32 %v2453, 1.442695
    %v2469 = vpow.pop %v2468
    %v2470 = vsel %vm2034, %v2455, 0.0
    %2471 = vadd.xlane.f32.xlu0 %v2470
    %v2472 = vpop.xlane.xlu0 %2471
    %v2473 = vsel %vm2034, %v2457, 0.0
    %2474 = vadd.xlane.f32.xlu0 %v2473
    %v2475 = vpop.xlane.xlu0 %2474
    %v2476 = vsel %vm2034, %v2459, 0.0
    %2477 = vadd.xlane.f32.xlu0 %v2476
    %v2478 = vpop.xlane.xlu0 %2477
    %v2479 = vsel %vm2034, %v2461, 0.0
    %2480 = vadd.xlane.f32.xlu0 %v2479
    %v2481 = vpop.xlane.xlu0 %2480
    %v2482 = vsel %vm2034, %v2463, 0.0
    %2483 = vadd.xlane.f32.xlu0 %v2482
    %v2484 = vpop.xlane.xlu0 %2483
    %v2485 = vsel %vm2034, %v2465, 0.0
    %2486 = vadd.xlane.f32.xlu0 %v2485
    %v2487 = vpop.xlane.xlu0 %2486
    %v2488 = vsel %vm2034, %v2467, 0.0
    %2489 = vadd.xlane.f32.xlu0 %v2488
    %v2490 = vpop.xlane.xlu0 %2489
    %v2491 = vsel %vm2034, %v2469, 0.0
    %2492 = vadd.xlane.f32.xlu0 %v2491
    %v2493 = vpop.xlane.xlu0 %2492
    %v2494 = vpack.c.bf16 %v2457, %v2455
    %v2495 = vpack.c.bf16 %v2461, %v2459
    %v2496 = vpack.c.bf16 %v2465, %v2463
    %v2497 = vpack.c.bf16 %v2469, %v2467
    %2502 = vrot.lane.b32.xlu0 %v1999, 64
    %v2503 = vpop.permute.xlu0 %2502
    %2504 = vrot.lane.b32.xlu0 %v2001, 64
    %v2505 = vpop.permute.xlu0 %2504
    %2506 = vrot.lane.b32.xlu0 %v2003, 64
    %v2507 = vpop.permute.xlu0 %2506
    %2508 = vrot.lane.b32.xlu0 %v2005, 64
    %v2509 = vpop.permute.xlu0 %2508
    %v2515 = vsel %vm2034, %v2494, 0
    %v2518 = vsel %vm2034, %v2495, 0
    %v2521 = vsel %vm2034, %v2496, 0
    %v2524 = vsel %vm2034, %v2497, 0
    %2526 = vmatprep.subr.bf16.mxu0 0
    %2527 = vmatpush1.bf16.msra.mxu0 0
    %2528 = vmatprep.subr.bf16.mxu0 0
    %2529 = vmatpush1.bf16.msra.mxu0 0
    %2530 = vmatprep.subr.bf16.mxu0 0
    %2531 = vmatpush1.bf16.msra.mxu0 0
    %2532 = vmatprep.subr.bf16.mxu0 0
    %2533 = vmatpush1.bf16.msra.mxu0 0
    %2534 = vmatprep.subr.bf16.mxu0 0
    %2535 = vmatpush1.bf16.msra.mxu0 %v2509
    %2536 = vmatprep.subr.bf16.mxu0 0
    %2537 = vmatpush1.bf16.msra.mxu0 %v2507
    %2538 = vmatprep.subr.bf16.mxu0 0
    %2539 = vmatpush1.bf16.msra.mxu0 %v2505
    %2540 = vmatprep.subr.bf16.mxu0 0
    %2541 = vmatpush1.bf16.msra.mxu0 %v2503
    %2542 = vmatprep.subr.bf16.mxu0 0
    %2543 = vmatpush2.bf16.msra.mxu0 0
    %2544 = vmatprep.subr.bf16.mxu0 0
    %2545 = vmatpush2.bf16.msra.mxu0 0
    %2546 = vmatprep.subr.bf16.mxu0 0
    %2547 = vmatpush2.bf16.msra.mxu0 0
    %2548 = vmatprep.subr.bf16.mxu0 0
    %2549 = vmatpush2.bf16.msra.mxu0 0
    %2550 = vmatprep.subr.bf16.mxu0 0
    %2551 = vmatpush2.bf16.msra.mxu0 0
    %2552 = vmatprep.subr.bf16.mxu0 0
    %2553 = vmatpush2.bf16.msra.mxu0 0
    %2554 = vmatprep.subr.bf16.mxu0 0
    %2555 = vmatpush2.bf16.msra.mxu0 0
    %2556 = vmatprep.subr.bf16.mxu0 0
    %2557 = vmatpush2.bf16.msra.mxu0 0
    %2558 = vmatprep.mubr.bf16.mxu0 0
    %2559 = vmatmul.mubr.bf16.gmra.mxu0 %v2515
    %v2560 = vpop.f32.mrf.mxu0
    %v2561 = vadd.f32 0.0, %v2560
    %v2562 = vpop.f32.mrf.mxu0
    %v2563 = vpop.f32.mrf.mxu0
    %v2564 = vadd.f32 0.0, %v2563
    %v2565 = vpop.f32.mrf.mxu0
    %2566 = vmatprep.mubr.bf16.mxu0 0
    %2567 = vmatmul.mubr.bf16.gmra.mxu0 %v2518
    %v2568 = vpop.f32.mrf.mxu0
    %v2569 = vadd.f32 0.0, %v2568
    %v2570 = vpop.f32.mrf.mxu0
    %v2571 = vpop.f32.mrf.mxu0
    %v2572 = vadd.f32 0.0, %v2571
    %v2573 = vpop.f32.mrf.mxu0
    %2574 = vmatprep.mubr.bf16.mxu0 0
    %2575 = vmatmul.mubr.bf16.gmra.mxu0 %v2521
    %v2576 = vpop.f32.mrf.mxu0
    %v2577 = vadd.f32 0.0, %v2576
    %v2578 = vpop.f32.mrf.mxu0
    %v2579 = vpop.f32.mrf.mxu0
    %v2580 = vadd.f32 0.0, %v2579
    %v2581 = vpop.f32.mrf.mxu0
    %2582 = vmatprep.mubr.bf16.mxu0 0
    %2583 = vmatmul.mubr.bf16.gmra.mxu0 %v2524
    %v2584 = vpop.f32.mrf.mxu0
    %v2585 = vadd.f32 0.0, %v2584
    %v2586 = vpop.f32.mrf.mxu0
    %v2587 = vpop.f32.mrf.mxu0
    %v2588 = vadd.f32 0.0, %v2587
    %v2589 = vpop.f32.mrf.mxu0
    %2590 = vdwg.mxu0
    %v2591 = vrcp.pop %v2472
    %v2592 = vrcp.pop %v2475
    %v2593 = vrcp.pop %v2478
    %v2594 = vrcp.pop %v2481
    %v2595 = vrcp.pop %v2484
    %v2596 = vrcp.pop %v2487
    %v2597 = vrcp.pop %v2490
    %v2598 = vrcp.pop %v2493
    %v2599 = vmul.f32 %v2561, %v2591
    %v2600 = vmul.f32 %v2564, %v2592
    %v2601 = vmul.f32 %v2569, %v2593
    %v2602 = vmul.f32 %v2572, %v2594
    %v2603 = vmul.f32 %v2577, %v2595
    %v2604 = vmul.f32 %v2580, %v2596
    %v2605 = vmul.f32 %v2585, %v2597
    %v2606 = vmul.f32 %v2588, %v2598
    %v2608 = vsel %vm2034, %v1872, 0
    %v2611 = vsel %vm2034, %v1874, 0
    %v2614 = vsel %vm2034, %v1876, 0
    %v2617 = vsel %vm2034, %v1878, 0
    %v2620 = vsel %vm2034, %v1984, 0
    %v2623 = vsel %vm2034, %v1986, 0
    %v2626 = vsel %vm2034, %v1988, 0
    %v2629 = vsel %vm2034, %v1990, 0
    %2631 = vmatprep.subr.bf16.mxu0 0
    %2632 = vmatpush1.bf16.xpose.msra.mxu0 0
    %2633 = vmatprep.subr.bf16.mxu0 0
    %2634 = vmatpush1.bf16.xpose.msra.mxu0 0
    %2635 = vmatprep.subr.bf16.mxu0 0
    %2636 = vmatpush1.bf16.xpose.msra.mxu0 0
    %2637 = vmatprep.subr.bf16.mxu0 0
    %2638 = vmatpush1.bf16.xpose.msra.mxu0 0
    %2639 = vmatprep.subr.bf16.mxu0 0
    %2640 = vmatpush1.bf16.xpose.msra.mxu0 %v2629
    %2641 = vmatprep.subr.bf16.mxu0 0
    %2642 = vmatpush1.bf16.xpose.msra.mxu0 %v2626
    %2643 = vmatprep.subr.bf16.mxu0 0
    %2644 = vmatpush1.bf16.xpose.msra.mxu0 %v2623
    %2645 = vmatprep.subr.bf16.mxu0 0
    %2646 = vmatpush1.bf16.xpose.msra.mxu0 %v2620
    %2647 = vmatprep.subr.bf16.mxu0 0
    %2648 = vmatpush2.bf16.xpose.msra.mxu0 0
    %2649 = vmatprep.subr.bf16.mxu0 0
    %2650 = vmatpush2.bf16.xpose.msra.mxu0 0
    %2651 = vmatprep.subr.bf16.mxu0 0
    %2652 = vmatpush2.bf16.xpose.msra.mxu0 0
    %2653 = vmatprep.subr.bf16.mxu0 0
    %2654 = vmatpush2.bf16.xpose.msra.mxu0 0
    %2655 = vmatprep.subr.bf16.mxu0 0
    %2656 = vmatpush2.bf16.xpose.msra.mxu0 0
    %2657 = vmatprep.subr.bf16.mxu0 0
    %2658 = vmatpush2.bf16.xpose.msra.mxu0 0
    %2659 = vmatprep.subr.bf16.mxu0 0
    %2660 = vmatpush2.bf16.xpose.msra.mxu0 0
    %2661 = vmatprep.subr.bf16.mxu0 0
    %2662 = vmatpush2.bf16.xpose.msra.mxu0 0
    %2663 = vmatprep.mubr.bf16.mxu0 0
    %2664 = vmatmul.mubr.bf16.gmra.mxu0 %v2608
    %v2665 = vpop.f32.mrf.mxu0
    %v2666 = vadd.f32 0.0, %v2665
    %v2667 = vpop.f32.mrf.mxu0
    %v2668 = vpop.f32.mrf.mxu0
    %v2669 = vadd.f32 0.0, %v2668
    %v2670 = vpop.f32.mrf.mxu0
    %2671 = vmatprep.mubr.bf16.mxu0 0
    %2672 = vmatmul.mubr.bf16.gmra.mxu0 %v2611
    %v2673 = vpop.f32.mrf.mxu0
    %v2674 = vadd.f32 0.0, %v2673
    %v2675 = vpop.f32.mrf.mxu0
    %v2676 = vpop.f32.mrf.mxu0
    %v2677 = vadd.f32 0.0, %v2676
    %v2678 = vpop.f32.mrf.mxu0
    %2679 = vmatprep.mubr.bf16.mxu0 0
    %2680 = vmatmul.mubr.bf16.gmra.mxu0 %v2614
    %v2681 = vpop.f32.mrf.mxu0
    %v2682 = vadd.f32 0.0, %v2681
    %v2683 = vpop.f32.mrf.mxu0
    %v2684 = vpop.f32.mrf.mxu0
    %v2685 = vadd.f32 0.0, %v2684
    %v2686 = vpop.f32.mrf.mxu0
    %2687 = vmatprep.mubr.bf16.mxu0 0
    %2688 = vmatmul.mubr.bf16.gmra.mxu0 %v2617
    %v2689 = vpop.f32.mrf.mxu0
    %v2690 = vadd.f32 0.0, %v2689
    %v2691 = vpop.f32.mrf.mxu0
    %v2692 = vpop.f32.mrf.mxu0
    %v2693 = vadd.f32 0.0, %v2692
    %v2694 = vpop.f32.mrf.mxu0
    %2695 = vdwg.mxu0
    %v2696 = vsel %vm2026, %v2666, -1e+30
    %v2697 = vsel %vm2027, %v2669, -1e+30
    %v2698 = vsel %vm2028, %v2674, -1e+30
    %v2699 = vsel %vm2029, %v2677, -1e+30
    %v2700 = vsel %vm2030, %v2682, -1e+30
    %v2701 = vsel %vm2031, %v2685, -1e+30
    %v2702 = vsel %vm2032, %v2690, -1e+30
    %v2703 = vsel %vm2033, %v2693, -1e+30
    %v2704 = vsel %vm2034, %v2696, -inf
    %2705 = vmax.xlane.f32.xlu0 %v2704
    %v2706 = vpop.xlane.xlu0 %2705
    %v2707 = vsel %vm2034, %v2697, -inf
    %2708 = vmax.xlane.f32.xlu0 %v2707
    %v2709 = vpop.xlane.xlu0 %2708
    %v2710 = vsel %vm2034, %v2698, -inf
    %2711 = vmax.xlane.f32.xlu0 %v2710
    %v2712 = vpop.xlane.xlu0 %2711
    %v2713 = vsel %vm2034, %v2699, -inf
    %2714 = vmax.xlane.f32.xlu0 %v2713
    %v2715 = vpop.xlane.xlu0 %2714
    %v2716 = vsel %vm2034, %v2700, -inf
    %2717 = vmax.xlane.f32.xlu0 %v2716
    %v2718 = vpop.xlane.xlu0 %2717
    %v2719 = vsel %vm2034, %v2701, -inf
    %2720 = vmax.xlane.f32.xlu0 %v2719
    %v2721 = vpop.xlane.xlu0 %2720
    %v2722 = vsel %vm2034, %v2702, -inf
    %2723 = vmax.xlane.f32.xlu0 %v2722
    %v2724 = vpop.xlane.xlu0 %2723
    %v2725 = vsel %vm2034, %v2703, -inf
    %2726 = vmax.xlane.f32.xlu0 %v2725
    %v2727 = vpop.xlane.xlu0 %2726
    %v2728 = vsub.f32 %v2696, %v2706
    %v2729 = vsub.f32 %v2697, %v2709
    %v2730 = vsub.f32 %v2698, %v2712
    %v2731 = vsub.f32 %v2699, %v2715
    %v2732 = vsub.f32 %v2700, %v2718
    %v2733 = vsub.f32 %v2701, %v2721
    %v2734 = vsub.f32 %v2702, %v2724
    %v2735 = vsub.f32 %v2703, %v2727
    %v2736 = vmul.f32 %v2728, 1.442695
    %v2737 = vpow.pop %v2736
    %v2738 = vmul.f32 %v2729, 1.442695
    %v2739 = vpow.pop %v2738
    %v2740 = vmul.f32 %v2730, 1.442695
    %v2741 = vpow.pop %v2740
    %v2742 = vmul.f32 %v2731, 1.442695
    %v2743 = vpow.pop %v2742
    %v2744 = vmul.f32 %v2732, 1.442695
    %v2745 = vpow.pop %v2744
    %v2746 = vmul.f32 %v2733, 1.442695
    %v2747 = vpow.pop %v2746
    %v2748 = vmul.f32 %v2734, 1.442695
    %v2749 = vpow.pop %v2748
    %v2750 = vmul.f32 %v2735, 1.442695
    %v2751 = vpow.pop %v2750
    %v2752 = vsel %vm2034, %v2737, 0.0
    %2753 = vadd.xlane.f32.xlu0 %v2752
    %v2754 = vpop.xlane.xlu0 %2753
    %v2755 = vsel %vm2034, %v2739, 0.0
    %2756 = vadd.xlane.f32.xlu0 %v2755
    %v2757 = vpop.xlane.xlu0 %2756
    %v2758 = vsel %vm2034, %v2741, 0.0
    %2759 = vadd.xlane.f32.xlu0 %v2758
    %v2760 = vpop.xlane.xlu0 %2759
    %v2761 = vsel %vm2034, %v2743, 0.0
    %2762 = vadd.xlane.f32.xlu0 %v2761
    %v2763 = vpop.xlane.xlu0 %2762
    %v2764 = vsel %vm2034, %v2745, 0.0
    %2765 = vadd.xlane.f32.xlu0 %v2764
    %v2766 = vpop.xlane.xlu0 %2765
    %v2767 = vsel %vm2034, %v2747, 0.0
    %2768 = vadd.xlane.f32.xlu0 %v2767
    %v2769 = vpop.xlane.xlu0 %2768
    %v2770 = vsel %vm2034, %v2749, 0.0
    %2771 = vadd.xlane.f32.xlu0 %v2770
    %v2772 = vpop.xlane.xlu0 %2771
    %v2773 = vsel %vm2034, %v2751, 0.0
    %2774 = vadd.xlane.f32.xlu0 %v2773
    %v2775 = vpop.xlane.xlu0 %2774
    %v2776 = vpack.c.bf16 %v2739, %v2737
    %v2777 = vpack.c.bf16 %v2743, %v2741
    %v2778 = vpack.c.bf16 %v2747, %v2745
    %v2779 = vpack.c.bf16 %v2751, %v2749
    %v2781 = vsel %vm2034, %v2776, 0
    %v2784 = vsel %vm2034, %v2777, 0
    %v2787 = vsel %vm2034, %v2778, 0
    %v2790 = vsel %vm2034, %v2779, 0
    %2792 = vmatprep.subr.bf16.mxu0 0
    %2793 = vmatpush1.bf16.msra.mxu0 0
    %2794 = vmatprep.subr.bf16.mxu0 0
    %2795 = vmatpush1.bf16.msra.mxu0 0
    %2796 = vmatprep.subr.bf16.mxu0 0
    %2797 = vmatpush1.bf16.msra.mxu0 0
    %2798 = vmatprep.subr.bf16.mxu0 0
    %2799 = vmatpush1.bf16.msra.mxu0 0
    %2800 = vmatprep.subr.bf16.mxu0 0
    %2801 = vmatpush1.bf16.msra.mxu0 %v2006
    %2802 = vmatprep.subr.bf16.mxu0 0
    %2803 = vmatpush1.bf16.msra.mxu0 %v2004
    %2804 = vmatprep.subr.bf16.mxu0 0
    %2805 = vmatpush1.bf16.msra.mxu0 %v2002
    %2806 = vmatprep.subr.bf16.mxu0 0
    %2807 = vmatpush1.bf16.msra.mxu0 %v2000
    %2808 = vmatprep.subr.bf16.mxu0 0
    %2809 = vmatpush2.bf16.msra.mxu0 0
    %2810 = vmatprep.subr.bf16.mxu0 0
    %2811 = vmatpush2.bf16.msra.mxu0 0
    %2812 = vmatprep.subr.bf16.mxu0 0
    %2813 = vmatpush2.bf16.msra.mxu0 0
    %2814 = vmatprep.subr.bf16.mxu0 0
    %2815 = vmatpush2.bf16.msra.mxu0 0
    %2816 = vmatprep.subr.bf16.mxu0 0
    %2817 = vmatpush2.bf16.msra.mxu0 0
    %2818 = vmatprep.subr.bf16.mxu0 0
    %2819 = vmatpush2.bf16.msra.mxu0 0
    %2820 = vmatprep.subr.bf16.mxu0 0
    %2821 = vmatpush2.bf16.msra.mxu0 0
    %2822 = vmatprep.subr.bf16.mxu0 0
    %2823 = vmatpush2.bf16.msra.mxu0 0
    %2824 = vmatprep.mubr.bf16.mxu0 0
    %2825 = vmatmul.mubr.bf16.gmra.mxu0 %v2781
    %v2826 = vpop.f32.mrf.mxu0
    %v2827 = vadd.f32 0.0, %v2826
    %v2828 = vpop.f32.mrf.mxu0
    %v2829 = vpop.f32.mrf.mxu0
    %v2830 = vadd.f32 0.0, %v2829
    %v2831 = vpop.f32.mrf.mxu0
    %2832 = vmatprep.mubr.bf16.mxu0 0
    %2833 = vmatmul.mubr.bf16.gmra.mxu0 %v2784
    %v2834 = vpop.f32.mrf.mxu0
    %v2835 = vadd.f32 0.0, %v2834
    %v2836 = vpop.f32.mrf.mxu0
    %v2837 = vpop.f32.mrf.mxu0
    %v2838 = vadd.f32 0.0, %v2837
    %v2839 = vpop.f32.mrf.mxu0
    %2840 = vmatprep.mubr.bf16.mxu0 0
    %2841 = vmatmul.mubr.bf16.gmra.mxu0 %v2787
    %v2842 = vpop.f32.mrf.mxu0
    %v2843 = vadd.f32 0.0, %v2842
    %v2844 = vpop.f32.mrf.mxu0
    %v2845 = vpop.f32.mrf.mxu0
    %v2846 = vadd.f32 0.0, %v2845
    %v2847 = vpop.f32.mrf.mxu0
    %2848 = vmatprep.mubr.bf16.mxu0 0
    %2849 = vmatmul.mubr.bf16.gmra.mxu0 %v2790
    %v2850 = vpop.f32.mrf.mxu0
    %v2851 = vadd.f32 0.0, %v2850
    %v2852 = vpop.f32.mrf.mxu0
    %v2853 = vpop.f32.mrf.mxu0
    %v2854 = vadd.f32 0.0, %v2853
    %v2855 = vpop.f32.mrf.mxu0
    %2856 = vdwg.mxu0
    %v2857 = vrcp.pop %v2754
    %v2858 = vrcp.pop %v2757
    %v2859 = vrcp.pop %v2760
    %v2860 = vrcp.pop %v2763
    %v2861 = vrcp.pop %v2766
    %v2862 = vrcp.pop %v2769
    %v2863 = vrcp.pop %v2772
    %v2864 = vrcp.pop %v2775
    %v2865 = vmul.f32 %v2827, %v2857
    %v2866 = vmul.f32 %v2830, %v2858
    %v2867 = vmul.f32 %v2835, %v2859
    %v2868 = vmul.f32 %v2838, %v2860
    %v2869 = vmul.f32 %v2843, %v2861
    %v2870 = vmul.f32 %v2846, %v2862
    %v2871 = vmul.f32 %v2851, %v2863
    %v2872 = vmul.f32 %v2854, %v2864
    %2877 = vrot.lane.b32.xlu0 %v1872, 64
    %v2878 = vpop.permute.xlu0 %2877
    %2879 = vrot.lane.b32.xlu0 %v1874, 64
    %v2880 = vpop.permute.xlu0 %2879
    %2881 = vrot.lane.b32.xlu0 %v1876, 64
    %v2882 = vpop.permute.xlu0 %2881
    %2883 = vrot.lane.b32.xlu0 %v1878, 64
    %v2884 = vpop.permute.xlu0 %2883
    %2889 = vrot.lane.b32.xlu0 %v1984, 64
    %v2890 = vpop.permute.xlu0 %2889
    %2891 = vrot.lane.b32.xlu0 %v1986, 64
    %v2892 = vpop.permute.xlu0 %2891
    %2893 = vrot.lane.b32.xlu0 %v1988, 64
    %v2894 = vpop.permute.xlu0 %2893
    %2895 = vrot.lane.b32.xlu0 %v1990, 64
    %v2896 = vpop.permute.xlu0 %2895
    %v2898 = vsel %vm2034, %v2878, 0
    %v2901 = vsel %vm2034, %v2880, 0
    %v2904 = vsel %vm2034, %v2882, 0
    %v2907 = vsel %vm2034, %v2884, 0
    %v2910 = vsel %vm2034, %v2890, 0
    %v2913 = vsel %vm2034, %v2892, 0
    %v2916 = vsel %vm2034, %v2894, 0
    %v2919 = vsel %vm2034, %v2896, 0
    %2921 = vmatprep.subr.bf16.mxu0 0
    %2922 = vmatpush1.bf16.xpose.msra.mxu0 0
    %2923 = vmatprep.subr.bf16.mxu0 0
    %2924 = vmatpush1.bf16.xpose.msra.mxu0 0
    %2925 = vmatprep.subr.bf16.mxu0 0
    %2926 = vmatpush1.bf16.xpose.msra.mxu0 0
    %2927 = vmatprep.subr.bf16.mxu0 0
    %2928 = vmatpush1.bf16.xpose.msra.mxu0 0
    %2929 = vmatprep.subr.bf16.mxu0 0
    %2930 = vmatpush1.bf16.xpose.msra.mxu0 %v2919
    %2931 = vmatprep.subr.bf16.mxu0 0
    %2932 = vmatpush1.bf16.xpose.msra.mxu0 %v2916
    %2933 = vmatprep.subr.bf16.mxu0 0
    %2934 = vmatpush1.bf16.xpose.msra.mxu0 %v2913
    %2935 = vmatprep.subr.bf16.mxu0 0
    %2936 = vmatpush1.bf16.xpose.msra.mxu0 %v2910
    %2937 = vmatprep.subr.bf16.mxu0 0
    %2938 = vmatpush2.bf16.xpose.msra.mxu0 0
    %2939 = vmatprep.subr.bf16.mxu0 0
    %2940 = vmatpush2.bf16.xpose.msra.mxu0 0
    %2941 = vmatprep.subr.bf16.mxu0 0
    %2942 = vmatpush2.bf16.xpose.msra.mxu0 0
    %2943 = vmatprep.subr.bf16.mxu0 0
    %2944 = vmatpush2.bf16.xpose.msra.mxu0 0
    %2945 = vmatprep.subr.bf16.mxu0 0
    %2946 = vmatpush2.bf16.xpose.msra.mxu0 0
    %2947 = vmatprep.subr.bf16.mxu0 0
    %2948 = vmatpush2.bf16.xpose.msra.mxu0 0
    %2949 = vmatprep.subr.bf16.mxu0 0
    %2950 = vmatpush2.bf16.xpose.msra.mxu0 0
    %2951 = vmatprep.subr.bf16.mxu0 0
    %2952 = vmatpush2.bf16.xpose.msra.mxu0 0
    %2953 = vmatprep.mubr.bf16.mxu0 0
    %2954 = vmatmul.mubr.bf16.gmra.mxu0 %v2898
    %v2955 = vpop.f32.mrf.mxu0
    %v2956 = vadd.f32 0.0, %v2955
    %v2957 = vpop.f32.mrf.mxu0
    %v2958 = vpop.f32.mrf.mxu0
    %v2959 = vadd.f32 0.0, %v2958
    %v2960 = vpop.f32.mrf.mxu0
    %2961 = vmatprep.mubr.bf16.mxu0 0
    %2962 = vmatmul.mubr.bf16.gmra.mxu0 %v2901
    %v2963 = vpop.f32.mrf.mxu0
    %v2964 = vadd.f32 0.0, %v2963
    %v2965 = vpop.f32.mrf.mxu0
    %v2966 = vpop.f32.mrf.mxu0
    %v2967 = vadd.f32 0.0, %v2966
    %v2968 = vpop.f32.mrf.mxu0
    %2969 = vmatprep.mubr.bf16.mxu0 0
    %2970 = vmatmul.mubr.bf16.gmra.mxu0 %v2904
    %v2971 = vpop.f32.mrf.mxu0
    %v2972 = vadd.f32 0.0, %v2971
    %v2973 = vpop.f32.mrf.mxu0
    %v2974 = vpop.f32.mrf.mxu0
    %v2975 = vadd.f32 0.0, %v2974
    %v2976 = vpop.f32.mrf.mxu0
    %2977 = vmatprep.mubr.bf16.mxu0 0
    %2978 = vmatmul.mubr.bf16.gmra.mxu0 %v2907
    %v2979 = vpop.f32.mrf.mxu0
    %v2980 = vadd.f32 0.0, %v2979
    %v2981 = vpop.f32.mrf.mxu0
    %v2982 = vpop.f32.mrf.mxu0
    %v2983 = vadd.f32 0.0, %v2982
    %v2984 = vpop.f32.mrf.mxu0
    %2985 = vdwg.mxu0
    %v2986 = vsel %vm2026, %v2956, -1e+30
    %v2987 = vsel %vm2027, %v2959, -1e+30
    %v2988 = vsel %vm2028, %v2964, -1e+30
    %v2989 = vsel %vm2029, %v2967, -1e+30
    %v2990 = vsel %vm2030, %v2972, -1e+30
    %v2991 = vsel %vm2031, %v2975, -1e+30
    %v2992 = vsel %vm2032, %v2980, -1e+30
    %v2993 = vsel %vm2033, %v2983, -1e+30
    %v2994 = vsel %vm2034, %v2986, -inf
    %2995 = vmax.xlane.f32.xlu0 %v2994
    %v2996 = vpop.xlane.xlu0 %2995
    %v2997 = vsel %vm2034, %v2987, -inf
    %2998 = vmax.xlane.f32.xlu0 %v2997
    %v2999 = vpop.xlane.xlu0 %2998
    %v3000 = vsel %vm2034, %v2988, -inf
    %3001 = vmax.xlane.f32.xlu0 %v3000
    %v3002 = vpop.xlane.xlu0 %3001
    %v3003 = vsel %vm2034, %v2989, -inf
    %3004 = vmax.xlane.f32.xlu0 %v3003
    %v3005 = vpop.xlane.xlu0 %3004
    %v3006 = vsel %vm2034, %v2990, -inf
    %3007 = vmax.xlane.f32.xlu0 %v3006
    %v3008 = vpop.xlane.xlu0 %3007
    %v3009 = vsel %vm2034, %v2991, -inf
    %3010 = vmax.xlane.f32.xlu0 %v3009
    %v3011 = vpop.xlane.xlu0 %3010
    %v3012 = vsel %vm2034, %v2992, -inf
    %3013 = vmax.xlane.f32.xlu0 %v3012
    %v3014 = vpop.xlane.xlu0 %3013
    %v3015 = vsel %vm2034, %v2993, -inf
    %3016 = vmax.xlane.f32.xlu0 %v3015
    %v3017 = vpop.xlane.xlu0 %3016
    %v3018 = vsub.f32 %v2986, %v2996
    %v3019 = vsub.f32 %v2987, %v2999
    %v3020 = vsub.f32 %v2988, %v3002
    %v3021 = vsub.f32 %v2989, %v3005
    %v3022 = vsub.f32 %v2990, %v3008
    %v3023 = vsub.f32 %v2991, %v3011
    %v3024 = vsub.f32 %v2992, %v3014
    %v3025 = vsub.f32 %v2993, %v3017
    %v3026 = vmul.f32 %v3018, 1.442695
    %v3027 = vpow.pop %v3026
    %v3028 = vmul.f32 %v3019, 1.442695
    %v3029 = vpow.pop %v3028
    %v3030 = vmul.f32 %v3020, 1.442695
    %v3031 = vpow.pop %v3030
    %v3032 = vmul.f32 %v3021, 1.442695
    %v3033 = vpow.pop %v3032
    %v3034 = vmul.f32 %v3022, 1.442695
    %v3035 = vpow.pop %v3034
    %v3036 = vmul.f32 %v3023, 1.442695
    %v3037 = vpow.pop %v3036
    %v3038 = vmul.f32 %v3024, 1.442695
    %v3039 = vpow.pop %v3038
    %v3040 = vmul.f32 %v3025, 1.442695
    %v3041 = vpow.pop %v3040
    %v3042 = vsel %vm2034, %v3027, 0.0
    %3043 = vadd.xlane.f32.xlu0 %v3042
    %v3044 = vpop.xlane.xlu0 %3043
    %v3045 = vsel %vm2034, %v3029, 0.0
    %3046 = vadd.xlane.f32.xlu0 %v3045
    %v3047 = vpop.xlane.xlu0 %3046
    %v3048 = vsel %vm2034, %v3031, 0.0
    %3049 = vadd.xlane.f32.xlu0 %v3048
    %v3050 = vpop.xlane.xlu0 %3049
    %v3051 = vsel %vm2034, %v3033, 0.0
    %3052 = vadd.xlane.f32.xlu0 %v3051
    %v3053 = vpop.xlane.xlu0 %3052
    %v3054 = vsel %vm2034, %v3035, 0.0
    %3055 = vadd.xlane.f32.xlu0 %v3054
    %v3056 = vpop.xlane.xlu0 %3055
    %v3057 = vsel %vm2034, %v3037, 0.0
    %3058 = vadd.xlane.f32.xlu0 %v3057
    %v3059 = vpop.xlane.xlu0 %3058
    %v3060 = vsel %vm2034, %v3039, 0.0
    %3061 = vadd.xlane.f32.xlu0 %v3060
    %v3062 = vpop.xlane.xlu0 %3061
    %v3063 = vsel %vm2034, %v3041, 0.0
    %3064 = vadd.xlane.f32.xlu0 %v3063
    %v3065 = vpop.xlane.xlu0 %3064
    %v3066 = vpack.c.bf16 %v3029, %v3027
    %v3067 = vpack.c.bf16 %v3033, %v3031
    %v3068 = vpack.c.bf16 %v3037, %v3035
    %v3069 = vpack.c.bf16 %v3041, %v3039
    %3074 = vrot.lane.b32.xlu0 %v2000, 64
    %v3075 = vpop.permute.xlu0 %3074
    %3076 = vrot.lane.b32.xlu0 %v2002, 64
    %v3077 = vpop.permute.xlu0 %3076
    %3078 = vrot.lane.b32.xlu0 %v2004, 64
    %v3079 = vpop.permute.xlu0 %3078
    %3080 = vrot.lane.b32.xlu0 %v2006, 64
    %v3081 = vpop.permute.xlu0 %3080
    %v3087 = vsel %vm2034, %v3066, 0
    %v3090 = vsel %vm2034, %v3067, 0
    %v3093 = vsel %vm2034, %v3068, 0
    %v3096 = vsel %vm2034, %v3069, 0
    %3098 = vmatprep.subr.bf16.mxu0 0
    %3099 = vmatpush1.bf16.msra.mxu0 0
    %3100 = vmatprep.subr.bf16.mxu0 0
    %3101 = vmatpush1.bf16.msra.mxu0 0
    %3102 = vmatprep.subr.bf16.mxu0 0
    %3103 = vmatpush1.bf16.msra.mxu0 0
    %3104 = vmatprep.subr.bf16.mxu0 0
    %3105 = vmatpush1.bf16.msra.mxu0 0
    %3106 = vmatprep.subr.bf16.mxu0 0
    %3107 = vmatpush1.bf16.msra.mxu0 %v3081
    %3108 = vmatprep.subr.bf16.mxu0 0
    %3109 = vmatpush1.bf16.msra.mxu0 %v3079
    %3110 = vmatprep.subr.bf16.mxu0 0
    %3111 = vmatpush1.bf16.msra.mxu0 %v3077
    %3112 = vmatprep.subr.bf16.mxu0 0
    %3113 = vmatpush1.bf16.msra.mxu0 %v3075
    %3114 = vmatprep.subr.bf16.mxu0 0
    %3115 = vmatpush2.bf16.msra.mxu0 0
    %3116 = vmatprep.subr.bf16.mxu0 0
    %3117 = vmatpush2.bf16.msra.mxu0 0
    %3118 = vmatprep.subr.bf16.mxu0 0
    %3119 = vmatpush2.bf16.msra.mxu0 0
    %3120 = vmatprep.subr.bf16.mxu0 0
    %3121 = vmatpush2.bf16.msra.mxu0 0
    %3122 = vmatprep.subr.bf16.mxu0 0
    %3123 = vmatpush2.bf16.msra.mxu0 0
    %3124 = vmatprep.subr.bf16.mxu0 0
    %3125 = vmatpush2.bf16.msra.mxu0 0
    %3126 = vmatprep.subr.bf16.mxu0 0
    %3127 = vmatpush2.bf16.msra.mxu0 0
    %3128 = vmatprep.subr.bf16.mxu0 0
    %3129 = vmatpush2.bf16.msra.mxu0 0
    %3130 = vmatprep.mubr.bf16.mxu0 0
    %3131 = vmatmul.mubr.bf16.gmra.mxu0 %v3087
    %v3132 = vpop.f32.mrf.mxu0
    %v3133 = vadd.f32 0.0, %v3132
    %v3134 = vpop.f32.mrf.mxu0
    %v3135 = vpop.f32.mrf.mxu0
    %v3136 = vadd.f32 0.0, %v3135
    %v3137 = vpop.f32.mrf.mxu0
    %3138 = vmatprep.mubr.bf16.mxu0 0
    %3139 = vmatmul.mubr.bf16.gmra.mxu0 %v3090
    %v3140 = vpop.f32.mrf.mxu0
    %v3141 = vadd.f32 0.0, %v3140
    %v3142 = vpop.f32.mrf.mxu0
    %v3143 = vpop.f32.mrf.mxu0
    %v3144 = vadd.f32 0.0, %v3143
    %v3145 = vpop.f32.mrf.mxu0
    %3146 = vmatprep.mubr.bf16.mxu0 0
    %3147 = vmatmul.mubr.bf16.gmra.mxu0 %v3093
    %v3148 = vpop.f32.mrf.mxu0
    %v3149 = vadd.f32 0.0, %v3148
    %v3150 = vpop.f32.mrf.mxu0
    %v3151 = vpop.f32.mrf.mxu0
    %v3152 = vadd.f32 0.0, %v3151
    %v3153 = vpop.f32.mrf.mxu0
    %3154 = vmatprep.mubr.bf16.mxu0 0
    %3155 = vmatmul.mubr.bf16.gmra.mxu0 %v3096
    %v3156 = vpop.f32.mrf.mxu0
    %v3157 = vadd.f32 0.0, %v3156
    %v3158 = vpop.f32.mrf.mxu0
    %v3159 = vpop.f32.mrf.mxu0
    %v3160 = vadd.f32 0.0, %v3159
    %v3161 = vpop.f32.mrf.mxu0
    %3162 = vdwg.mxu0
    %v3163 = vrcp.pop %v3044
    %v3164 = vrcp.pop %v3047
    %v3165 = vrcp.pop %v3050
    %v3166 = vrcp.pop %v3053
    %v3167 = vrcp.pop %v3056
    %v3168 = vrcp.pop %v3059
    %v3169 = vrcp.pop %v3062
    %v3170 = vrcp.pop %v3065
    %v3171 = vmul.f32 %v3133, %v3163
    %v3172 = vmul.f32 %v3136, %v3164
    %v3173 = vmul.f32 %v3141, %v3165
    %v3174 = vmul.f32 %v3144, %v3166
    %v3175 = vmul.f32 %v3149, %v3167
    %v3176 = vmul.f32 %v3152, %v3168
    %v3177 = vmul.f32 %v3157, %v3169
    %v3178 = vmul.f32 %v3160, %v3170
    %3187 = vrot.lane.b32.xlu0 %v2599, 64
    %v3188 = vpop.permute.xlu0 %3187
    %3189 = vrot.lane.b32.xlu0 %v2600, 64
    %v3190 = vpop.permute.xlu0 %3189
    %3191 = vrot.lane.b32.xlu0 %v2601, 64
    %v3192 = vpop.permute.xlu0 %3191
    %3193 = vrot.lane.b32.xlu0 %v2602, 64
    %v3194 = vpop.permute.xlu0 %3193
    %3195 = vrot.lane.b32.xlu0 %v2603, 64
    %v3196 = vpop.permute.xlu0 %3195
    %3197 = vrot.lane.b32.xlu0 %v2604, 64
    %v3198 = vpop.permute.xlu0 %3197
    %3199 = vrot.lane.b32.xlu0 %v2605, 64
    %v3200 = vpop.permute.xlu0 %3199
    %3201 = vrot.lane.b32.xlu0 %v2606, 64
    %v3202 = vpop.permute.xlu0 %3201
    %3219 = vrot.lane.b32.xlu0 %v3171, 64
    %v3220 = vpop.permute.xlu0 %3219
    %3221 = vrot.lane.b32.xlu0 %v3172, 64
    %v3222 = vpop.permute.xlu0 %3221
    %3223 = vrot.lane.b32.xlu0 %v3173, 64
    %v3224 = vpop.permute.xlu0 %3223
    %3225 = vrot.lane.b32.xlu0 %v3174, 64
    %v3226 = vpop.permute.xlu0 %3225
    %3227 = vrot.lane.b32.xlu0 %v3175, 64
    %v3228 = vpop.permute.xlu0 %3227
    %3229 = vrot.lane.b32.xlu0 %v3176, 64
    %v3230 = vpop.permute.xlu0 %3229
    %3231 = vrot.lane.b32.xlu0 %v3177, 64
    %v3232 = vpop.permute.xlu0 %3231
    %3233 = vrot.lane.b32.xlu0 %v3178, 64
    %v3234 = vpop.permute.xlu0 %3233
    %v3243 = vsel %vm2034, %v2293, %v3188
    %v3244 = vsel %vm2034, %v2294, %v3190
    %v3245 = vsel %vm2034, %v2295, %v3192
    %v3246 = vsel %vm2034, %v2296, %v3194
    %v3247 = vsel %vm2034, %v2297, %v3196
    %v3248 = vsel %vm2034, %v2298, %v3198
    %v3249 = vsel %vm2034, %v2299, %v3200
    %v3250 = vsel %vm2034, %v2300, %v3202
    %v3251 = vsel %vm2034, %v2865, %v3220
    %v3252 = vsel %vm2034, %v2866, %v3222
    %v3253 = vsel %vm2034, %v2867, %v3224
    %v3254 = vsel %vm2034, %v2868, %v3226
    %v3255 = vsel %vm2034, %v2869, %v3228
    %v3256 = vsel %vm2034, %v2870, %v3230
    %v3257 = vsel %vm2034, %v2871, %v3232
    %v3258 = vsel %vm2034, %v2872, %v3234
    %v3260 = vsel %vm2034, %v1879, 0
    %v3263 = vsel %vm2034, %v1881, 0
    %v3266 = vsel %vm2034, %v1883, 0
    %v3269 = vsel %vm2034, %v1885, 0
    %v3272 = vsel %vm2034, %v1991, 0
    %v3275 = vsel %vm2034, %v1993, 0
    %v3278 = vsel %vm2034, %v1995, 0
    %v3281 = vsel %vm2034, %v1997, 0
    %3283 = vmatprep.subr.bf16.mxu0 0
    %3284 = vmatpush1.bf16.xpose.msra.mxu0 0
    %3285 = vmatprep.subr.bf16.mxu0 0
    %3286 = vmatpush1.bf16.xpose.msra.mxu0 0
    %3287 = vmatprep.subr.bf16.mxu0 0
    %3288 = vmatpush1.bf16.xpose.msra.mxu0 0
    %3289 = vmatprep.subr.bf16.mxu0 0
    %3290 = vmatpush1.bf16.xpose.msra.mxu0 0
    %3291 = vmatprep.subr.bf16.mxu0 0
    %3292 = vmatpush1.bf16.xpose.msra.mxu0 %v3281
    %3293 = vmatprep.subr.bf16.mxu0 0
    %3294 = vmatpush1.bf16.xpose.msra.mxu0 %v3278
    %3295 = vmatprep.subr.bf16.mxu0 0
    %3296 = vmatpush1.bf16.xpose.msra.mxu0 %v3275
    %3297 = vmatprep.subr.bf16.mxu0 0
    %3298 = vmatpush1.bf16.xpose.msra.mxu0 %v3272
    %3299 = vmatprep.subr.bf16.mxu0 0
    %3300 = vmatpush2.bf16.xpose.msra.mxu0 0
    %3301 = vmatprep.subr.bf16.mxu0 0
    %3302 = vmatpush2.bf16.xpose.msra.mxu0 0
    %3303 = vmatprep.subr.bf16.mxu0 0
    %3304 = vmatpush2.bf16.xpose.msra.mxu0 0
    %3305 = vmatprep.subr.bf16.mxu0 0
    %3306 = vmatpush2.bf16.xpose.msra.mxu0 0
    %3307 = vmatprep.subr.bf16.mxu0 0
    %3308 = vmatpush2.bf16.xpose.msra.mxu0 0
    %3309 = vmatprep.subr.bf16.mxu0 0
    %3310 = vmatpush2.bf16.xpose.msra.mxu0 0
    %3311 = vmatprep.subr.bf16.mxu0 0
    %3312 = vmatpush2.bf16.xpose.msra.mxu0 0
    %3313 = vmatprep.subr.bf16.mxu0 0
    %3314 = vmatpush2.bf16.xpose.msra.mxu0 0
    %3315 = vmatprep.mubr.bf16.mxu0 0
    %3316 = vmatmul.mubr.bf16.gmra.mxu0 %v3260
    %v3317 = vpop.f32.mrf.mxu0
    %v3318 = vadd.f32 0.0, %v3317
    %v3319 = vpop.f32.mrf.mxu0
    %v3320 = vpop.f32.mrf.mxu0
    %v3321 = vadd.f32 0.0, %v3320
    %v3322 = vpop.f32.mrf.mxu0
    %3323 = vmatprep.mubr.bf16.mxu0 0
    %3324 = vmatmul.mubr.bf16.gmra.mxu0 %v3263
    %v3325 = vpop.f32.mrf.mxu0
    %v3326 = vadd.f32 0.0, %v3325
    %v3327 = vpop.f32.mrf.mxu0
    %v3328 = vpop.f32.mrf.mxu0
    %v3329 = vadd.f32 0.0, %v3328
    %v3330 = vpop.f32.mrf.mxu0
    %3331 = vmatprep.mubr.bf16.mxu0 0
    %3332 = vmatmul.mubr.bf16.gmra.mxu0 %v3266
    %v3333 = vpop.f32.mrf.mxu0
    %v3334 = vadd.f32 0.0, %v3333
    %v3335 = vpop.f32.mrf.mxu0
    %v3336 = vpop.f32.mrf.mxu0
    %v3337 = vadd.f32 0.0, %v3336
    %v3338 = vpop.f32.mrf.mxu0
    %3339 = vmatprep.mubr.bf16.mxu0 0
    %3340 = vmatmul.mubr.bf16.gmra.mxu0 %v3269
    %v3341 = vpop.f32.mrf.mxu0
    %v3342 = vadd.f32 0.0, %v3341
    %v3343 = vpop.f32.mrf.mxu0
    %v3344 = vpop.f32.mrf.mxu0
    %v3345 = vadd.f32 0.0, %v3344
    %v3346 = vpop.f32.mrf.mxu0
    %3347 = vdwg.mxu0
    %v3348 = vsel %vm2026, %v3318, -1e+30
    %v3349 = vsel %vm2027, %v3321, -1e+30
    %v3350 = vsel %vm2028, %v3326, -1e+30
    %v3351 = vsel %vm2029, %v3329, -1e+30
    %v3352 = vsel %vm2030, %v3334, -1e+30
    %v3353 = vsel %vm2031, %v3337, -1e+30
    %v3354 = vsel %vm2032, %v3342, -1e+30
    %v3355 = vsel %vm2033, %v3345, -1e+30
    %v3356 = vsel %vm2034, %v3348, -inf
    %3357 = vmax.xlane.f32.xlu0 %v3356
    %v3358 = vpop.xlane.xlu0 %3357
    %v3359 = vsel %vm2034, %v3349, -inf
    %3360 = vmax.xlane.f32.xlu0 %v3359
    %v3361 = vpop.xlane.xlu0 %3360
    %v3362 = vsel %vm2034, %v3350, -inf
    %3363 = vmax.xlane.f32.xlu0 %v3362
    %v3364 = vpop.xlane.xlu0 %3363
    %v3365 = vsel %vm2034, %v3351, -inf
    %3366 = vmax.xlane.f32.xlu0 %v3365
    %v3367 = vpop.xlane.xlu0 %3366
    %v3368 = vsel %vm2034, %v3352, -inf
    %3369 = vmax.xlane.f32.xlu0 %v3368
    %v3370 = vpop.xlane.xlu0 %3369
    %v3371 = vsel %vm2034, %v3353, -inf
    %3372 = vmax.xlane.f32.xlu0 %v3371
    %v3373 = vpop.xlane.xlu0 %3372
    %v3374 = vsel %vm2034, %v3354, -inf
    %3375 = vmax.xlane.f32.xlu0 %v3374
    %v3376 = vpop.xlane.xlu0 %3375
    %v3377 = vsel %vm2034, %v3355, -inf
    %3378 = vmax.xlane.f32.xlu0 %v3377
    %v3379 = vpop.xlane.xlu0 %3378
    %v3380 = vsub.f32 %v3348, %v3358
    %v3381 = vsub.f32 %v3349, %v3361
    %v3382 = vsub.f32 %v3350, %v3364
    %v3383 = vsub.f32 %v3351, %v3367
    %v3384 = vsub.f32 %v3352, %v3370
    %v3385 = vsub.f32 %v3353, %v3373
    %v3386 = vsub.f32 %v3354, %v3376
    %v3387 = vsub.f32 %v3355, %v3379
    %v3388 = vmul.f32 %v3380, 1.442695
    %v3389 = vpow.pop %v3388
    %v3390 = vmul.f32 %v3381, 1.442695
    %v3391 = vpow.pop %v3390
    %v3392 = vmul.f32 %v3382, 1.442695
    %v3393 = vpow.pop %v3392
    %v3394 = vmul.f32 %v3383, 1.442695
    %v3395 = vpow.pop %v3394
    %v3396 = vmul.f32 %v3384, 1.442695
    %v3397 = vpow.pop %v3396
    %v3398 = vmul.f32 %v3385, 1.442695
    %v3399 = vpow.pop %v3398
    %v3400 = vmul.f32 %v3386, 1.442695
    %v3401 = vpow.pop %v3400
    %v3402 = vmul.f32 %v3387, 1.442695
    %v3403 = vpow.pop %v3402
    %v3404 = vsel %vm2034, %v3389, 0.0
    %3405 = vadd.xlane.f32.xlu0 %v3404
    %v3406 = vpop.xlane.xlu0 %3405
    %v3407 = vsel %vm2034, %v3391, 0.0
    %3408 = vadd.xlane.f32.xlu0 %v3407
    %v3409 = vpop.xlane.xlu0 %3408
    %v3410 = vsel %vm2034, %v3393, 0.0
    %3411 = vadd.xlane.f32.xlu0 %v3410
    %v3412 = vpop.xlane.xlu0 %3411
    %v3413 = vsel %vm2034, %v3395, 0.0
    %3414 = vadd.xlane.f32.xlu0 %v3413
    %v3415 = vpop.xlane.xlu0 %3414
    %v3416 = vsel %vm2034, %v3397, 0.0
    %3417 = vadd.xlane.f32.xlu0 %v3416
    %v3418 = vpop.xlane.xlu0 %3417
    %v3419 = vsel %vm2034, %v3399, 0.0
    %3420 = vadd.xlane.f32.xlu0 %v3419
    %v3421 = vpop.xlane.xlu0 %3420
    %v3422 = vsel %vm2034, %v3401, 0.0
    %3423 = vadd.xlane.f32.xlu0 %v3422
    %v3424 = vpop.xlane.xlu0 %3423
    %v3425 = vsel %vm2034, %v3403, 0.0
    %3426 = vadd.xlane.f32.xlu0 %v3425
    %v3427 = vpop.xlane.xlu0 %3426
    %v3428 = vpack.c.bf16 %v3391, %v3389
    %v3429 = vpack.c.bf16 %v3395, %v3393
    %v3430 = vpack.c.bf16 %v3399, %v3397
    %v3431 = vpack.c.bf16 %v3403, %v3401
    %v3433 = vsel %vm2034, %v3428, 0
    %v3436 = vsel %vm2034, %v3429, 0
    %v3439 = vsel %vm2034, %v3430, 0
    %v3442 = vsel %vm2034, %v3431, 0
    %3444 = vmatprep.subr.bf16.mxu0 0
    %3445 = vmatpush1.bf16.msra.mxu0 0
    %3446 = vmatprep.subr.bf16.mxu0 0
    %3447 = vmatpush1.bf16.msra.mxu0 0
    %3448 = vmatprep.subr.bf16.mxu0 0
    %3449 = vmatpush1.bf16.msra.mxu0 0
    %3450 = vmatprep.subr.bf16.mxu0 0
    %3451 = vmatpush1.bf16.msra.mxu0 0
    %3452 = vmatprep.subr.bf16.mxu0 0
    %3453 = vmatpush1.bf16.msra.mxu0 %v2013
    %3454 = vmatprep.subr.bf16.mxu0 0
    %3455 = vmatpush1.bf16.msra.mxu0 %v2011
    %3456 = vmatprep.subr.bf16.mxu0 0
    %3457 = vmatpush1.bf16.msra.mxu0 %v2009
    %3458 = vmatprep.subr.bf16.mxu0 0
    %3459 = vmatpush1.bf16.msra.mxu0 %v2007
    %3460 = vmatprep.subr.bf16.mxu0 0
    %3461 = vmatpush2.bf16.msra.mxu0 0
    %3462 = vmatprep.subr.bf16.mxu0 0
    %3463 = vmatpush2.bf16.msra.mxu0 0
    %3464 = vmatprep.subr.bf16.mxu0 0
    %3465 = vmatpush2.bf16.msra.mxu0 0
    %3466 = vmatprep.subr.bf16.mxu0 0
    %3467 = vmatpush2.bf16.msra.mxu0 0
    %3468 = vmatprep.subr.bf16.mxu0 0
    %3469 = vmatpush2.bf16.msra.mxu0 0
    %3470 = vmatprep.subr.bf16.mxu0 0
    %3471 = vmatpush2.bf16.msra.mxu0 0
    %3472 = vmatprep.subr.bf16.mxu0 0
    %3473 = vmatpush2.bf16.msra.mxu0 0
    %3474 = vmatprep.subr.bf16.mxu0 0
    %3475 = vmatpush2.bf16.msra.mxu0 0
    %3476 = vmatprep.mubr.bf16.mxu0 0
    %3477 = vmatmul.mubr.bf16.gmra.mxu0 %v3433
    %v3478 = vpop.f32.mrf.mxu0
    %v3479 = vadd.f32 0.0, %v3478
    %v3480 = vpop.f32.mrf.mxu0
    %v3481 = vpop.f32.mrf.mxu0
    %v3482 = vadd.f32 0.0, %v3481
    %v3483 = vpop.f32.mrf.mxu0
    %3484 = vmatprep.mubr.bf16.mxu0 0
    %3485 = vmatmul.mubr.bf16.gmra.mxu0 %v3436
    %v3486 = vpop.f32.mrf.mxu0
    %v3487 = vadd.f32 0.0, %v3486
    %v3488 = vpop.f32.mrf.mxu0
    %v3489 = vpop.f32.mrf.mxu0
    %v3490 = vadd.f32 0.0, %v3489
    %v3491 = vpop.f32.mrf.mxu0
    %3492 = vmatprep.mubr.bf16.mxu0 0
    %3493 = vmatmul.mubr.bf16.gmra.mxu0 %v3439
    %v3494 = vpop.f32.mrf.mxu0
    %v3495 = vadd.f32 0.0, %v3494
    %v3496 = vpop.f32.mrf.mxu0
    %v3497 = vpop.f32.mrf.mxu0
    %v3498 = vadd.f32 0.0, %v3497
    %v3499 = vpop.f32.mrf.mxu0
    %3500 = vmatprep.mubr.bf16.mxu0 0
    %3501 = vmatmul.mubr.bf16.gmra.mxu0 %v3442
    %v3502 = vpop.f32.mrf.mxu0
    %v3503 = vadd.f32 0.0, %v3502
    %v3504 = vpop.f32.mrf.mxu0
    %v3505 = vpop.f32.mrf.mxu0
    %v3506 = vadd.f32 0.0, %v3505
    %v3507 = vpop.f32.mrf.mxu0
    %3508 = vdwg.mxu0
    %v3509 = vrcp.pop %v3406
    %v3510 = vrcp.pop %v3409
    %v3511 = vrcp.pop %v3412
    %v3512 = vrcp.pop %v3415
    %v3513 = vrcp.pop %v3418
    %v3514 = vrcp.pop %v3421
    %v3515 = vrcp.pop %v3424
    %v3516 = vrcp.pop %v3427
    %v3517 = vmul.f32 %v3479, %v3509
    %v3518 = vmul.f32 %v3482, %v3510
    %v3519 = vmul.f32 %v3487, %v3511
    %v3520 = vmul.f32 %v3490, %v3512
    %v3521 = vmul.f32 %v3495, %v3513
    %v3522 = vmul.f32 %v3498, %v3514
    %v3523 = vmul.f32 %v3503, %v3515
    %v3524 = vmul.f32 %v3506, %v3516
    %3529 = vrot.lane.b32.xlu0 %v1879, 64
    %v3530 = vpop.permute.xlu0 %3529
    %3531 = vrot.lane.b32.xlu0 %v1881, 64
    %v3532 = vpop.permute.xlu0 %3531
    %3533 = vrot.lane.b32.xlu0 %v1883, 64
    %v3534 = vpop.permute.xlu0 %3533
    %3535 = vrot.lane.b32.xlu0 %v1885, 64
    %v3536 = vpop.permute.xlu0 %3535
    %3541 = vrot.lane.b32.xlu0 %v1991, 64
    %v3542 = vpop.permute.xlu0 %3541
    %3543 = vrot.lane.b32.xlu0 %v1993, 64
    %v3544 = vpop.permute.xlu0 %3543
    %3545 = vrot.lane.b32.xlu0 %v1995, 64
    %v3546 = vpop.permute.xlu0 %3545
    %3547 = vrot.lane.b32.xlu0 %v1997, 64
    %v3548 = vpop.permute.xlu0 %3547
    %v3550 = vsel %vm2034, %v3530, 0
    %v3553 = vsel %vm2034, %v3532, 0
    %v3556 = vsel %vm2034, %v3534, 0
    %v3559 = vsel %vm2034, %v3536, 0
    %v3562 = vsel %vm2034, %v3542, 0
    %v3565 = vsel %vm2034, %v3544, 0
    %v3568 = vsel %vm2034, %v3546, 0
    %v3571 = vsel %vm2034, %v3548, 0
    %3573 = vmatprep.subr.bf16.mxu0 0
    %3574 = vmatpush1.bf16.xpose.msra.mxu0 0
    %3575 = vmatprep.subr.bf16.mxu0 0
    %3576 = vmatpush1.bf16.xpose.msra.mxu0 0
    %3577 = vmatprep.subr.bf16.mxu0 0
    %3578 = vmatpush1.bf16.xpose.msra.mxu0 0
    %3579 = vmatprep.subr.bf16.mxu0 0
    %3580 = vmatpush1.bf16.xpose.msra.mxu0 0
    %3581 = vmatprep.subr.bf16.mxu0 0
    %3582 = vmatpush1.bf16.xpose.msra.mxu0 %v3571
    %3583 = vmatprep.subr.bf16.mxu0 0
    %3584 = vmatpush1.bf16.xpose.msra.mxu0 %v3568
    %3585 = vmatprep.subr.bf16.mxu0 0
    %3586 = vmatpush1.bf16.xpose.msra.mxu0 %v3565
    %3587 = vmatprep.subr.bf16.mxu0 0
    %3588 = vmatpush1.bf16.xpose.msra.mxu0 %v3562
    %3589 = vmatprep.subr.bf16.mxu0 0
    %3590 = vmatpush2.bf16.xpose.msra.mxu0 0
    %3591 = vmatprep.subr.bf16.mxu0 0
    %3592 = vmatpush2.bf16.xpose.msra.mxu0 0
    %3593 = vmatprep.subr.bf16.mxu0 0
    %3594 = vmatpush2.bf16.xpose.msra.mxu0 0
    %3595 = vmatprep.subr.bf16.mxu0 0
    %3596 = vmatpush2.bf16.xpose.msra.mxu0 0
    %3597 = vmatprep.subr.bf16.mxu0 0
    %3598 = vmatpush2.bf16.xpose.msra.mxu0 0
    %3599 = vmatprep.subr.bf16.mxu0 0
    %3600 = vmatpush2.bf16.xpose.msra.mxu0 0
    %3601 = vmatprep.subr.bf16.mxu0 0
    %3602 = vmatpush2.bf16.xpose.msra.mxu0 0
    %3603 = vmatprep.subr.bf16.mxu0 0
    %3604 = vmatpush2.bf16.xpose.msra.mxu0 0
    %3605 = vmatprep.mubr.bf16.mxu0 0
    %3606 = vmatmul.mubr.bf16.gmra.mxu0 %v3550
    %v3607 = vpop.f32.mrf.mxu0
    %v3608 = vadd.f32 0.0, %v3607
    %v3609 = vpop.f32.mrf.mxu0
    %v3610 = vpop.f32.mrf.mxu0
    %v3611 = vadd.f32 0.0, %v3610
    %v3612 = vpop.f32.mrf.mxu0
    %3613 = vmatprep.mubr.bf16.mxu0 0
    %3614 = vmatmul.mubr.bf16.gmra.mxu0 %v3553
    %v3615 = vpop.f32.mrf.mxu0
    %v3616 = vadd.f32 0.0, %v3615
    %v3617 = vpop.f32.mrf.mxu0
    %v3618 = vpop.f32.mrf.mxu0
    %v3619 = vadd.f32 0.0, %v3618
    %v3620 = vpop.f32.mrf.mxu0
    %3621 = vmatprep.mubr.bf16.mxu0 0
    %3622 = vmatmul.mubr.bf16.gmra.mxu0 %v3556
    %v3623 = vpop.f32.mrf.mxu0
    %v3624 = vadd.f32 0.0, %v3623
    %v3625 = vpop.f32.mrf.mxu0
    %v3626 = vpop.f32.mrf.mxu0
    %v3627 = vadd.f32 0.0, %v3626
    %v3628 = vpop.f32.mrf.mxu0
    %3629 = vmatprep.mubr.bf16.mxu0 0
    %3630 = vmatmul.mubr.bf16.gmra.mxu0 %v3559
    %v3631 = vpop.f32.mrf.mxu0
    %v3632 = vadd.f32 0.0, %v3631
    %v3633 = vpop.f32.mrf.mxu0
    %v3634 = vpop.f32.mrf.mxu0
    %v3635 = vadd.f32 0.0, %v3634
    %v3636 = vpop.f32.mrf.mxu0
    %3637 = vdwg.mxu0
    %v3638 = vsel %vm2026, %v3608, -1e+30
    %v3639 = vsel %vm2027, %v3611, -1e+30
    %v3640 = vsel %vm2028, %v3616, -1e+30
    %v3641 = vsel %vm2029, %v3619, -1e+30
    %v3642 = vsel %vm2030, %v3624, -1e+30
    %v3643 = vsel %vm2031, %v3627, -1e+30
    %v3644 = vsel %vm2032, %v3632, -1e+30
    %v3645 = vsel %vm2033, %v3635, -1e+30
    %v3646 = vsel %vm2034, %v3638, -inf
    %3647 = vmax.xlane.f32.xlu0 %v3646
    %v3648 = vpop.xlane.xlu0 %3647
    %v3649 = vsel %vm2034, %v3639, -inf
    %3650 = vmax.xlane.f32.xlu0 %v3649
    %v3651 = vpop.xlane.xlu0 %3650
    %v3652 = vsel %vm2034, %v3640, -inf
    %3653 = vmax.xlane.f32.xlu0 %v3652
    %v3654 = vpop.xlane.xlu0 %3653
    %v3655 = vsel %vm2034, %v3641, -inf
    %3656 = vmax.xlane.f32.xlu0 %v3655
    %v3657 = vpop.xlane.xlu0 %3656
    %v3658 = vsel %vm2034, %v3642, -inf
    %3659 = vmax.xlane.f32.xlu0 %v3658
    %v3660 = vpop.xlane.xlu0 %3659
    %v3661 = vsel %vm2034, %v3643, -inf
    %3662 = vmax.xlane.f32.xlu0 %v3661
    %v3663 = vpop.xlane.xlu0 %3662
    %v3664 = vsel %vm2034, %v3644, -inf
    %3665 = vmax.xlane.f32.xlu0 %v3664
    %v3666 = vpop.xlane.xlu0 %3665
    %v3667 = vsel %vm2034, %v3645, -inf
    %3668 = vmax.xlane.f32.xlu0 %v3667
    %v3669 = vpop.xlane.xlu0 %3668
    %v3670 = vsub.f32 %v3638, %v3648
    %v3671 = vsub.f32 %v3639, %v3651
    %v3672 = vsub.f32 %v3640, %v3654
    %v3673 = vsub.f32 %v3641, %v3657
    %v3674 = vsub.f32 %v3642, %v3660
    %v3675 = vsub.f32 %v3643, %v3663
    %v3676 = vsub.f32 %v3644, %v3666
    %v3677 = vsub.f32 %v3645, %v3669
    %v3678 = vmul.f32 %v3670, 1.442695
    %v3679 = vpow.pop %v3678
    %v3680 = vmul.f32 %v3671, 1.442695
    %v3681 = vpow.pop %v3680
    %v3682 = vmul.f32 %v3672, 1.442695
    %v3683 = vpow.pop %v3682
    %v3684 = vmul.f32 %v3673, 1.442695
    %v3685 = vpow.pop %v3684
    %v3686 = vmul.f32 %v3674, 1.442695
    %v3687 = vpow.pop %v3686
    %v3688 = vmul.f32 %v3675, 1.442695
    %v3689 = vpow.pop %v3688
    %v3690 = vmul.f32 %v3676, 1.442695
    %v3691 = vpow.pop %v3690
    %v3692 = vmul.f32 %v3677, 1.442695
    %v3693 = vpow.pop %v3692
    %v3694 = vsel %vm2034, %v3679, 0.0
    %3695 = vadd.xlane.f32.xlu0 %v3694
    %v3696 = vpop.xlane.xlu0 %3695
    %v3697 = vsel %vm2034, %v3681, 0.0
    %3698 = vadd.xlane.f32.xlu0 %v3697
    %v3699 = vpop.xlane.xlu0 %3698
    %v3700 = vsel %vm2034, %v3683, 0.0
    %3701 = vadd.xlane.f32.xlu0 %v3700
    %v3702 = vpop.xlane.xlu0 %3701
    %v3703 = vsel %vm2034, %v3685, 0.0
    %3704 = vadd.xlane.f32.xlu0 %v3703
    %v3705 = vpop.xlane.xlu0 %3704
    %v3706 = vsel %vm2034, %v3687, 0.0
    %3707 = vadd.xlane.f32.xlu0 %v3706
    %v3708 = vpop.xlane.xlu0 %3707
    %v3709 = vsel %vm2034, %v3689, 0.0
    %3710 = vadd.xlane.f32.xlu0 %v3709
    %v3711 = vpop.xlane.xlu0 %3710
    %v3712 = vsel %vm2034, %v3691, 0.0
    %3713 = vadd.xlane.f32.xlu0 %v3712
    %v3714 = vpop.xlane.xlu0 %3713
    %v3715 = vsel %vm2034, %v3693, 0.0
    %3716 = vadd.xlane.f32.xlu0 %v3715
    %v3717 = vpop.xlane.xlu0 %3716
    %v3718 = vpack.c.bf16 %v3681, %v3679
    %v3719 = vpack.c.bf16 %v3685, %v3683
    %v3720 = vpack.c.bf16 %v3689, %v3687
    %v3721 = vpack.c.bf16 %v3693, %v3691
    %3726 = vrot.lane.b32.xlu0 %v2007, 64
    %v3727 = vpop.permute.xlu0 %3726
    %3728 = vrot.lane.b32.xlu0 %v2009, 64
    %v3729 = vpop.permute.xlu0 %3728
    %3730 = vrot.lane.b32.xlu0 %v2011, 64
    %v3731 = vpop.permute.xlu0 %3730
    %3732 = vrot.lane.b32.xlu0 %v2013, 64
    %v3733 = vpop.permute.xlu0 %3732
    %v3739 = vsel %vm2034, %v3718, 0
    %v3742 = vsel %vm2034, %v3719, 0
    %v3745 = vsel %vm2034, %v3720, 0
    %v3748 = vsel %vm2034, %v3721, 0
    %3750 = vmatprep.subr.bf16.mxu0 0
    %3751 = vmatpush1.bf16.msra.mxu0 0
    %3752 = vmatprep.subr.bf16.mxu0 0
    %3753 = vmatpush1.bf16.msra.mxu0 0
    %3754 = vmatprep.subr.bf16.mxu0 0
    %3755 = vmatpush1.bf16.msra.mxu0 0
    %3756 = vmatprep.subr.bf16.mxu0 0
    %3757 = vmatpush1.bf16.msra.mxu0 0
    %3758 = vmatprep.subr.bf16.mxu0 0
    %3759 = vmatpush1.bf16.msra.mxu0 %v3733
    %3760 = vmatprep.subr.bf16.mxu0 0
    %3761 = vmatpush1.bf16.msra.mxu0 %v3731
    %3762 = vmatprep.subr.bf16.mxu0 0
    %3763 = vmatpush1.bf16.msra.mxu0 %v3729
    %3764 = vmatprep.subr.bf16.mxu0 0
    %3765 = vmatpush1.bf16.msra.mxu0 %v3727
    %3766 = vmatprep.subr.bf16.mxu0 0
    %3767 = vmatpush2.bf16.msra.mxu0 0
    %3768 = vmatprep.subr.bf16.mxu0 0
    %3769 = vmatpush2.bf16.msra.mxu0 0
    %3770 = vmatprep.subr.bf16.mxu0 0
    %3771 = vmatpush2.bf16.msra.mxu0 0
    %3772 = vmatprep.subr.bf16.mxu0 0
    %3773 = vmatpush2.bf16.msra.mxu0 0
    %3774 = vmatprep.subr.bf16.mxu0 0
    %3775 = vmatpush2.bf16.msra.mxu0 0
    %3776 = vmatprep.subr.bf16.mxu0 0
    %3777 = vmatpush2.bf16.msra.mxu0 0
    %3778 = vmatprep.subr.bf16.mxu0 0
    %3779 = vmatpush2.bf16.msra.mxu0 0
    %3780 = vmatprep.subr.bf16.mxu0 0
    %3781 = vmatpush2.bf16.msra.mxu0 0
    %3782 = vmatprep.mubr.bf16.mxu0 0
    %3783 = vmatmul.mubr.bf16.gmra.mxu0 %v3739
    %v3784 = vpop.f32.mrf.mxu0
    %v3785 = vadd.f32 0.0, %v3784
    %v3786 = vpop.f32.mrf.mxu0
    %v3787 = vpop.f32.mrf.mxu0
    %v3788 = vadd.f32 0.0, %v3787
    %v3789 = vpop.f32.mrf.mxu0
    %3790 = vmatprep.mubr.bf16.mxu0 0
    %3791 = vmatmul.mubr.bf16.gmra.mxu0 %v3742
    %v3792 = vpop.f32.mrf.mxu0
    %v3793 = vadd.f32 0.0, %v3792
    %v3794 = vpop.f32.mrf.mxu0
    %v3795 = vpop.f32.mrf.mxu0
    %v3796 = vadd.f32 0.0, %v3795
    %v3797 = vpop.f32.mrf.mxu0
    %3798 = vmatprep.mubr.bf16.mxu0 0
    %3799 = vmatmul.mubr.bf16.gmra.mxu0 %v3745
    %v3800 = vpop.f32.mrf.mxu0
    %v3801 = vadd.f32 0.0, %v3800
    %v3802 = vpop.f32.mrf.mxu0
    %v3803 = vpop.f32.mrf.mxu0
    %v3804 = vadd.f32 0.0, %v3803
    %v3805 = vpop.f32.mrf.mxu0
    %3806 = vmatprep.mubr.bf16.mxu0 0
    %3807 = vmatmul.mubr.bf16.gmra.mxu0 %v3748
    %v3808 = vpop.f32.mrf.mxu0
    %v3809 = vadd.f32 0.0, %v3808
    %v3810 = vpop.f32.mrf.mxu0
    %v3811 = vpop.f32.mrf.mxu0
    %v3812 = vadd.f32 0.0, %v3811
    %v3813 = vpop.f32.mrf.mxu0
    %3814 = vdwg.mxu0
    %v3815 = vrcp.pop %v3696
    %v3816 = vrcp.pop %v3699
    %v3817 = vrcp.pop %v3702
    %v3818 = vrcp.pop %v3705
    %v3819 = vrcp.pop %v3708
    %v3820 = vrcp.pop %v3711
    %v3821 = vrcp.pop %v3714
    %v3822 = vrcp.pop %v3717
    %v3823 = vmul.f32 %v3785, %v3815
    %v3824 = vmul.f32 %v3788, %v3816
    %v3825 = vmul.f32 %v3793, %v3817
    %v3826 = vmul.f32 %v3796, %v3818
    %v3827 = vmul.f32 %v3801, %v3819
    %v3828 = vmul.f32 %v3804, %v3820
    %v3829 = vmul.f32 %v3809, %v3821
    %v3830 = vmul.f32 %v3812, %v3822
    %v3832 = vsel %vm2034, %v1880, 0
    %v3835 = vsel %vm2034, %v1882, 0
    %v3838 = vsel %vm2034, %v1884, 0
    %v3841 = vsel %vm2034, %v1886, 0
    %v3844 = vsel %vm2034, %v1992, 0
    %v3847 = vsel %vm2034, %v1994, 0
    %v3850 = vsel %vm2034, %v1996, 0
    %v3853 = vsel %vm2034, %v1998, 0
    %3855 = vmatprep.subr.bf16.mxu0 0
    %3856 = vmatpush1.bf16.xpose.msra.mxu0 0
    %3857 = vmatprep.subr.bf16.mxu0 0
    %3858 = vmatpush1.bf16.xpose.msra.mxu0 0
    %3859 = vmatprep.subr.bf16.mxu0 0
    %3860 = vmatpush1.bf16.xpose.msra.mxu0 0
    %3861 = vmatprep.subr.bf16.mxu0 0
    %3862 = vmatpush1.bf16.xpose.msra.mxu0 0
    %3863 = vmatprep.subr.bf16.mxu0 0
    %3864 = vmatpush1.bf16.xpose.msra.mxu0 %v3853
    %3865 = vmatprep.subr.bf16.mxu0 0
    %3866 = vmatpush1.bf16.xpose.msra.mxu0 %v3850
    %3867 = vmatprep.subr.bf16.mxu0 0
    %3868 = vmatpush1.bf16.xpose.msra.mxu0 %v3847
    %3869 = vmatprep.subr.bf16.mxu0 0
    %3870 = vmatpush1.bf16.xpose.msra.mxu0 %v3844
    %3871 = vmatprep.subr.bf16.mxu0 0
    %3872 = vmatpush2.bf16.xpose.msra.mxu0 0
    %3873 = vmatprep.subr.bf16.mxu0 0
    %3874 = vmatpush2.bf16.xpose.msra.mxu0 0
    %3875 = vmatprep.subr.bf16.mxu0 0
    %3876 = vmatpush2.bf16.xpose.msra.mxu0 0
    %3877 = vmatprep.subr.bf16.mxu0 0
    %3878 = vmatpush2.bf16.xpose.msra.mxu0 0
    %3879 = vmatprep.subr.bf16.mxu0 0
    %3880 = vmatpush2.bf16.xpose.msra.mxu0 0
    %3881 = vmatprep.subr.bf16.mxu0 0
    %3882 = vmatpush2.bf16.xpose.msra.mxu0 0
    %3883 = vmatprep.subr.bf16.mxu0 0
    %3884 = vmatpush2.bf16.xpose.msra.mxu0 0
    %3885 = vmatprep.subr.bf16.mxu0 0
    %3886 = vmatpush2.bf16.xpose.msra.mxu0 0
    %3887 = vmatprep.mubr.bf16.mxu0 0
    %3888 = vmatmul.mubr.bf16.gmra.mxu0 %v3832
    %v3889 = vpop.f32.mrf.mxu0
    %v3890 = vadd.f32 0.0, %v3889
    %v3891 = vpop.f32.mrf.mxu0
    %v3892 = vpop.f32.mrf.mxu0
    %v3893 = vadd.f32 0.0, %v3892
    %v3894 = vpop.f32.mrf.mxu0
    %3895 = vmatprep.mubr.bf16.mxu0 0
    %3896 = vmatmul.mubr.bf16.gmra.mxu0 %v3835
    %v3897 = vpop.f32.mrf.mxu0
    %v3898 = vadd.f32 0.0, %v3897
    %v3899 = vpop.f32.mrf.mxu0
    %v3900 = vpop.f32.mrf.mxu0
    %v3901 = vadd.f32 0.0, %v3900
    %v3902 = vpop.f32.mrf.mxu0
    %3903 = vmatprep.mubr.bf16.mxu0 0
    %3904 = vmatmul.mubr.bf16.gmra.mxu0 %v3838
    %v3905 = vpop.f32.mrf.mxu0
    %v3906 = vadd.f32 0.0, %v3905
    %v3907 = vpop.f32.mrf.mxu0
    %v3908 = vpop.f32.mrf.mxu0
    %v3909 = vadd.f32 0.0, %v3908
    %v3910 = vpop.f32.mrf.mxu0
    %3911 = vmatprep.mubr.bf16.mxu0 0
    %3912 = vmatmul.mubr.bf16.gmra.mxu0 %v3841
    %v3913 = vpop.f32.mrf.mxu0
    %v3914 = vadd.f32 0.0, %v3913
    %v3915 = vpop.f32.mrf.mxu0
    %v3916 = vpop.f32.mrf.mxu0
    %v3917 = vadd.f32 0.0, %v3916
    %v3918 = vpop.f32.mrf.mxu0
    %3919 = vdwg.mxu0
    %v3920 = vsel %vm2026, %v3890, -1e+30
    %v3921 = vsel %vm2027, %v3893, -1e+30
    %v3922 = vsel %vm2028, %v3898, -1e+30
    %v3923 = vsel %vm2029, %v3901, -1e+30
    %v3924 = vsel %vm2030, %v3906, -1e+30
    %v3925 = vsel %vm2031, %v3909, -1e+30
    %v3926 = vsel %vm2032, %v3914, -1e+30
    %v3927 = vsel %vm2033, %v3917, -1e+30
    %v3928 = vsel %vm2034, %v3920, -inf
    %3929 = vmax.xlane.f32.xlu0 %v3928
    %v3930 = vpop.xlane.xlu0 %3929
    %v3931 = vsel %vm2034, %v3921, -inf
    %3932 = vmax.xlane.f32.xlu0 %v3931
    %v3933 = vpop.xlane.xlu0 %3932
    %v3934 = vsel %vm2034, %v3922, -inf
    %3935 = vmax.xlane.f32.xlu0 %v3934
    %v3936 = vpop.xlane.xlu0 %3935
    %v3937 = vsel %vm2034, %v3923, -inf
    %3938 = vmax.xlane.f32.xlu0 %v3937
    %v3939 = vpop.xlane.xlu0 %3938
    %v3940 = vsel %vm2034, %v3924, -inf
    %3941 = vmax.xlane.f32.xlu0 %v3940
    %v3942 = vpop.xlane.xlu0 %3941
    %v3943 = vsel %vm2034, %v3925, -inf
    %3944 = vmax.xlane.f32.xlu0 %v3943
    %v3945 = vpop.xlane.xlu0 %3944
    %v3946 = vsel %vm2034, %v3926, -inf
    %3947 = vmax.xlane.f32.xlu0 %v3946
    %v3948 = vpop.xlane.xlu0 %3947
    %v3949 = vsel %vm2034, %v3927, -inf
    %3950 = vmax.xlane.f32.xlu0 %v3949
    %v3951 = vpop.xlane.xlu0 %3950
    %v3952 = vsub.f32 %v3920, %v3930
    %v3953 = vsub.f32 %v3921, %v3933
    %v3954 = vsub.f32 %v3922, %v3936
    %v3955 = vsub.f32 %v3923, %v3939
    %v3956 = vsub.f32 %v3924, %v3942
    %v3957 = vsub.f32 %v3925, %v3945
    %v3958 = vsub.f32 %v3926, %v3948
    %v3959 = vsub.f32 %v3927, %v3951
    %v3960 = vmul.f32 %v3952, 1.442695
    %v3961 = vpow.pop %v3960
    %v3962 = vmul.f32 %v3953, 1.442695
    %v3963 = vpow.pop %v3962
    %v3964 = vmul.f32 %v3954, 1.442695
    %v3965 = vpow.pop %v3964
    %v3966 = vmul.f32 %v3955, 1.442695
    %v3967 = vpow.pop %v3966
    %v3968 = vmul.f32 %v3956, 1.442695
    %v3969 = vpow.pop %v3968
    %v3970 = vmul.f32 %v3957, 1.442695
    %v3971 = vpow.pop %v3970
    %v3972 = vmul.f32 %v3958, 1.442695
    %v3973 = vpow.pop %v3972
    %v3974 = vmul.f32 %v3959, 1.442695
    %v3975 = vpow.pop %v3974
    %v3976 = vsel %vm2034, %v3961, 0.0
    %3977 = vadd.xlane.f32.xlu0 %v3976
    %v3978 = vpop.xlane.xlu0 %3977
    %v3979 = vsel %vm2034, %v3963, 0.0
    %3980 = vadd.xlane.f32.xlu0 %v3979
    %v3981 = vpop.xlane.xlu0 %3980
    %v3982 = vsel %vm2034, %v3965, 0.0
    %3983 = vadd.xlane.f32.xlu0 %v3982
    %v3984 = vpop.xlane.xlu0 %3983
    %v3985 = vsel %vm2034, %v3967, 0.0
    %3986 = vadd.xlane.f32.xlu0 %v3985
    %v3987 = vpop.xlane.xlu0 %3986
    %v3988 = vsel %vm2034, %v3969, 0.0
    %3989 = vadd.xlane.f32.xlu0 %v3988
    %v3990 = vpop.xlane.xlu0 %3989
    %v3991 = vsel %vm2034, %v3971, 0.0
    %3992 = vadd.xlane.f32.xlu0 %v3991
    %v3993 = vpop.xlane.xlu0 %3992
    %v3994 = vsel %vm2034, %v3973, 0.0
    %3995 = vadd.xlane.f32.xlu0 %v3994
    %v3996 = vpop.xlane.xlu0 %3995
    %v3997 = vsel %vm2034, %v3975, 0.0
    %3998 = vadd.xlane.f32.xlu0 %v3997
    %v3999 = vpop.xlane.xlu0 %3998
    %v4000 = vpack.c.bf16 %v3963, %v3961
    %v4001 = vpack.c.bf16 %v3967, %v3965
    %v4002 = vpack.c.bf16 %v3971, %v3969
    %v4003 = vpack.c.bf16 %v3975, %v3973
    %v4005 = vsel %vm2034, %v4000, 0
    %v4008 = vsel %vm2034, %v4001, 0
    %v4011 = vsel %vm2034, %v4002, 0
    %v4014 = vsel %vm2034, %v4003, 0
    %4016 = vmatprep.subr.bf16.mxu0 0
    %4017 = vmatpush1.bf16.msra.mxu0 0
    %4018 = vmatprep.subr.bf16.mxu0 0
    %4019 = vmatpush1.bf16.msra.mxu0 0
    %4020 = vmatprep.subr.bf16.mxu0 0
    %4021 = vmatpush1.bf16.msra.mxu0 0
    %4022 = vmatprep.subr.bf16.mxu0 0
    %4023 = vmatpush1.bf16.msra.mxu0 0
    %4024 = vmatprep.subr.bf16.mxu0 0
    %4025 = vmatpush1.bf16.msra.mxu0 %v2014
    %4026 = vmatprep.subr.bf16.mxu0 0
    %4027 = vmatpush1.bf16.msra.mxu0 %v2012
    %4028 = vmatprep.subr.bf16.mxu0 0
    %4029 = vmatpush1.bf16.msra.mxu0 %v2010
    %4030 = vmatprep.subr.bf16.mxu0 0
    %4031 = vmatpush1.bf16.msra.mxu0 %v2008
    %4032 = vmatprep.subr.bf16.mxu0 0
    %4033 = vmatpush2.bf16.msra.mxu0 0
    %4034 = vmatprep.subr.bf16.mxu0 0
    %4035 = vmatpush2.bf16.msra.mxu0 0
    %4036 = vmatprep.subr.bf16.mxu0 0
    %4037 = vmatpush2.bf16.msra.mxu0 0
    %4038 = vmatprep.subr.bf16.mxu0 0
    %4039 = vmatpush2.bf16.msra.mxu0 0
    %4040 = vmatprep.subr.bf16.mxu0 0
    %4041 = vmatpush2.bf16.msra.mxu0 0
    %4042 = vmatprep.subr.bf16.mxu0 0
    %4043 = vmatpush2.bf16.msra.mxu0 0
    %4044 = vmatprep.subr.bf16.mxu0 0
    %4045 = vmatpush2.bf16.msra.mxu0 0
    %4046 = vmatprep.subr.bf16.mxu0 0
    %4047 = vmatpush2.bf16.msra.mxu0 0
    %4048 = vmatprep.mubr.bf16.mxu0 0
    %4049 = vmatmul.mubr.bf16.gmra.mxu0 %v4005
    %v4050 = vpop.f32.mrf.mxu0
    %v4051 = vadd.f32 0.0, %v4050
    %v4052 = vpop.f32.mrf.mxu0
    %v4053 = vpop.f32.mrf.mxu0
    %v4054 = vadd.f32 0.0, %v4053
    %v4055 = vpop.f32.mrf.mxu0
    %4056 = vmatprep.mubr.bf16.mxu0 0
    %4057 = vmatmul.mubr.bf16.gmra.mxu0 %v4008
    %v4058 = vpop.f32.mrf.mxu0
    %v4059 = vadd.f32 0.0, %v4058
    %v4060 = vpop.f32.mrf.mxu0
    %v4061 = vpop.f32.mrf.mxu0
    %v4062 = vadd.f32 0.0, %v4061
    %v4063 = vpop.f32.mrf.mxu0
    %4064 = vmatprep.mubr.bf16.mxu0 0
    %4065 = vmatmul.mubr.bf16.gmra.mxu0 %v4011
    %v4066 = vpop.f32.mrf.mxu0
    %v4067 = vadd.f32 0.0, %v4066
    %v4068 = vpop.f32.mrf.mxu0
    %v4069 = vpop.f32.mrf.mxu0
    %v4070 = vadd.f32 0.0, %v4069
    %v4071 = vpop.f32.mrf.mxu0
    %4072 = vmatprep.mubr.bf16.mxu0 0
    %4073 = vmatmul.mubr.bf16.gmra.mxu0 %v4014
    %v4074 = vpop.f32.mrf.mxu0
    %v4075 = vadd.f32 0.0, %v4074
    %v4076 = vpop.f32.mrf.mxu0
    %v4077 = vpop.f32.mrf.mxu0
    %v4078 = vadd.f32 0.0, %v4077
    %v4079 = vpop.f32.mrf.mxu0
    %4080 = vdwg.mxu0
    %v4081 = vrcp.pop %v3978
    %v4082 = vrcp.pop %v3981
    %v4083 = vrcp.pop %v3984
    %v4084 = vrcp.pop %v3987
    %v4085 = vrcp.pop %v3990
    %v4086 = vrcp.pop %v3993
    %v4087 = vrcp.pop %v3996
    %v4088 = vrcp.pop %v3999
    %v4089 = vmul.f32 %v4051, %v4081
    %v4090 = vmul.f32 %v4054, %v4082
    %v4091 = vmul.f32 %v4059, %v4083
    %v4092 = vmul.f32 %v4062, %v4084
    %v4093 = vmul.f32 %v4067, %v4085
    %v4094 = vmul.f32 %v4070, %v4086
    %v4095 = vmul.f32 %v4075, %v4087
    %v4096 = vmul.f32 %v4078, %v4088
    %4101 = vrot.lane.b32.xlu0 %v1880, 64
    %v4102 = vpop.permute.xlu0 %4101
    %4103 = vrot.lane.b32.xlu0 %v1882, 64
    %v4104 = vpop.permute.xlu0 %4103
    %4105 = vrot.lane.b32.xlu0 %v1884, 64
    %v4106 = vpop.permute.xlu0 %4105
    %4107 = vrot.lane.b32.xlu0 %v1886, 64
    %v4108 = vpop.permute.xlu0 %4107
    %4113 = vrot.lane.b32.xlu0 %v1992, 64
    %v4114 = vpop.permute.xlu0 %4113
    %4115 = vrot.lane.b32.xlu0 %v1994, 64
    %v4116 = vpop.permute.xlu0 %4115
    %4117 = vrot.lane.b32.xlu0 %v1996, 64
    %v4118 = vpop.permute.xlu0 %4117
    %4119 = vrot.lane.b32.xlu0 %v1998, 64
    %v4120 = vpop.permute.xlu0 %4119
    %v4122 = vsel %vm2034, %v4102, 0
    %v4125 = vsel %vm2034, %v4104, 0
    %v4128 = vsel %vm2034, %v4106, 0
    %v4131 = vsel %vm2034, %v4108, 0
    %v4134 = vsel %vm2034, %v4114, 0
    %v4137 = vsel %vm2034, %v4116, 0
    %v4140 = vsel %vm2034, %v4118, 0
    %v4143 = vsel %vm2034, %v4120, 0
    %4145 = vmatprep.subr.bf16.mxu0 0
    %4146 = vmatpush1.bf16.xpose.msra.mxu0 0
    %4147 = vmatprep.subr.bf16.mxu0 0
    %4148 = vmatpush1.bf16.xpose.msra.mxu0 0
    %4149 = vmatprep.subr.bf16.mxu0 0
    %4150 = vmatpush1.bf16.xpose.msra.mxu0 0
    %4151 = vmatprep.subr.bf16.mxu0 0
    %4152 = vmatpush1.bf16.xpose.msra.mxu0 0
    %4153 = vmatprep.subr.bf16.mxu0 0
    %4154 = vmatpush1.bf16.xpose.msra.mxu0 %v4143
    %4155 = vmatprep.subr.bf16.mxu0 0
    %4156 = vmatpush1.bf16.xpose.msra.mxu0 %v4140
    %4157 = vmatprep.subr.bf16.mxu0 0
    %4158 = vmatpush1.bf16.xpose.msra.mxu0 %v4137
    %4159 = vmatprep.subr.bf16.mxu0 0
    %4160 = vmatpush1.bf16.xpose.msra.mxu0 %v4134
    %4161 = vmatprep.subr.bf16.mxu0 0
    %4162 = vmatpush2.bf16.xpose.msra.mxu0 0
    %4163 = vmatprep.subr.bf16.mxu0 0
    %4164 = vmatpush2.bf16.xpose.msra.mxu0 0
    %4165 = vmatprep.subr.bf16.mxu0 0
    %4166 = vmatpush2.bf16.xpose.msra.mxu0 0
    %4167 = vmatprep.subr.bf16.mxu0 0
    %4168 = vmatpush2.bf16.xpose.msra.mxu0 0
    %4169 = vmatprep.subr.bf16.mxu0 0
    %4170 = vmatpush2.bf16.xpose.msra.mxu0 0
    %4171 = vmatprep.subr.bf16.mxu0 0
    %4172 = vmatpush2.bf16.xpose.msra.mxu0 0
    %4173 = vmatprep.subr.bf16.mxu0 0
    %4174 = vmatpush2.bf16.xpose.msra.mxu0 0
    %4175 = vmatprep.subr.bf16.mxu0 0
    %4176 = vmatpush2.bf16.xpose.msra.mxu0 0
    %4177 = vmatprep.mubr.bf16.mxu0 0
    %4178 = vmatmul.mubr.bf16.gmra.mxu0 %v4122
    %v4179 = vpop.f32.mrf.mxu0
    %v4180 = vadd.f32 0.0, %v4179
    %v4181 = vpop.f32.mrf.mxu0
    %v4182 = vpop.f32.mrf.mxu0
    %v4183 = vadd.f32 0.0, %v4182
    %v4184 = vpop.f32.mrf.mxu0
    %4185 = vmatprep.mubr.bf16.mxu0 0
    %4186 = vmatmul.mubr.bf16.gmra.mxu0 %v4125
    %v4187 = vpop.f32.mrf.mxu0
    %v4188 = vadd.f32 0.0, %v4187
    %v4189 = vpop.f32.mrf.mxu0
    %v4190 = vpop.f32.mrf.mxu0
    %v4191 = vadd.f32 0.0, %v4190
    %v4192 = vpop.f32.mrf.mxu0
    %4193 = vmatprep.mubr.bf16.mxu0 0
    %4194 = vmatmul.mubr.bf16.gmra.mxu0 %v4128
    %v4195 = vpop.f32.mrf.mxu0
    %v4196 = vadd.f32 0.0, %v4195
    %v4197 = vpop.f32.mrf.mxu0
    %v4198 = vpop.f32.mrf.mxu0
    %v4199 = vadd.f32 0.0, %v4198
    %v4200 = vpop.f32.mrf.mxu0
    %4201 = vmatprep.mubr.bf16.mxu0 0
    %4202 = vmatmul.mubr.bf16.gmra.mxu0 %v4131
    %v4203 = vpop.f32.mrf.mxu0
    %v4204 = vadd.f32 0.0, %v4203
    %v4205 = vpop.f32.mrf.mxu0
    %v4206 = vpop.f32.mrf.mxu0
    %v4207 = vadd.f32 0.0, %v4206
    %v4208 = vpop.f32.mrf.mxu0
    %4209 = vdwg.mxu0
    %v4210 = vsel %vm2026, %v4180, -1e+30
    %v4211 = vsel %vm2027, %v4183, -1e+30
    %v4212 = vsel %vm2028, %v4188, -1e+30
    %v4213 = vsel %vm2029, %v4191, -1e+30
    %v4214 = vsel %vm2030, %v4196, -1e+30
    %v4215 = vsel %vm2031, %v4199, -1e+30
    %v4216 = vsel %vm2032, %v4204, -1e+30
    %v4217 = vsel %vm2033, %v4207, -1e+30
    %v4218 = vsel %vm2034, %v4210, -inf
    %4219 = vmax.xlane.f32.xlu0 %v4218
    %v4220 = vpop.xlane.xlu0 %4219
    %v4221 = vsel %vm2034, %v4211, -inf
    %4222 = vmax.xlane.f32.xlu0 %v4221
    %v4223 = vpop.xlane.xlu0 %4222
    %v4224 = vsel %vm2034, %v4212, -inf
    %4225 = vmax.xlane.f32.xlu0 %v4224
    %v4226 = vpop.xlane.xlu0 %4225
    %v4227 = vsel %vm2034, %v4213, -inf
    %4228 = vmax.xlane.f32.xlu0 %v4227
    %v4229 = vpop.xlane.xlu0 %4228
    %v4230 = vsel %vm2034, %v4214, -inf
    %4231 = vmax.xlane.f32.xlu0 %v4230
    %v4232 = vpop.xlane.xlu0 %4231
    %v4233 = vsel %vm2034, %v4215, -inf
    %4234 = vmax.xlane.f32.xlu0 %v4233
    %v4235 = vpop.xlane.xlu0 %4234
    %v4236 = vsel %vm2034, %v4216, -inf
    %4237 = vmax.xlane.f32.xlu0 %v4236
    %v4238 = vpop.xlane.xlu0 %4237
    %v4239 = vsel %vm2034, %v4217, -inf
    %4240 = vmax.xlane.f32.xlu0 %v4239
    %v4241 = vpop.xlane.xlu0 %4240
    %v4242 = vsub.f32 %v4210, %v4220
    %v4243 = vsub.f32 %v4211, %v4223
    %v4244 = vsub.f32 %v4212, %v4226
    %v4245 = vsub.f32 %v4213, %v4229
    %v4246 = vsub.f32 %v4214, %v4232
    %v4247 = vsub.f32 %v4215, %v4235
    %v4248 = vsub.f32 %v4216, %v4238
    %v4249 = vsub.f32 %v4217, %v4241
    %v4250 = vmul.f32 %v4242, 1.442695
    %v4251 = vpow.pop %v4250
    %v4252 = vmul.f32 %v4243, 1.442695
    %v4253 = vpow.pop %v4252
    %v4254 = vmul.f32 %v4244, 1.442695
    %v4255 = vpow.pop %v4254
    %v4256 = vmul.f32 %v4245, 1.442695
    %v4257 = vpow.pop %v4256
    %v4258 = vmul.f32 %v4246, 1.442695
    %v4259 = vpow.pop %v4258
    %v4260 = vmul.f32 %v4247, 1.442695
    %v4261 = vpow.pop %v4260
    %v4262 = vmul.f32 %v4248, 1.442695
    %v4263 = vpow.pop %v4262
    %v4264 = vmul.f32 %v4249, 1.442695
    %v4265 = vpow.pop %v4264
    %v4266 = vsel %vm2034, %v4251, 0.0
    %4267 = vadd.xlane.f32.xlu0 %v4266
    %v4268 = vpop.xlane.xlu0 %4267
    %v4269 = vsel %vm2034, %v4253, 0.0
    %4270 = vadd.xlane.f32.xlu0 %v4269
    %v4271 = vpop.xlane.xlu0 %4270
    %v4272 = vsel %vm2034, %v4255, 0.0
    %4273 = vadd.xlane.f32.xlu0 %v4272
    %v4274 = vpop.xlane.xlu0 %4273
    %v4275 = vsel %vm2034, %v4257, 0.0
    %4276 = vadd.xlane.f32.xlu0 %v4275
    %v4277 = vpop.xlane.xlu0 %4276
    %v4278 = vsel %vm2034, %v4259, 0.0
    %4279 = vadd.xlane.f32.xlu0 %v4278
    %v4280 = vpop.xlane.xlu0 %4279
    %v4281 = vsel %vm2034, %v4261, 0.0
    %4282 = vadd.xlane.f32.xlu0 %v4281
    %v4283 = vpop.xlane.xlu0 %4282
    %v4284 = vsel %vm2034, %v4263, 0.0
    %4285 = vadd.xlane.f32.xlu0 %v4284
    %v4286 = vpop.xlane.xlu0 %4285
    %v4287 = vsel %vm2034, %v4265, 0.0
    %4288 = vadd.xlane.f32.xlu0 %v4287
    %v4289 = vpop.xlane.xlu0 %4288
    %v4290 = vpack.c.bf16 %v4253, %v4251
    %v4291 = vpack.c.bf16 %v4257, %v4255
    %v4292 = vpack.c.bf16 %v4261, %v4259
    %v4293 = vpack.c.bf16 %v4265, %v4263
    %4298 = vrot.lane.b32.xlu0 %v2008, 64
    %v4299 = vpop.permute.xlu0 %4298
    %4300 = vrot.lane.b32.xlu0 %v2010, 64
    %v4301 = vpop.permute.xlu0 %4300
    %4302 = vrot.lane.b32.xlu0 %v2012, 64
    %v4303 = vpop.permute.xlu0 %4302
    %4304 = vrot.lane.b32.xlu0 %v2014, 64
    %v4305 = vpop.permute.xlu0 %4304
    %v4311 = vsel %vm2034, %v4290, 0
    %v4314 = vsel %vm2034, %v4291, 0
    %v4317 = vsel %vm2034, %v4292, 0
    %v4320 = vsel %vm2034, %v4293, 0
    %4322 = vmatprep.subr.bf16.mxu0 0
    %4323 = vmatpush1.bf16.msra.mxu0 0
    %4324 = vmatprep.subr.bf16.mxu0 0
    %4325 = vmatpush1.bf16.msra.mxu0 0
    %4326 = vmatprep.subr.bf16.mxu0 0
    %4327 = vmatpush1.bf16.msra.mxu0 0
    %4328 = vmatprep.subr.bf16.mxu0 0
    %4329 = vmatpush1.bf16.msra.mxu0 0
    %4330 = vmatprep.subr.bf16.mxu0 0
    %4331 = vmatpush1.bf16.msra.mxu0 %v4305
    %4332 = vmatprep.subr.bf16.mxu0 0
    %4333 = vmatpush1.bf16.msra.mxu0 %v4303
    %4334 = vmatprep.subr.bf16.mxu0 0
    %4335 = vmatpush1.bf16.msra.mxu0 %v4301
    %4336 = vmatprep.subr.bf16.mxu0 0
    %4337 = vmatpush1.bf16.msra.mxu0 %v4299
    %4338 = vmatprep.subr.bf16.mxu0 0
    %4339 = vmatpush2.bf16.msra.mxu0 0
    %4340 = vmatprep.subr.bf16.mxu0 0
    %4341 = vmatpush2.bf16.msra.mxu0 0
    %4342 = vmatprep.subr.bf16.mxu0 0
    %4343 = vmatpush2.bf16.msra.mxu0 0
    %4344 = vmatprep.subr.bf16.mxu0 0
    %4345 = vmatpush2.bf16.msra.mxu0 0
    %4346 = vmatprep.subr.bf16.mxu0 0
    %4347 = vmatpush2.bf16.msra.mxu0 0
    %4348 = vmatprep.subr.bf16.mxu0 0
    %4349 = vmatpush2.bf16.msra.mxu0 0
    %4350 = vmatprep.subr.bf16.mxu0 0
    %4351 = vmatpush2.bf16.msra.mxu0 0
    %4352 = vmatprep.subr.bf16.mxu0 0
    %4353 = vmatpush2.bf16.msra.mxu0 0
    %4354 = vmatprep.mubr.bf16.mxu0 0
    %4355 = vmatmul.mubr.bf16.gmra.mxu0 %v4311
    %v4356 = vpop.f32.mrf.mxu0
    %v4357 = vadd.f32 0.0, %v4356
    %v4358 = vpop.f32.mrf.mxu0
    %v4359 = vpop.f32.mrf.mxu0
    %v4360 = vadd.f32 0.0, %v4359
    %v4361 = vpop.f32.mrf.mxu0
    %4362 = vmatprep.mubr.bf16.mxu0 0
    %4363 = vmatmul.mubr.bf16.gmra.mxu0 %v4314
    %v4364 = vpop.f32.mrf.mxu0
    %v4365 = vadd.f32 0.0, %v4364
    %v4366 = vpop.f32.mrf.mxu0
    %v4367 = vpop.f32.mrf.mxu0
    %v4368 = vadd.f32 0.0, %v4367
    %v4369 = vpop.f32.mrf.mxu0
    %4370 = vmatprep.mubr.bf16.mxu0 0
    %4371 = vmatmul.mubr.bf16.gmra.mxu0 %v4317
    %v4372 = vpop.f32.mrf.mxu0
    %v4373 = vadd.f32 0.0, %v4372
    %v4374 = vpop.f32.mrf.mxu0
    %v4375 = vpop.f32.mrf.mxu0
    %v4376 = vadd.f32 0.0, %v4375
    %v4377 = vpop.f32.mrf.mxu0
    %4378 = vmatprep.mubr.bf16.mxu0 0
    %4379 = vmatmul.mubr.bf16.gmra.mxu0 %v4320
    %v4380 = vpop.f32.mrf.mxu0
    %v4381 = vadd.f32 0.0, %v4380
    %v4382 = vpop.f32.mrf.mxu0
    %v4383 = vpop.f32.mrf.mxu0
    %v4384 = vadd.f32 0.0, %v4383
    %v4385 = vpop.f32.mrf.mxu0
    %4386 = vdwg.mxu0
    %v4387 = vrcp.pop %v4268
    %v4388 = vrcp.pop %v4271
    %v4389 = vrcp.pop %v4274
    %v4390 = vrcp.pop %v4277
    %v4391 = vrcp.pop %v4280
    %v4392 = vrcp.pop %v4283
    %v4393 = vrcp.pop %v4286
    %v4394 = vrcp.pop %v4289
    %v4395 = vmul.f32 %v4357, %v4387
    %v4396 = vmul.f32 %v4360, %v4388
    %v4397 = vmul.f32 %v4365, %v4389
    %v4398 = vmul.f32 %v4368, %v4390
    %v4399 = vmul.f32 %v4373, %v4391
    %v4400 = vmul.f32 %v4376, %v4392
    %v4401 = vmul.f32 %v4381, %v4393
    %v4402 = vmul.f32 %v4384, %v4394
    %4411 = vrot.lane.b32.xlu0 %v3823, 64
    %v4412 = vpop.permute.xlu0 %4411
    %4413 = vrot.lane.b32.xlu0 %v3824, 64
    %v4414 = vpop.permute.xlu0 %4413
    %4415 = vrot.lane.b32.xlu0 %v3825, 64
    %v4416 = vpop.permute.xlu0 %4415
    %4417 = vrot.lane.b32.xlu0 %v3826, 64
    %v4418 = vpop.permute.xlu0 %4417
    %4419 = vrot.lane.b32.xlu0 %v3827, 64
    %v4420 = vpop.permute.xlu0 %4419
    %4421 = vrot.lane.b32.xlu0 %v3828, 64
    %v4422 = vpop.permute.xlu0 %4421
    %4423 = vrot.lane.b32.xlu0 %v3829, 64
    %v4424 = vpop.permute.xlu0 %4423
    %4425 = vrot.lane.b32.xlu0 %v3830, 64
    %v4426 = vpop.permute.xlu0 %4425
    %4443 = vrot.lane.b32.xlu0 %v4395, 64
    %v4444 = vpop.permute.xlu0 %4443
    %4445 = vrot.lane.b32.xlu0 %v4396, 64
    %v4446 = vpop.permute.xlu0 %4445
    %4447 = vrot.lane.b32.xlu0 %v4397, 64
    %v4448 = vpop.permute.xlu0 %4447
    %4449 = vrot.lane.b32.xlu0 %v4398, 64
    %v4450 = vpop.permute.xlu0 %4449
    %4451 = vrot.lane.b32.xlu0 %v4399, 64
    %v4452 = vpop.permute.xlu0 %4451
    %4453 = vrot.lane.b32.xlu0 %v4400, 64
    %v4454 = vpop.permute.xlu0 %4453
    %4455 = vrot.lane.b32.xlu0 %v4401, 64
    %v4456 = vpop.permute.xlu0 %4455
    %4457 = vrot.lane.b32.xlu0 %v4402, 64
    %v4458 = vpop.permute.xlu0 %4457
    %v4467 = vsel %vm2034, %v3517, %v4412
    %v4468 = vsel %vm2034, %v3518, %v4414
    %v4469 = vsel %vm2034, %v3519, %v4416
    %v4470 = vsel %vm2034, %v3520, %v4418
    %v4471 = vsel %vm2034, %v3521, %v4420
    %v4472 = vsel %vm2034, %v3522, %v4422
    %v4473 = vsel %vm2034, %v3523, %v4424
    %v4474 = vsel %vm2034, %v3524, %v4426
    %v4475 = vsel %vm2034, %v4089, %v4444
    %v4476 = vsel %vm2034, %v4090, %v4446
    %v4477 = vsel %vm2034, %v4091, %v4448
    %v4478 = vsel %vm2034, %v4092, %v4450
    %v4479 = vsel %vm2034, %v4093, %v4452
    %v4480 = vsel %vm2034, %v4094, %v4454
    %v4481 = vsel %vm2034, %v4095, %v4456
    %v4482 = vsel %vm2034, %v4096, %v4458
    %v4483 = vpack.c.bf16 %v3244, %v3243
    %v4484 = vpack.c.bf16 %v3252, %v3251
    %v4485 = vpack.c.bf16 %v3246, %v3245
    %v4486 = vpack.c.bf16 %v3254, %v3253
    %v4487 = vpack.c.bf16 %v3248, %v3247
    %v4488 = vpack.c.bf16 %v3256, %v3255
    %v4489 = vpack.c.bf16 %v3250, %v3249
    %v4490 = vpack.c.bf16 %v3258, %v3257
    %v4491 = vpack.c.bf16 %v4468, %v4467
    %v4492 = vpack.c.bf16 %v4476, %v4475
    %v4493 = vpack.c.bf16 %v4470, %v4469
    %v4494 = vpack.c.bf16 %v4478, %v4477
    %v4495 = vpack.c.bf16 %v4472, %v4471
    %v4496 = vpack.c.bf16 %v4480, %v4479
    %v4497 = vpack.c.bf16 %v4474, %v4473
    %v4498 = vpack.c.bf16 %v4482, %v4481
    %v4499 = vld [vmem:[#allocation7] sm:$0xff]
    %v4500 = vld [vmem:[#allocation7 + $0x8] sm:$0xff]
    %v4501 = vld [vmem:[#allocation7 + $0x10] sm:$0xff]
    %v4502 = vld [vmem:[#allocation7 + $0x18] sm:$0xff]
    %v4503 = vld [vmem:[#allocation7 + $0x20] sm:$0xff]
    %v4504 = vld [vmem:[#allocation7 + $0x28] sm:$0xff]
    %v4505 = vld [vmem:[#allocation7 + $0x30] sm:$0xff]
    %v4506 = vld [vmem:[#allocation7 + $0x38] sm:$0xff]
    %v4507 = vld [vmem:[#allocation7 + $0x40] sm:$0xff]
    %v4508 = vld [vmem:[#allocation7 + $0x48] sm:$0xff]
    %v4509 = vld [vmem:[#allocation7 + $0x50] sm:$0xff]
    %v4510 = vld [vmem:[#allocation7 + $0x58] sm:$0xff]
    %v4511 = vld [vmem:[#allocation7 + $0x60] sm:$0xff]
    %v4512 = vld [vmem:[#allocation7 + $0x68] sm:$0xff]
    %v4513 = vld [vmem:[#allocation7 + $0x70] sm:$0xff]
    %v4514 = vld [vmem:[#allocation7 + $0x78] sm:$0xff]
    %v4515 = vld [vmem:[#allocation7 + $0x80] sm:$0xff]
    %v4516 = vld [vmem:[#allocation7 + $0x88] sm:$0xff]
    %v4517 = vld [vmem:[#allocation7 + $0x90] sm:$0xff]
    %v4518 = vld [vmem:[#allocation7 + $0x98] sm:$0xff]
    %v4519 = vld [vmem:[#allocation7 + $0xa0] sm:$0xff]
    %v4520 = vld [vmem:[#allocation7 + $0xa8] sm:$0xff]
    %v4521 = vld [vmem:[#allocation7 + $0xb0] sm:$0xff]
    %v4522 = vld [vmem:[#allocation7 + $0xb8] sm:$0xff]
    %v4523 = vld [vmem:[#allocation7 + $0xc0] sm:$0xff]
    %v4524 = vld [vmem:[#allocation7 + $0xc8] sm:$0xff]
    %v4525 = vld [vmem:[#allocation7 + $0xd0] sm:$0xff]
    %v4526 = vld [vmem:[#allocation7 + $0xd8] sm:$0xff]
    %v4527 = vld [vmem:[#allocation7 + $0xe0] sm:$0xff]
    %v4528 = vld [vmem:[#allocation7 + $0xe8] sm:$0xff]
    %v4529 = vld [vmem:[#allocation7 + $0xf0] sm:$0xff]
    %v4530 = vld [vmem:[#allocation7 + $0xf8] sm:$0xff]
    %v4563 = vunpack.c.l.b16 %v4499
    %v4564 = vunpack.c.h.b16 %v4499
    %v4565 = vunpack.c.l.b16 %v4500
    %v4566 = vunpack.c.h.b16 %v4500
    %v4567 = vunpack.c.l.b16 %v4501
    %v4568 = vunpack.c.h.b16 %v4501
    %v4569 = vunpack.c.l.b16 %v4502
    %v4570 = vunpack.c.h.b16 %v4502
    %v4571 = vunpack.c.l.b16 %v4503
    %v4572 = vunpack.c.h.b16 %v4503
    %v4573 = vunpack.c.l.b16 %v4504
    %v4574 = vunpack.c.h.b16 %v4504
    %v4575 = vunpack.c.l.b16 %v4505
    %v4576 = vunpack.c.h.b16 %v4505
    %v4577 = vunpack.c.l.b16 %v4506
    %v4578 = vunpack.c.h.b16 %v4506
    %v4579 = vunpack.c.l.b16 %v4507
    %v4580 = vunpack.c.h.b16 %v4507
    %v4581 = vunpack.c.l.b16 %v4508
    %v4582 = vunpack.c.h.b16 %v4508
    %v4583 = vunpack.c.l.b16 %v4509
    %v4584 = vunpack.c.h.b16 %v4509
    %v4585 = vunpack.c.l.b16 %v4510
    %v4586 = vunpack.c.h.b16 %v4510
    %v4587 = vunpack.c.l.b16 %v4511
    %v4588 = vunpack.c.h.b16 %v4511
    %v4589 = vunpack.c.l.b16 %v4512
    %v4590 = vunpack.c.h.b16 %v4512
    %v4591 = vunpack.c.l.b16 %v4513
    %v4592 = vunpack.c.h.b16 %v4513
    %v4593 = vunpack.c.l.b16 %v4514
    %v4594 = vunpack.c.h.b16 %v4514
    %v4595 = vunpack.c.l.b16 %v4515
    %v4596 = vunpack.c.h.b16 %v4515
    %v4597 = vunpack.c.l.b16 %v4516
    %v4598 = vunpack.c.h.b16 %v4516
    %v4599 = vunpack.c.l.b16 %v4517
    %v4600 = vunpack.c.h.b16 %v4517
    %v4601 = vunpack.c.l.b16 %v4518
    %v4602 = vunpack.c.h.b16 %v4518
    %v4603 = vunpack.c.l.b16 %v4519
    %v4604 = vunpack.c.h.b16 %v4519
    %v4605 = vunpack.c.l.b16 %v4520
    %v4606 = vunpack.c.h.b16 %v4520
    %v4607 = vunpack.c.l.b16 %v4521
    %v4608 = vunpack.c.h.b16 %v4521
    %v4609 = vunpack.c.l.b16 %v4522
    %v4610 = vunpack.c.h.b16 %v4522
    %v4611 = vunpack.c.l.b16 %v4523
    %v4612 = vunpack.c.h.b16 %v4523
    %v4613 = vunpack.c.l.b16 %v4524
    %v4614 = vunpack.c.h.b16 %v4524
    %v4615 = vunpack.c.l.b16 %v4525
    %v4616 = vunpack.c.h.b16 %v4525
    %v4617 = vunpack.c.l.b16 %v4526
    %v4618 = vunpack.c.h.b16 %v4526
    %v4619 = vunpack.c.l.b16 %v4527
    %v4620 = vunpack.c.h.b16 %v4527
    %v4621 = vunpack.c.l.b16 %v4528
    %v4622 = vunpack.c.h.b16 %v4528
    %v4623 = vunpack.c.l.b16 %v4529
    %v4624 = vunpack.c.h.b16 %v4529
    %v4625 = vunpack.c.l.b16 %v4530
    %v4626 = vunpack.c.h.b16 %v4530
    %v4627 = vpack.c.b16 %v4565, %v4563
    %v4628 = vpack.c.b16 %v4566, %v4564
    %v4629 = vpack.c.b16 %v4569, %v4567
    %v4630 = vpack.c.b16 %v4570, %v4568
    %v4631 = vpack.c.b16 %v4573, %v4571
    %v4632 = vpack.c.b16 %v4574, %v4572
    %v4633 = vpack.c.b16 %v4577, %v4575
    %v4634 = vpack.c.b16 %v4578, %v4576
    %v4635 = vpack.c.b16 %v4581, %v4579
    %v4636 = vpack.c.b16 %v4582, %v4580
    %v4637 = vpack.c.b16 %v4585, %v4583
    %v4638 = vpack.c.b16 %v4586, %v4584
    %v4639 = vpack.c.b16 %v4589, %v4587
    %v4640 = vpack.c.b16 %v4590, %v4588
    %v4641 = vpack.c.b16 %v4593, %v4591
    %v4642 = vpack.c.b16 %v4594, %v4592
    %v4643 = vpack.c.b16 %v4597, %v4595
    %v4644 = vpack.c.b16 %v4598, %v4596
    %v4645 = vpack.c.b16 %v4601, %v4599
    %v4646 = vpack.c.b16 %v4602, %v4600
    %v4647 = vpack.c.b16 %v4605, %v4603
    %v4648 = vpack.c.b16 %v4606, %v4604
    %v4649 = vpack.c.b16 %v4609, %v4607
    %v4650 = vpack.c.b16 %v4610, %v4608
    %v4651 = vpack.c.b16 %v4613, %v4611
    %v4652 = vpack.c.b16 %v4614, %v4612
    %v4653 = vpack.c.b16 %v4617, %v4615
    %v4654 = vpack.c.b16 %v4618, %v4616
    %v4655 = vpack.c.b16 %v4621, %v4619
    %v4656 = vpack.c.b16 %v4622, %v4620
    %v4657 = vpack.c.b16 %v4625, %v4623
    %v4658 = vpack.c.b16 %v4626, %v4624
    %4691 = vmatprep.subr.bf16.mxu0 %v4642
    %4692 = vmatpush1.bf16.msra.mxu0 %v4641
    %4693 = vmatprep.subr.bf16.mxu0 %v4640
    %4694 = vmatpush1.bf16.msra.mxu0 %v4639
    %4695 = vmatprep.subr.bf16.mxu0 %v4638
    %4696 = vmatpush1.bf16.msra.mxu0 %v4637
    %4697 = vmatprep.subr.bf16.mxu0 %v4636
    %4698 = vmatpush1.bf16.msra.mxu0 %v4635
    %4699 = vmatprep.subr.bf16.mxu0 %v4634
    %4700 = vmatpush1.bf16.msra.mxu0 %v4633
    %4701 = vmatprep.subr.bf16.mxu0 %v4632
    %4702 = vmatpush1.bf16.msra.mxu0 %v4631
    %4703 = vmatprep.subr.bf16.mxu0 %v4630
    %4704 = vmatpush1.bf16.msra.mxu0 %v4629
    %4705 = vmatprep.subr.bf16.mxu0 %v4628
    %4706 = vmatpush1.bf16.msra.mxu0 %v4627
    %4707 = vmatprep.subr.bf16.mxu0 %v4658
    %4708 = vmatpush2.bf16.msra.mxu0 %v4657
    %4709 = vmatprep.subr.bf16.mxu0 %v4656
    %4710 = vmatpush2.bf16.msra.mxu0 %v4655
    %4711 = vmatprep.subr.bf16.mxu0 %v4654
    %4712 = vmatpush2.bf16.msra.mxu0 %v4653
    %4713 = vmatprep.subr.bf16.mxu0 %v4652
    %4714 = vmatpush2.bf16.msra.mxu0 %v4651
    %4715 = vmatprep.subr.bf16.mxu0 %v4650
    %4716 = vmatpush2.bf16.msra.mxu0 %v4649
    %4717 = vmatprep.subr.bf16.mxu0 %v4648
    %4718 = vmatpush2.bf16.msra.mxu0 %v4647
    %4719 = vmatprep.subr.bf16.mxu0 %v4646
    %4720 = vmatpush2.bf16.msra.mxu0 %v4645
    %4721 = vmatprep.subr.bf16.mxu0 %v4644
    %4722 = vmatpush2.bf16.msra.mxu0 %v4643
    %4723 = vmatprep.mubr.bf16.mxu0 %v4484
    %4724 = vmatmul.mubr.bf16.gmra.mxu0 %v4483
    %v4725 = vpop.f32.mrf.mxu0
    %v4726 = vadd.f32 0.0, %v4725
    %v4727 = vpop.f32.mrf.mxu0
    %v4728 = vadd.f32 0.0, %v4727
    %v4729 = vpop.f32.mrf.mxu0
    %v4730 = vadd.f32 0.0, %v4729
    %v4731 = vpop.f32.mrf.mxu0
    %v4732 = vadd.f32 0.0, %v4731
    %4733 = vmatprep.mubr.bf16.mxu0 %v4486
    %4734 = vmatmul.mubr.bf16.gmra.mxu0 %v4485
    %v4735 = vpop.f32.mrf.mxu0
    %v4736 = vadd.f32 0.0, %v4735
    %v4737 = vpop.f32.mrf.mxu0
    %v4738 = vadd.f32 0.0, %v4737
    %v4739 = vpop.f32.mrf.mxu0
    %v4740 = vadd.f32 0.0, %v4739
    %v4741 = vpop.f32.mrf.mxu0
    %v4742 = vadd.f32 0.0, %v4741
    %4743 = vmatprep.mubr.bf16.mxu0 %v4488
    %4744 = vmatmul.mubr.bf16.gmra.mxu0 %v4487
    %v4745 = vpop.f32.mrf.mxu0
    %v4746 = vadd.f32 0.0, %v4745
    %v4747 = vpop.f32.mrf.mxu0
    %v4748 = vadd.f32 0.0, %v4747
    %v4749 = vpop.f32.mrf.mxu0
    %v4750 = vadd.f32 0.0, %v4749
    %v4751 = vpop.f32.mrf.mxu0
    %v4752 = vadd.f32 0.0, %v4751
    %4753 = vmatprep.mubr.bf16.mxu0 %v4490
    %4754 = vmatmul.mubr.bf16.gmra.mxu0 %v4489
    %v4755 = vpop.f32.mrf.mxu0
    %v4756 = vadd.f32 0.0, %v4755
    %v4757 = vpop.f32.mrf.mxu0
    %v4758 = vadd.f32 0.0, %v4757
    %v4759 = vpop.f32.mrf.mxu0
    %v4760 = vadd.f32 0.0, %v4759
    %v4761 = vpop.f32.mrf.mxu0
    %v4762 = vadd.f32 0.0, %v4761
    %4763 = vmatprep.mubr.bf16.mxu0 %v4492
    %4764 = vmatmul.mubr.bf16.gmra.mxu0 %v4491
    %v4765 = vpop.f32.mrf.mxu0
    %v4766 = vadd.f32 0.0, %v4765
    %v4767 = vpop.f32.mrf.mxu0
    %v4768 = vadd.f32 0.0, %v4767
    %v4769 = vpop.f32.mrf.mxu0
    %v4770 = vadd.f32 0.0, %v4769
    %v4771 = vpop.f32.mrf.mxu0
    %v4772 = vadd.f32 0.0, %v4771
    %4773 = vmatprep.mubr.bf16.mxu0 %v4494
    %4774 = vmatmul.mubr.bf16.gmra.mxu0 %v4493
    %v4775 = vpop.f32.mrf.mxu0
    %v4776 = vadd.f32 0.0, %v4775
    %v4777 = vpop.f32.mrf.mxu0
    %v4778 = vadd.f32 0.0, %v4777
    %v4779 = vpop.f32.mrf.mxu0
    %v4780 = vadd.f32 0.0, %v4779
    %v4781 = vpop.f32.mrf.mxu0
    %v4782 = vadd.f32 0.0, %v4781
    %4783 = vmatprep.mubr.bf16.mxu0 %v4496
    %4784 = vmatmul.mubr.bf16.gmra.mxu0 %v4495
    %v4785 = vpop.f32.mrf.mxu0
    %v4786 = vadd.f32 0.0, %v4785
    %v4787 = vpop.f32.mrf.mxu0
    %v4788 = vadd.f32 0.0, %v4787
    %v4789 = vpop.f32.mrf.mxu0
    %v4790 = vadd.f32 0.0, %v4789
    %v4791 = vpop.f32.mrf.mxu0
    %v4792 = vadd.f32 0.0, %v4791
    %4793 = vmatprep.mubr.bf16.mxu0 %v4498
    %4794 = vmatmul.mubr.bf16.gmra.mxu0 %v4497
    %v4795 = vpop.f32.mrf.mxu0
    %v4796 = vadd.f32 0.0, %v4795
    %v4797 = vpop.f32.mrf.mxu0
    %v4798 = vadd.f32 0.0, %v4797
    %v4799 = vpop.f32.mrf.mxu0
    %v4800 = vadd.f32 0.0, %v4799
    %v4801 = vpop.f32.mrf.mxu0
    %v4802 = vadd.f32 0.0, %v4801
    %4803 = vdwg.mxu0
    %4804 = vst [vmem:[#allocation11] sm:$0xff] %v4726
    %4805 = vst [vmem:[#allocation11 + $0x8] sm:$0xff] %v4728
    %4806 = vst [vmem:[#allocation11 + $0x10] sm:$0xff] %v4730
    %4807 = vst [vmem:[#allocation11 + $0x18] sm:$0xff] %v4732
    %4808 = vst [vmem:[#allocation11 + $0x20] sm:$0xff] %v4736
    %4809 = vst [vmem:[#allocation11 + $0x28] sm:$0xff] %v4738
    %4810 = vst [vmem:[#allocation11 + $0x30] sm:$0xff] %v4740
    %4811 = vst [vmem:[#allocation11 + $0x38] sm:$0xff] %v4742
    %4812 = vst [vmem:[#allocation11 + $0x40] sm:$0xff] %v4746
    %4813 = vst [vmem:[#allocation11 + $0x48] sm:$0xff] %v4748
    %4814 = vst [vmem:[#allocation11 + $0x50] sm:$0xff] %v4750
    %4815 = vst [vmem:[#allocation11 + $0x58] sm:$0xff] %v4752
    %4816 = vst [vmem:[#allocation11 + $0x60] sm:$0xff] %v4756
    %4817 = vst [vmem:[#allocation11 + $0x68] sm:$0xff] %v4758
    %4818 = vst [vmem:[#allocation11 + $0x70] sm:$0xff] %v4760
    %4819 = vst [vmem:[#allocation11 + $0x78] sm:$0xff] %v4762
    %4820 = vst [vmem:[#allocation11 + $0x80] sm:$0xff] %v4766
    %4821 = vst [vmem:[#allocation11 + $0x88] sm:$0xff] %v4768
    %4822 = vst [vmem:[#allocation11 + $0x90] sm:$0xff] %v4770
    %4823 = vst [vmem:[#allocation11 + $0x98] sm:$0xff] %v4772
    %4824 = vst [vmem:[#allocation11 + $0xa0] sm:$0xff] %v4776
    %4825 = vst [vmem:[#allocation11 + $0xa8] sm:$0xff] %v4778
    %4826 = vst [vmem:[#allocation11 + $0xb0] sm:$0xff] %v4780
    %4827 = vst [vmem:[#allocation11 + $0xb8] sm:$0xff] %v4782
    %4828 = vst [vmem:[#allocation11 + $0xc0] sm:$0xff] %v4786
    %4829 = vst [vmem:[#allocation11 + $0xc8] sm:$0xff] %v4788
    %4830 = vst [vmem:[#allocation11 + $0xd0] sm:$0xff] %v4790
    %4831 = vst [vmem:[#allocation11 + $0xd8] sm:$0xff] %v4792
    %4832 = vst [vmem:[#allocation11 + $0xe0] sm:$0xff] %v4796
    %4833 = vst [vmem:[#allocation11 + $0xe8] sm:$0xff] %v4798
    %4834 = vst [vmem:[#allocation11 + $0xf0] sm:$0xff] %v4800
    %4835 = vst [vmem:[#allocation11 + $0xf8] sm:$0xff] %v4802
    // Predicated region
    $region42: #{tpu_custom_call.1} parent=1 // pred_check
      _
    $region43: #{tpu_custom_call.1} parent=1 // pred_check_branch
      %4837 = sbr.rel (0) target = $region45
    $region44: #{tpu_custom_call.1} parent=1 // pred_region
      %s4839 = ssub.s32 4096, 4096
      %4840 = vsyncadd [#allocation4], %s4839
      %s4841 = sshll.u32 [#allocation11], 4
      %s4842 = int_to_ptr.vmem [resolvable:$true] %s4841
      %4847 = dma.vmem_to_hbm [thread:$0]  %s4842, 4096, %s5, [#allocation4], 256, 256, 16
    $region45: #{tpu_custom_call.1} parent=1 // pred_fallthru
      _
    // Predicated region
    $region46: #{tpu_custom_call.1} parent=1 // pred_check
      _
    $region47: #{tpu_custom_call.1} parent=1 // pred_check_branch
      %4849 = sbr.rel (0) target = $region49
    $region48: #{tpu_custom_call.1} parent=1 // pred_region
      %4850 = dma.done [#allocation4], 4096
    $region49: #{tpu_custom_call.1} parent=1 // pred_fallthru
      _
    %4851 = vsyncpa [#allocation3], 1
    %4852 = vsyncpa [#allocation6], 1
    %4853 = vsyncpa [#allocation9], 1
    %4854 = vsyncpa [#allocation4], 1

</llo_original>
